<compile_context>
chip_gen: v7x
topology: tpu7x:2x2x1
jax: 0.10.0
libtpu: 0.0.40
codegen_flags: <defaults>
</compile_context>

<pallas_src>
import jax
import jax.numpy as jnp
from jax.experimental import pallas as pl
from jax.experimental.pallas import tpu as pltpu

DEGREE = 2
LANES = 128
CLAMP_MIN = -100000.0
CLAMP_MAX = 1000.0


def scaled_poly_kernel(coef_ref, x_ref, out_ref):
    # coef_ref: SMEM (4,) f32 = [mn, a, w0, w1]   with  xs = (x - mn) * a - 1e-5
    # x_ref:    VMEM (TILE_R, 128)  f32 tile of the (row-major) input
    # out_ref:  VMEM (TILE_R, 256)  f32 lane-interleaved [t1, t2] pairs
    mn = coef_ref[0]
    a = coef_ref[1]
    w0 = coef_ref[2]
    w1 = coef_ref[3]

    xs = (x_ref[...] - mn) * a - 1e-5                       # MinMax((-1,1)) * 1e-5
    t1 = jnp.clip(xs * w0, CLAMP_MIN, CLAMP_MAX)            # degree-1 term
    t2 = jnp.clip(xs * xs * w1, CLAMP_MIN, CLAMP_MAX)       # degree-2 term

    # Lane interleave: out[:, 2l] = t1[:, l], out[:, 2l+1] = t2[:, l].
    # Flattened row-major this is exactly the (N, 2) layout of the module.
    r = t1.shape[0]
    out_ref[...] = jnp.stack((t1, t2), axis=-1).reshape(r, 2 * LANES)


def _forward_jax(x, weights):
    """Pure-JAX forward mirroring the PyTorch/sklearn module (reference + fast path)."""
    x = x.astype(jnp.float32)
    mn = jnp.min(x, axis=0, keepdims=True)
    mx = jnp.max(x, axis=0, keepdims=True)
    rng = mx - mn
    # sklearn _handle_zeros_in_scale: near-zero range -> 1.0
    rng = jnp.where(rng < 10.0 * jnp.finfo(jnp.float32).eps, 1.0, rng)
    xs = (2.0 * (x - mn) / rng - 1.0) * 1e-5                # (N, 1)
    poly = jnp.concatenate([xs, xs * xs], axis=1)           # (N, 2)
    return jnp.clip(poly * weights.astype(jnp.float32), CLAMP_MIN, CLAMP_MAX)


def scaled_polynomial_layer(x, weights, *, tile_rows=4096, small_n_threshold=32768,
                            force_kernel=False):
    """x: (N, 1) float32, weights: (DEGREE,) float32 -> (N, DEGREE) float32."""
    n = x.shape[0]
    assert x.shape == (n, 1), "module only broadcasts correctly for a single input feature"
    assert weights.shape == (DEGREE,)
    x = x.astype(jnp.float32)
    w = weights.astype(jnp.float32)

    # Small-N fast path: a single tiny XLA fusion beats pallas dispatch overhead.
    # (Threshold raised per review; always taken when there is no full 128-lane row.)
    if (n < small_n_threshold and not force_kernel) or n < LANES:
        return _forward_jax(x, w)

    x_flat = x.reshape(n)                                   # metadata-only
    mn = jnp.min(x_flat)
    mx = jnp.max(x_flat)
    rng = mx - mn
    rng = jnp.where(rng < 10.0 * jnp.finfo(jnp.float32).eps, 1.0, rng)
    a = 2e-5 / rng                                          # xs = (x - mn) * a - 1e-5
    coef = jnp.stack([mn, a, w[0], w[1]]).astype(jnp.float32)   # (4,) -> SMEM

    # 128-aligned prefix handled by the kernel via a zero-copy reshape (for
    # n % 128 == 0 the slice is the identity and nothing is copied).
    n_main = (n // LANES) * LANES
    rows = n_main // LANES
    x_2d = x_flat[:n_main].reshape(rows, LANES)

    # Tile sizing: multiple of 8 sublanes; >= 2 grid steps whenever possible so
    # v7x megacore sharding kicks in; capped so double-buffered VMEM stays
    # ~12 MiB at the default tile_rows=4096.
    if rows <= 8:
        tile_r = rows                                       # single block == full extent
    else:
        tile_rows = max(8, (int(tile_rows) + 7) // 8 * 8)
        tile_r = min(tile_rows, (pl.cdiv(rows, 2) + 7) // 8 * 8)
    grid = (pl.cdiv(rows, tile_r),)                         # ragged last block is masked

    out_main = pl.pallas_call(
        scaled_poly_kernel,
        out_shape=jax.ShapeDtypeStruct((rows, 2 * LANES), jnp.float32),
        grid=grid,
        in_specs=[
            pl.BlockSpec(memory_space=pltpu.MemorySpace.SMEM),   # coefficients (4,)
            pl.BlockSpec((tile_r, LANES), lambda i: (i, 0)),     # x tiles, pipelined
        ],
        out_specs=pl.BlockSpec((tile_r, 2 * LANES), lambda i: (i, 0)),
        compiler_params=pltpu.CompilerParams(
            dimension_semantics=("parallel",),               # megacore-shardable
            vmem_limit_bytes=32 * 1024 * 1024,               # fits v5e/v6e/v7x
        ),
    )(coef, x_2d)

    # Lane-interleaved layout == flattened (N, 2) layout: reshape is free.
    out = out_main.reshape(n_main, DEGREE)

    n_tail = n - n_main
    if n_tail > 0:
        # TODO(synk): the <128-element ragged tail (n % 128) is computed in
        # plain XLA and concatenated; for multiple-of-128 batches this branch
        # is skipped and the whole path is copy-free.
        xs_t = (x_flat[n_main:] - mn) * a - 1e-5
        tail = jnp.clip(
            jnp.stack([xs_t * w[0], xs_t * xs_t * w[1]], axis=-1),
            CLAMP_MIN, CLAMP_MAX)
        out = jnp.concatenate([out, tail], axis=0)
    return out


if __name__ == "__main__":
    key = jax.random.PRNGKey(0)
    k1, k2, k3 = jax.random.split(key, 3)

    # Deterministic parameter init, identical to nn.Parameter(torch.ones(degree)).
    weights = jnp.ones((DEGREE,), dtype=jnp.float32)

    # 1) 128-aligned batch: fully copy-free Pallas path, 2 grid steps.
    n1 = 2048
    x1 = jax.random.normal(k1, (n1, 1), dtype=jnp.float32)
    o1 = scaled_polynomial_layer(x1, weights, force_kernel=True)
    jax.block_until_ready(o1)
    r1 = _forward_jax(x1, weights)
    assert o1.shape == (n1, DEGREE)
    assert jnp.allclose(o1, r1, rtol=1e-5, atol=1e-9)

    # 2) Ragged batch: 896-element prefix through the kernel, 104-element tail in XLA.
    n2 = 1000
    x2 = jax.random.normal(k2, (n2, 1), dtype=jnp.float32) * 3.0 + 5.0
    o2 = scaled_polynomial_layer(x2, weights, force_kernel=True)
    jax.block_until_ready(o2)
    r2 = _forward_jax(x2, weights)
    assert o2.shape == (n2, DEGREE)
    assert jnp.allclose(o2, r2, rtol=1e-5, atol=1e-9)

    # 3) Small-N fast path (pure XLA).
    n3 = 16
    x3 = jax.random.normal(k3, (n3, 1), dtype=jnp.float32)
    o3 = scaled_polynomial_layer(x3, weights)
    jax.block_until_ready(o3)
    assert o3.shape == (n3, DEGREE)
    assert jnp.allclose(o3, _forward_jax(x3, weights), rtol=1e-6, atol=1e-9)

    print("KERNEL_OK")
</pallas_src>

<mosaic_0001>
module attributes {stable_mosaic.version = 11 : i64} {
  func.func @scaled_poly_kernel(%arg0: i32, %arg1: memref<4xf32, #tpu.memory_space<smem>>, %arg2: memref<8x128xf32, #tpu.memory_space<vmem>>, %arg3: memref<8x256xf32, #tpu.memory_space<vmem>>) attributes {dimension_semantics = [#tpu.dimension_semantics<parallel>], iteration_bounds = array<i64: 2>, scalar_prefetch = 0 : i64, scratch_operands = 0 : i64, tpu.core_type = #tpu.core_type<tc>, window_params = [{transform_indices = @transform_0, window_bounds = array<i64: 4>}, {transform_indices = @transform_1, window_bounds = array<i64: 8, 128>}, {transform_indices = @transform_2, window_bounds = array<i64: 8, 256>}]} {
    %c0 = arith.constant 0 : index
    %0 = memref.load %arg1[%c0] : memref<4xf32, #tpu.memory_space<smem>>
    %c1 = arith.constant 1 : index
    %1 = memref.load %arg1[%c1] : memref<4xf32, #tpu.memory_space<smem>>
    %c2 = arith.constant 2 : index
    %2 = memref.load %arg1[%c2] : memref<4xf32, #tpu.memory_space<smem>>
    %c3 = arith.constant 3 : index
    %3 = memref.load %arg1[%c3] : memref<4xf32, #tpu.memory_space<smem>>
    %c0_0 = arith.constant 0 : index
    %c0_1 = arith.constant 0 : index
    %4 = vector.load %arg2[%c0_0, %c0_1] : memref<8x128xf32, #tpu.memory_space<vmem>>, vector<8x128xf32>
    %5 = vector.broadcast %0 : f32 to vector<8x128xf32>
    %6 = arith.subf %4, %5 : vector<8x128xf32>
    %7 = vector.broadcast %1 : f32 to vector<8x128xf32>
    %8 = arith.mulf %6, %7 : vector<8x128xf32>
    %cst = arith.constant 9.99999974E-6 : f32
    %9 = vector.broadcast %cst : f32 to vector<8x128xf32>
    %10 = arith.subf %8, %9 : vector<8x128xf32>
    %11 = vector.broadcast %2 : f32 to vector<8x128xf32>
    %12 = arith.mulf %10, %11 : vector<8x128xf32>
    %cst_2 = arith.constant -1.000000e+05 : f32
    %cst_3 = arith.constant 1.000000e+03 : f32
    %13 = vector.broadcast %cst_2 : f32 to vector<8x128xf32>
    %14 = arith.maximumf %13, %12 : vector<8x128xf32>
    %15 = vector.broadcast %cst_3 : f32 to vector<8x128xf32>
    %16 = arith.minimumf %15, %14 : vector<8x128xf32>
    %17 = arith.mulf %10, %10 : vector<8x128xf32>
    %18 = vector.broadcast %3 : f32 to vector<8x128xf32>
    %19 = arith.mulf %17, %18 : vector<8x128xf32>
    %cst_4 = arith.constant -1.000000e+05 : f32
    %cst_5 = arith.constant 1.000000e+03 : f32
    %20 = vector.broadcast %cst_4 : f32 to vector<8x128xf32>
    %21 = arith.maximumf %20, %19 : vector<8x128xf32>
    %22 = vector.broadcast %cst_5 : f32 to vector<8x128xf32>
    %23 = arith.minimumf %22, %21 : vector<8x128xf32>
    %24 = vector.shape_cast %16 : vector<8x128xf32> to vector<8x128x1xf32>
    %25 = vector.shape_cast %23 : vector<8x128xf32> to vector<8x128x1xf32>
    %26 = tpu.concatenate %24, %25 in 2 : vector<8x128x1xf32>, vector<8x128x1xf32> -> vector<8x128x2xf32>
    %27 = vector.shape_cast %26 : vector<8x128x2xf32> to vector<8x256xf32>
    %c0_6 = arith.constant 0 : index
    %c0_7 = arith.constant 0 : index
    %28 = vector.load %arg3[%c0_6, %c0_7] : memref<8x256xf32, #tpu.memory_space<vmem>>, vector<8x256xf32>
    tpu.vector_store %arg3[%c0_6, %c0_7], %27 {strides = array<i32>} : memref<8x256xf32, #tpu.memory_space<vmem>>, vector<8x256xf32>,
    return
  }
  func.func @transform_0(%arg0: i32) -> i32 {
    %c0_i32 = arith.constant 0 : i32
    %c0_i32_0 = arith.constant 0 : i32
    return %c0_i32 : i32
  }
  func.func @transform_1(%arg0: i32) -> (i32, i32) {
    %c0_i32 = arith.constant 0 : i32
    %c0_i32_0 = arith.constant 0 : i32
    return %arg0, %c0_i32 : i32, i32
  }
  func.func @transform_2(%arg0: i32) -> (i32, i32) {
    %c0_i32 = arith.constant 0 : i32
    %c0_i32_0 = arith.constant 0 : i32
    return %arg0, %c0_i32 : i32, i32
  }
}

</mosaic_0001>

<llo_original>
// kernel: tpu_custom_call.1
$region0: #{tpu_custom_call.1}
  #allocation0 [shape = 'u32[]', space=smem, size = 0x4, offset = 0x4, fixed_abs, tag = 'smem constant byte address 0x4 - core index']
  #allocation1 [shape = 'u32[144,128]{1,0:T(1,128)}', space=vmem, size = 0x12000, scoped, tag = 'internal scratch']
  %s0 = inlined_call_operand.hbm [shape: f32[4], index: 0, kind: input, shape index: {}]
  %s1 = inlined_call_operand.hbm [shape: f32[16,128], index: 1, kind: input, shape index: {}]
  %s2 = inlined_call_operand.hbm [shape: f32[16,256], index: 2, kind: output, shape index: {}]
  %s3 = sld [smem:[#allocation0]]
  $region49: #{tpu_custom_call.1} parent=0
    _
  %s5 = ssub.s32 1, %s3
  %s6 = scalar_select 0, %s5, %s3
  $region1: #{tpu_custom_call.1} parent=0
    #allocation2 [shape = 'u8[512]{0}', space=smem, size = 0x200, scoped, tag = 'input window, operand 0, single buffered']
    #allocation3 [shape = 's32[2]{0}', space=sflag, size = 0x8, scoped, tag = 'scoped memory for tpu_custom_call.1']
    #allocation4 [shape = 's32[2]{0}', space=sflag, size = 0x8, scoped, tag = 'scoped memory for tpu_custom_call.1']
    #allocation5 [shape = 's32[2]{0}', space=sflag, size = 0x8, scoped, tag = 'scoped memory for tpu_custom_call.1']
    #allocation6 [shape = 'u8[8192]{0}', space=vmem, size = 0x2000, scoped, tag = 'input window, operand 1']
    #allocation7 [shape = 'u8[16384]{0}', space=vmem, size = 0x4000, scoped, tag = 'output window, operand 0']
    %7 = vsyncpa [#allocation5], 0
    %8 = vsyncpa [#allocation3], 0
    %s9 = scalar_lea.sflag [#allocation3], 1
    %10 = vsyncpa %s9, 0
    %11 = vsyncpa [#allocation4], 0
    %s12 = scalar_lea.sflag [#allocation4], 1
    %13 = vsyncpa %s12, 0
    loop: start=0, step=1, limit=4
    $region2: #{tpu_custom_call.1} parent=1 // loop_pre_header
      _
    $region3: #{tpu_custom_call.1} parent=1 // loop_header
      %s15 = sphi 0, %s19
      %p16 = scmp.ge.s32.totalorder %s15, 4
      %s23 = sphi 0, %s23
      %s25 = sphi 0, %s23
      %s26 = sphi 0, %s25
      %s40 = sphi 0, %s26
      %s46 = sphi 0, %s48
      %s49 = sphi 0, %s46
      %s50 = sphi 0, %s49
      %s66 = sphi 0, %s50
      %s72 = sphi 0, %s74
      %s75 = sphi 0, %s72
      %s76 = sphi 0, %s75
      %s92 = sphi 0, %s76
    $region4: #{tpu_custom_call.1} parent=1 // loop_header_branch
      %18 = sbr.rel (%p16) target = $region8
    $region5: #{tpu_custom_call.1} parent=1 // loop_body
      %s20 = ssub.s32 %s15, 1
      %s21 = ssub.s32 %s15, 2
      %s22 = sadd.s32 %s15, 1
      %s24 = sadd.s32 %s23, 1
      %p27 = scmp.eq.s32.totalorder %s15, 1
      %p28 = scmp.ne.s32.totalorder %s23, %s25
      %p29 = scmp.eq.s32.totalorder %s15, 0
      %p30 = por %p28, %p29
      %p31 = scmp.ne.s32.totalorder %s23, %s25
      %p32 = scmp.eq.s32.totalorder %s20, 1
      %p33 = por %p31, %p32
      %p34 = scmp.ne.s32.totalorder %s25, %s26
      %p35 = scmp.eq.s32.totalorder %s20, 0
      %p36 = por %p34, %p35
      %p37 = scmp.ne.s32.totalorder %s25, %s26
      %p38 = scmp.eq.s32.totalorder %s21, 1
      %p39 = por %p37, %p38
      %p41 = scmp.ne.s32.totalorder %s26, %s40
      %p42 = scmp.eq.s32.totalorder %s21, 0
      %p43 = por %p41, %p42
      %s44 = ssub.s32 %s15, %s22
      %p45 = scmp.eq.s32.totalorder %s44, 0
      %s47 = sadd.s32 %s46, 1
      %s48 = scalar_select %p45, %s46, %s47
      %p51 = pneg %p45
      %p52 = scmp.eq.s32.totalorder %s15, 1
      %p53 = por %p51, %p52
      %p54 = scmp.ne.s32.totalorder %s46, %s49
      %p55 = scmp.eq.s32.totalorder %s15, 0
      %p56 = por %p54, %p55
      %p57 = scmp.ne.s32.totalorder %s46, %s49
      %p58 = scmp.eq.s32.totalorder %s20, 1
      %p59 = por %p57, %p58
      %p60 = scmp.ne.s32.totalorder %s49, %s50
      %p61 = scmp.eq.s32.totalorder %s20, 0
      %p62 = por %p60, %p61
      %p63 = scmp.ne.s32.totalorder %s49, %s50
      %p64 = scmp.eq.s32.totalorder %s21, 1
      %p65 = por %p63, %p64
      %p67 = scmp.ne.s32.totalorder %s50, %s66
      %p68 = scmp.eq.s32.totalorder %s21, 0
      %p69 = por %p67, %p68
      %s70 = ssub.s32 %s15, %s22
      %p71 = scmp.eq.s32.totalorder %s70, 0
      %s73 = sadd.s32 %s72, 1
      %s74 = scalar_select %p71, %s72, %s73
      %p77 = pneg %p71
      %p78 = scmp.eq.s32.totalorder %s15, 1
      %p79 = por %p77, %p78
      %p80 = scmp.ne.s32.totalorder %s72, %s75
      %p81 = scmp.eq.s32.totalorder %s15, 0
      %p82 = por %p80, %p81
      %p83 = scmp.ne.s32.totalorder %s72, %s75
      %p84 = scmp.eq.s32.totalorder %s20, 1
      %p85 = por %p83, %p84
      %p86 = scmp.ne.s32.totalorder %s75, %s76
      %p87 = scmp.eq.s32.totalorder %s20, 0
      %p88 = por %p86, %p87
      %p89 = scmp.ne.s32.totalorder %s75, %s76
      %p90 = scmp.eq.s32.totalorder %s21, 1
      %p91 = por %p89, %p90
      %p93 = scmp.ne.s32.totalorder %s76, %s92
      %p94 = scmp.eq.s32.totalorder %s21, 0
      %p95 = por %p93, %p94
      %p96 = scmp.le.s32.totalorder 1, %s15
      %p97 = scmp.lt.s32.totalorder %s15, 3
      %p98 = pnand %p96, %p97
      %p99 = pneg %p98
      // Predicated region
      $region9: #{tpu_custom_call.1} parent=5 // pred_check
        _
      $region10: #{tpu_custom_call.1} parent=5 // pred_check_branch
        %101 = sbr.rel (%p98) target = $region12
      $region11: #{tpu_custom_call.1} parent=5 // pred_region
        %s102 = ssub.s32 %s15, 1
        // Predicated region
        $region13: #{tpu_custom_call.1} parent=11 // pred_check
          %p103 = pneg %p36
        $region14: #{tpu_custom_call.1} parent=11 // pred_check_branch
          %105 = sbr.rel (%p103) target = $region16
        $region15: #{tpu_custom_call.1} parent=11 // pred_region
          %s107 = ssub.s32 16, 16
          %108 = vsyncadd [#allocation5], %s107
          %111 = dma.hbm_to_smem %s0, 16, [#allocation2], [#allocation5]
        $region16: #{tpu_custom_call.1} parent=11 // pred_fallthru
          _
      $region12: #{tpu_custom_call.1} parent=5 // pred_fallthru
        _
      %p112 = scmp.lt.s32.totalorder %s15, 2
      // Predicated region
      $region17: #{tpu_custom_call.1} parent=5 // pred_check
        %p113 = pneg %p112
      $region18: #{tpu_custom_call.1} parent=5 // pred_check_branch
        %115 = sbr.rel (%p113) target = $region20
      $region19: #{tpu_custom_call.1} parent=5 // pred_region
        // Predicated region
        $region21: #{tpu_custom_call.1} parent=19 // pred_check
          %p116 = pneg %p56
        $region22: #{tpu_custom_call.1} parent=19 // pred_check_branch
          %118 = sbr.rel (%p116) target = $region24
        $region23: #{tpu_custom_call.1} parent=19 // pred_region
          %s119 = sand.u32 %s46, 1
          %s120 = scalar_lea.sflag [#allocation3], %s119
          %s121 = sand.u32 %s46, 1
          %s122 = smul.addr %s121, 8
          %s123 = scalar_lea.vmem [#allocation6], %s122
          %s125 = ssub.s32 128, 128
          %126 = vsyncadd %s120, %s125
          %s127 = smul.addr %s15, 128
          %s128 = scalar_lea.hbm %s1, %s127
          %s130 = sshll.u32 %s123, 4
          %s131 = int_to_ptr.vmem [resolvable:$true] %s130
          %133 = dma.hbm_to_vmem [thread:$0]  %s128, 128, %s131, %s120
        $region24: #{tpu_custom_call.1} parent=19 // pred_fallthru
          _
      $region20: #{tpu_custom_call.1} parent=5 // pred_fallthru
        _
      %p134 = scmp.le.s32.totalorder 1, %s15
      %p135 = scmp.lt.s32.totalorder %s15, 3
      %p136 = pnand %p134, %p135
      %p137 = pneg %p136
      // Predicated region
      $region25: #{tpu_custom_call.1} parent=5 // pred_check
        _
      $region26: #{tpu_custom_call.1} parent=5 // pred_check_branch
        %139 = sbr.rel (%p136) target = $region28
      $region27: #{tpu_custom_call.1} parent=5 // pred_region
        %s140 = ssub.s32 %s15, 1
        // Predicated region
        $region29: #{tpu_custom_call.1} parent=27 // pred_check
          %p141 = pneg %p36
        $region30: #{tpu_custom_call.1} parent=27 // pred_check_branch
          %143 = sbr.rel (%p141) target = $region32
        $region31: #{tpu_custom_call.1} parent=27 // pred_region
          %144 = dma.done [#allocation5], 16
        $region32: #{tpu_custom_call.1} parent=27 // pred_fallthru
          _
        %s145 = sand.u32 %s49, 1
        %s146 = scalar_lea.sflag [#allocation3], %s145
        %s147 = sand.u32 %s49, 1
        %s148 = smul.addr %s147, 8
        %s149 = scalar_lea.vmem [#allocation6], %s148
        // Predicated region
        $region33: #{tpu_custom_call.1} parent=27 // pred_check
          %p150 = pneg %p62
        $region34: #{tpu_custom_call.1} parent=27 // pred_check_branch
          %152 = sbr.rel (%p150) target = $region36
        $region35: #{tpu_custom_call.1} parent=27 // pred_region
          %153 = dma.done %s146, 128
        $region36: #{tpu_custom_call.1} parent=27 // pred_fallthru
          _
        %154 = sfence
        %p155 = pneg %p36
        %p156 = pneg %p33
        %s157 = sand.u32 %s49, 1
        %s158 = scalar_lea.sflag [#allocation3], %s157
        %s159 = sand.u32 %s49, 1
        %s160 = smul.addr %s159, 8
        %s161 = scalar_lea.vmem [#allocation6], %s160
        %p162 = pneg %p62
        %p163 = pneg %p59
        %p164 = pneg %p88
        %p165 = pneg %p85
        %s166 = sand.u32 %s75, 1
        %s167 = scalar_lea.sflag [#allocation4], %s166
        %s168 = sand.u32 %s75, 1
        %s169 = smul.addr %s168, 16
        %s170 = scalar_lea.vmem [#allocation7], %s169
        %s171 = sld [smem:[#allocation2]]
        %s172 = sld [smem:[#allocation2 + $0x1]]
        %s173 = sld [smem:[#allocation2 + $0x2]]
        %s174 = sld [smem:[#allocation2 + $0x3]]
        %v175 = vld [vmem:[%s149] sm:$0xff]
        %v176 = vstv %s171
        %v177 = vsub.f32 %v175, %v176
        %v178 = vstv %s172
        %v179 = vmul.f32 %v177, %v178
        %v180 = vsub.f32 %v179, 1e-05
        %v181 = vstv %s173
        %v182 = vmul.f32 %v180, %v181
        %v183 = vmax.f32 %v182, -100000.0
        %v184 = vmin.f32 %v183, 1000.0
        %v185 = vmul.f32 %v180, %v180
        %v186 = vstv %s174
        %v187 = vmul.f32 %v185, %v186
        %v188 = vmax.f32 %v187, -100000.0
        %v189 = vmin.f32 %v188, 1000.0
        %v190 = vlaneseq
        %v191 = vshrl.u32 %v190, 7
        %v192 = vsub.s32 0, %v191
        %v193 = vrot.slane %v184, %v192
        %195 = vbcast.lane.b32.xlu0 %v193, 256
        %v196 = vpop.permute.xlu0 %195
        %s198 = sor.u32 256, 8
        %199 = vbcast.lane.b32.xlu0 %v193, %s198
        %v200 = vpop.permute.xlu0 %199
        %s202 = sor.u32 256, 16
        %203 = vbcast.lane.b32.xlu0 %v193, %s202
        %v204 = vpop.permute.xlu0 %203
        %s206 = sor.u32 256, 24
        %207 = vbcast.lane.b32.xlu0 %v193, %s206
        %v208 = vpop.permute.xlu0 %207
        %s210 = sor.u32 256, 32
        %211 = vbcast.lane.b32.xlu0 %v193, %s210
        %v212 = vpop.permute.xlu0 %211
        %s214 = sor.u32 256, 40
        %215 = vbcast.lane.b32.xlu0 %v193, %s214
        %v216 = vpop.permute.xlu0 %215
        %s218 = sor.u32 256, 48
        %219 = vbcast.lane.b32.xlu0 %v193, %s218
        %v220 = vpop.permute.xlu0 %219
        %s222 = sor.u32 256, 56
        %223 = vbcast.lane.b32.xlu0 %v193, %s222
        %v224 = vpop.permute.xlu0 %223
        %s226 = sor.u32 256, 64
        %227 = vbcast.lane.b32.xlu0 %v193, %s226
        %v228 = vpop.permute.xlu0 %227
        %s230 = sor.u32 256, 72
        %231 = vbcast.lane.b32.xlu0 %v193, %s230
        %v232 = vpop.permute.xlu0 %231
        %s234 = sor.u32 256, 80
        %235 = vbcast.lane.b32.xlu0 %v193, %s234
        %v236 = vpop.permute.xlu0 %235
        %s238 = sor.u32 256, 88
        %239 = vbcast.lane.b32.xlu0 %v193, %s238
        %v240 = vpop.permute.xlu0 %239
        %s242 = sor.u32 256, 96
        %243 = vbcast.lane.b32.xlu0 %v193, %s242
        %v244 = vpop.permute.xlu0 %243
        %s246 = sor.u32 256, 104
        %247 = vbcast.lane.b32.xlu0 %v193, %s246
        %v248 = vpop.permute.xlu0 %247
        %s250 = sor.u32 256, 112
        %251 = vbcast.lane.b32.xlu0 %v193, %s250
        %v252 = vpop.permute.xlu0 %251
        %s254 = sor.u32 256, 120
        %255 = vbcast.lane.b32.xlu0 %v193, %s254
        %v256 = vpop.permute.xlu0 %255
        %v257 = vlaneseq
        %v258 = vshrl.u32 %v257, 7
        %v259 = vsub.s32 1, %v258
        %v260 = vrot.slane %v184, %v259
        %262 = vbcast.lane.b32.xlu0 %v260, 256
        %v263 = vpop.permute.xlu0 %262
        %s265 = sor.u32 256, 8
        %266 = vbcast.lane.b32.xlu0 %v260, %s265
        %v267 = vpop.permute.xlu0 %266
        %s269 = sor.u32 256, 16
        %270 = vbcast.lane.b32.xlu0 %v260, %s269
        %v271 = vpop.permute.xlu0 %270
        %s273 = sor.u32 256, 24
        %274 = vbcast.lane.b32.xlu0 %v260, %s273
        %v275 = vpop.permute.xlu0 %274
        %s277 = sor.u32 256, 32
        %278 = vbcast.lane.b32.xlu0 %v260, %s277
        %v279 = vpop.permute.xlu0 %278
        %s281 = sor.u32 256, 40
        %282 = vbcast.lane.b32.xlu0 %v260, %s281
        %v283 = vpop.permute.xlu0 %282
        %s285 = sor.u32 256, 48
        %286 = vbcast.lane.b32.xlu0 %v260, %s285
        %v287 = vpop.permute.xlu0 %286
        %s289 = sor.u32 256, 56
        %290 = vbcast.lane.b32.xlu0 %v260, %s289
        %v291 = vpop.permute.xlu0 %290
        %s293 = sor.u32 256, 64
        %294 = vbcast.lane.b32.xlu0 %v260, %s293
        %v295 = vpop.permute.xlu0 %294
        %s297 = sor.u32 256, 72
        %298 = vbcast.lane.b32.xlu0 %v260, %s297
        %v299 = vpop.permute.xlu0 %298
        %s301 = sor.u32 256, 80
        %302 = vbcast.lane.b32.xlu0 %v260, %s301
        %v303 = vpop.permute.xlu0 %302
        %s305 = sor.u32 256, 88
        %306 = vbcast.lane.b32.xlu0 %v260, %s305
        %v307 = vpop.permute.xlu0 %306
        %s309 = sor.u32 256, 96
        %310 = vbcast.lane.b32.xlu0 %v260, %s309
        %v311 = vpop.permute.xlu0 %310
        %s313 = sor.u32 256, 104
        %314 = vbcast.lane.b32.xlu0 %v260, %s313
        %v315 = vpop.permute.xlu0 %314
        %s317 = sor.u32 256, 112
        %318 = vbcast.lane.b32.xlu0 %v260, %s317
        %v319 = vpop.permute.xlu0 %318
        %s321 = sor.u32 256, 120
        %322 = vbcast.lane.b32.xlu0 %v260, %s321
        %v323 = vpop.permute.xlu0 %322
        %v324 = vlaneseq
        %v325 = vshrl.u32 %v324, 7
        %v326 = vsub.s32 2, %v325
        %v327 = vrot.slane %v184, %v326
        %329 = vbcast.lane.b32.xlu0 %v327, 256
        %v330 = vpop.permute.xlu0 %329
        %s332 = sor.u32 256, 8
        %333 = vbcast.lane.b32.xlu0 %v327, %s332
        %v334 = vpop.permute.xlu0 %333
        %s336 = sor.u32 256, 16
        %337 = vbcast.lane.b32.xlu0 %v327, %s336
        %v338 = vpop.permute.xlu0 %337
        %s340 = sor.u32 256, 24
        %341 = vbcast.lane.b32.xlu0 %v327, %s340
        %v342 = vpop.permute.xlu0 %341
        %s344 = sor.u32 256, 32
        %345 = vbcast.lane.b32.xlu0 %v327, %s344
        %v346 = vpop.permute.xlu0 %345
        %s348 = sor.u32 256, 40
        %349 = vbcast.lane.b32.xlu0 %v327, %s348
        %v350 = vpop.permute.xlu0 %349
        %s352 = sor.u32 256, 48
        %353 = vbcast.lane.b32.xlu0 %v327, %s352
        %v354 = vpop.permute.xlu0 %353
        %s356 = sor.u32 256, 56
        %357 = vbcast.lane.b32.xlu0 %v327, %s356
        %v358 = vpop.permute.xlu0 %357
        %s360 = sor.u32 256, 64
        %361 = vbcast.lane.b32.xlu0 %v327, %s360
        %v362 = vpop.permute.xlu0 %361
        %s364 = sor.u32 256, 72
        %365 = vbcast.lane.b32.xlu0 %v327, %s364
        %v366 = vpop.permute.xlu0 %365
        %s368 = sor.u32 256, 80
        %369 = vbcast.lane.b32.xlu0 %v327, %s368
        %v370 = vpop.permute.xlu0 %369
        %s372 = sor.u32 256, 88
        %373 = vbcast.lane.b32.xlu0 %v327, %s372
        %v374 = vpop.permute.xlu0 %373
        %s376 = sor.u32 256, 96
        %377 = vbcast.lane.b32.xlu0 %v327, %s376
        %v378 = vpop.permute.xlu0 %377
        %s380 = sor.u32 256, 104
        %381 = vbcast.lane.b32.xlu0 %v327, %s380
        %v382 = vpop.permute.xlu0 %381
        %s384 = sor.u32 256, 112
        %385 = vbcast.lane.b32.xlu0 %v327, %s384
        %v386 = vpop.permute.xlu0 %385
        %s388 = sor.u32 256, 120
        %389 = vbcast.lane.b32.xlu0 %v327, %s388
        %v390 = vpop.permute.xlu0 %389
        %v391 = vlaneseq
        %v392 = vshrl.u32 %v391, 7
        %v393 = vsub.s32 3, %v392
        %v394 = vrot.slane %v184, %v393
        %396 = vbcast.lane.b32.xlu0 %v394, 256
        %v397 = vpop.permute.xlu0 %396
        %s399 = sor.u32 256, 8
        %400 = vbcast.lane.b32.xlu0 %v394, %s399
        %v401 = vpop.permute.xlu0 %400
        %s403 = sor.u32 256, 16
        %404 = vbcast.lane.b32.xlu0 %v394, %s403
        %v405 = vpop.permute.xlu0 %404
        %s407 = sor.u32 256, 24
        %408 = vbcast.lane.b32.xlu0 %v394, %s407
        %v409 = vpop.permute.xlu0 %408
        %s411 = sor.u32 256, 32
        %412 = vbcast.lane.b32.xlu0 %v394, %s411
        %v413 = vpop.permute.xlu0 %412
        %s415 = sor.u32 256, 40
        %416 = vbcast.lane.b32.xlu0 %v394, %s415
        %v417 = vpop.permute.xlu0 %416
        %s419 = sor.u32 256, 48
        %420 = vbcast.lane.b32.xlu0 %v394, %s419
        %v421 = vpop.permute.xlu0 %420
        %s423 = sor.u32 256, 56
        %424 = vbcast.lane.b32.xlu0 %v394, %s423
        %v425 = vpop.permute.xlu0 %424
        %s427 = sor.u32 256, 64
        %428 = vbcast.lane.b32.xlu0 %v394, %s427
        %v429 = vpop.permute.xlu0 %428
        %s431 = sor.u32 256, 72
        %432 = vbcast.lane.b32.xlu0 %v394, %s431
        %v433 = vpop.permute.xlu0 %432
        %s435 = sor.u32 256, 80
        %436 = vbcast.lane.b32.xlu0 %v394, %s435
        %v437 = vpop.permute.xlu0 %436
        %s439 = sor.u32 256, 88
        %440 = vbcast.lane.b32.xlu0 %v394, %s439
        %v441 = vpop.permute.xlu0 %440
        %s443 = sor.u32 256, 96
        %444 = vbcast.lane.b32.xlu0 %v394, %s443
        %v445 = vpop.permute.xlu0 %444
        %s447 = sor.u32 256, 104
        %448 = vbcast.lane.b32.xlu0 %v394, %s447
        %v449 = vpop.permute.xlu0 %448
        %s451 = sor.u32 256, 112
        %452 = vbcast.lane.b32.xlu0 %v394, %s451
        %v453 = vpop.permute.xlu0 %452
        %s455 = sor.u32 256, 120
        %456 = vbcast.lane.b32.xlu0 %v394, %s455
        %v457 = vpop.permute.xlu0 %456
        %v458 = vlaneseq
        %v459 = vshrl.u32 %v458, 7
        %v460 = vsub.s32 4, %v459
        %v461 = vrot.slane %v184, %v460
        %463 = vbcast.lane.b32.xlu0 %v461, 256
        %v464 = vpop.permute.xlu0 %463
        %s466 = sor.u32 256, 8
        %467 = vbcast.lane.b32.xlu0 %v461, %s466
        %v468 = vpop.permute.xlu0 %467
        %s470 = sor.u32 256, 16
        %471 = vbcast.lane.b32.xlu0 %v461, %s470
        %v472 = vpop.permute.xlu0 %471
        %s474 = sor.u32 256, 24
        %475 = vbcast.lane.b32.xlu0 %v461, %s474
        %v476 = vpop.permute.xlu0 %475
        %s478 = sor.u32 256, 32
        %479 = vbcast.lane.b32.xlu0 %v461, %s478
        %v480 = vpop.permute.xlu0 %479
        %s482 = sor.u32 256, 40
        %483 = vbcast.lane.b32.xlu0 %v461, %s482
        %v484 = vpop.permute.xlu0 %483
        %s486 = sor.u32 256, 48
        %487 = vbcast.lane.b32.xlu0 %v461, %s486
        %v488 = vpop.permute.xlu0 %487
        %s490 = sor.u32 256, 56
        %491 = vbcast.lane.b32.xlu0 %v461, %s490
        %v492 = vpop.permute.xlu0 %491
        %s494 = sor.u32 256, 64
        %495 = vbcast.lane.b32.xlu0 %v461, %s494
        %v496 = vpop.permute.xlu0 %495
        %s498 = sor.u32 256, 72
        %499 = vbcast.lane.b32.xlu0 %v461, %s498
        %v500 = vpop.permute.xlu0 %499
        %s502 = sor.u32 256, 80
        %503 = vbcast.lane.b32.xlu0 %v461, %s502
        %v504 = vpop.permute.xlu0 %503
        %s506 = sor.u32 256, 88
        %507 = vbcast.lane.b32.xlu0 %v461, %s506
        %v508 = vpop.permute.xlu0 %507
        %s510 = sor.u32 256, 96
        %511 = vbcast.lane.b32.xlu0 %v461, %s510
        %v512 = vpop.permute.xlu0 %511
        %s514 = sor.u32 256, 104
        %515 = vbcast.lane.b32.xlu0 %v461, %s514
        %v516 = vpop.permute.xlu0 %515
        %s518 = sor.u32 256, 112
        %519 = vbcast.lane.b32.xlu0 %v461, %s518
        %v520 = vpop.permute.xlu0 %519
        %s522 = sor.u32 256, 120
        %523 = vbcast.lane.b32.xlu0 %v461, %s522
        %v524 = vpop.permute.xlu0 %523
        %v525 = vlaneseq
        %v526 = vshrl.u32 %v525, 7
        %v527 = vsub.s32 5, %v526
        %v528 = vrot.slane %v184, %v527
        %530 = vbcast.lane.b32.xlu0 %v528, 256
        %v531 = vpop.permute.xlu0 %530
        %s533 = sor.u32 256, 8
        %534 = vbcast.lane.b32.xlu0 %v528, %s533
        %v535 = vpop.permute.xlu0 %534
        %s537 = sor.u32 256, 16
        %538 = vbcast.lane.b32.xlu0 %v528, %s537
        %v539 = vpop.permute.xlu0 %538
        %s541 = sor.u32 256, 24
        %542 = vbcast.lane.b32.xlu0 %v528, %s541
        %v543 = vpop.permute.xlu0 %542
        %s545 = sor.u32 256, 32
        %546 = vbcast.lane.b32.xlu0 %v528, %s545
        %v547 = vpop.permute.xlu0 %546
        %s549 = sor.u32 256, 40
        %550 = vbcast.lane.b32.xlu0 %v528, %s549
        %v551 = vpop.permute.xlu0 %550
        %s553 = sor.u32 256, 48
        %554 = vbcast.lane.b32.xlu0 %v528, %s553
        %v555 = vpop.permute.xlu0 %554
        %s557 = sor.u32 256, 56
        %558 = vbcast.lane.b32.xlu0 %v528, %s557
        %v559 = vpop.permute.xlu0 %558
        %s561 = sor.u32 256, 64
        %562 = vbcast.lane.b32.xlu0 %v528, %s561
        %v563 = vpop.permute.xlu0 %562
        %s565 = sor.u32 256, 72
        %566 = vbcast.lane.b32.xlu0 %v528, %s565
        %v567 = vpop.permute.xlu0 %566
        %s569 = sor.u32 256, 80
        %570 = vbcast.lane.b32.xlu0 %v528, %s569
        %v571 = vpop.permute.xlu0 %570
        %s573 = sor.u32 256, 88
        %574 = vbcast.lane.b32.xlu0 %v528, %s573
        %v575 = vpop.permute.xlu0 %574
        %s577 = sor.u32 256, 96
        %578 = vbcast.lane.b32.xlu0 %v528, %s577
        %v579 = vpop.permute.xlu0 %578
        %s581 = sor.u32 256, 104
        %582 = vbcast.lane.b32.xlu0 %v528, %s581
        %v583 = vpop.permute.xlu0 %582
        %s585 = sor.u32 256, 112
        %586 = vbcast.lane.b32.xlu0 %v528, %s585
        %v587 = vpop.permute.xlu0 %586
        %s589 = sor.u32 256, 120
        %590 = vbcast.lane.b32.xlu0 %v528, %s589
        %v591 = vpop.permute.xlu0 %590
        %v592 = vlaneseq
        %v593 = vshrl.u32 %v592, 7
        %v594 = vsub.s32 6, %v593
        %v595 = vrot.slane %v184, %v594
        %597 = vbcast.lane.b32.xlu0 %v595, 256
        %v598 = vpop.permute.xlu0 %597
        %s600 = sor.u32 256, 8
        %601 = vbcast.lane.b32.xlu0 %v595, %s600
        %v602 = vpop.permute.xlu0 %601
        %s604 = sor.u32 256, 16
        %605 = vbcast.lane.b32.xlu0 %v595, %s604
        %v606 = vpop.permute.xlu0 %605
        %s608 = sor.u32 256, 24
        %609 = vbcast.lane.b32.xlu0 %v595, %s608
        %v610 = vpop.permute.xlu0 %609
        %s612 = sor.u32 256, 32
        %613 = vbcast.lane.b32.xlu0 %v595, %s612
        %v614 = vpop.permute.xlu0 %613
        %s616 = sor.u32 256, 40
        %617 = vbcast.lane.b32.xlu0 %v595, %s616
        %v618 = vpop.permute.xlu0 %617
        %s620 = sor.u32 256, 48
        %621 = vbcast.lane.b32.xlu0 %v595, %s620
        %v622 = vpop.permute.xlu0 %621
        %s624 = sor.u32 256, 56
        %625 = vbcast.lane.b32.xlu0 %v595, %s624
        %v626 = vpop.permute.xlu0 %625
        %s628 = sor.u32 256, 64
        %629 = vbcast.lane.b32.xlu0 %v595, %s628
        %v630 = vpop.permute.xlu0 %629
        %s632 = sor.u32 256, 72
        %633 = vbcast.lane.b32.xlu0 %v595, %s632
        %v634 = vpop.permute.xlu0 %633
        %s636 = sor.u32 256, 80
        %637 = vbcast.lane.b32.xlu0 %v595, %s636
        %v638 = vpop.permute.xlu0 %637
        %s640 = sor.u32 256, 88
        %641 = vbcast.lane.b32.xlu0 %v595, %s640
        %v642 = vpop.permute.xlu0 %641
        %s644 = sor.u32 256, 96
        %645 = vbcast.lane.b32.xlu0 %v595, %s644
        %v646 = vpop.permute.xlu0 %645
        %s648 = sor.u32 256, 104
        %649 = vbcast.lane.b32.xlu0 %v595, %s648
        %v650 = vpop.permute.xlu0 %649
        %s652 = sor.u32 256, 112
        %653 = vbcast.lane.b32.xlu0 %v595, %s652
        %v654 = vpop.permute.xlu0 %653
        %s656 = sor.u32 256, 120
        %657 = vbcast.lane.b32.xlu0 %v595, %s656
        %v658 = vpop.permute.xlu0 %657
        %v659 = vlaneseq
        %v660 = vshrl.u32 %v659, 7
        %v661 = vsub.s32 7, %v660
        %v662 = vrot.slane %v184, %v661
        %664 = vbcast.lane.b32.xlu0 %v662, 256
        %v665 = vpop.permute.xlu0 %664
        %s667 = sor.u32 256, 8
        %668 = vbcast.lane.b32.xlu0 %v662, %s667
        %v669 = vpop.permute.xlu0 %668
        %s671 = sor.u32 256, 16
        %672 = vbcast.lane.b32.xlu0 %v662, %s671
        %v673 = vpop.permute.xlu0 %672
        %s675 = sor.u32 256, 24
        %676 = vbcast.lane.b32.xlu0 %v662, %s675
        %v677 = vpop.permute.xlu0 %676
        %s679 = sor.u32 256, 32
        %680 = vbcast.lane.b32.xlu0 %v662, %s679
        %v681 = vpop.permute.xlu0 %680
        %s683 = sor.u32 256, 40
        %684 = vbcast.lane.b32.xlu0 %v662, %s683
        %v685 = vpop.permute.xlu0 %684
        %s687 = sor.u32 256, 48
        %688 = vbcast.lane.b32.xlu0 %v662, %s687
        %v689 = vpop.permute.xlu0 %688
        %s691 = sor.u32 256, 56
        %692 = vbcast.lane.b32.xlu0 %v662, %s691
        %v693 = vpop.permute.xlu0 %692
        %s695 = sor.u32 256, 64
        %696 = vbcast.lane.b32.xlu0 %v662, %s695
        %v697 = vpop.permute.xlu0 %696
        %s699 = sor.u32 256, 72
        %700 = vbcast.lane.b32.xlu0 %v662, %s699
        %v701 = vpop.permute.xlu0 %700
        %s703 = sor.u32 256, 80
        %704 = vbcast.lane.b32.xlu0 %v662, %s703
        %v705 = vpop.permute.xlu0 %704
        %s707 = sor.u32 256, 88
        %708 = vbcast.lane.b32.xlu0 %v662, %s707
        %v709 = vpop.permute.xlu0 %708
        %s711 = sor.u32 256, 96
        %712 = vbcast.lane.b32.xlu0 %v662, %s711
        %v713 = vpop.permute.xlu0 %712
        %s715 = sor.u32 256, 104
        %716 = vbcast.lane.b32.xlu0 %v662, %s715
        %v717 = vpop.permute.xlu0 %716
        %s719 = sor.u32 256, 112
        %720 = vbcast.lane.b32.xlu0 %v662, %s719
        %v721 = vpop.permute.xlu0 %720
        %s723 = sor.u32 256, 120
        %724 = vbcast.lane.b32.xlu0 %v662, %s723
        %v725 = vpop.permute.xlu0 %724
        %v726 = vlaneseq
        %v727 = vshrl.u32 %v726, 7
        %v728 = vsub.s32 0, %v727
        %v729 = vrot.slane %v189, %v728
        %731 = vbcast.lane.b32.xlu0 %v729, 256
        %v732 = vpop.permute.xlu0 %731
        %s734 = sor.u32 256, 8
        %735 = vbcast.lane.b32.xlu0 %v729, %s734
        %v736 = vpop.permute.xlu0 %735
        %s738 = sor.u32 256, 16
        %739 = vbcast.lane.b32.xlu0 %v729, %s738
        %v740 = vpop.permute.xlu0 %739
        %s742 = sor.u32 256, 24
        %743 = vbcast.lane.b32.xlu0 %v729, %s742
        %v744 = vpop.permute.xlu0 %743
        %s746 = sor.u32 256, 32
        %747 = vbcast.lane.b32.xlu0 %v729, %s746
        %v748 = vpop.permute.xlu0 %747
        %s750 = sor.u32 256, 40
        %751 = vbcast.lane.b32.xlu0 %v729, %s750
        %v752 = vpop.permute.xlu0 %751
        %s754 = sor.u32 256, 48
        %755 = vbcast.lane.b32.xlu0 %v729, %s754
        %v756 = vpop.permute.xlu0 %755
        %s758 = sor.u32 256, 56
        %759 = vbcast.lane.b32.xlu0 %v729, %s758
        %v760 = vpop.permute.xlu0 %759
        %s762 = sor.u32 256, 64
        %763 = vbcast.lane.b32.xlu0 %v729, %s762
        %v764 = vpop.permute.xlu0 %763
        %s766 = sor.u32 256, 72
        %767 = vbcast.lane.b32.xlu0 %v729, %s766
        %v768 = vpop.permute.xlu0 %767
        %s770 = sor.u32 256, 80
        %771 = vbcast.lane.b32.xlu0 %v729, %s770
        %v772 = vpop.permute.xlu0 %771
        %s774 = sor.u32 256, 88
        %775 = vbcast.lane.b32.xlu0 %v729, %s774
        %v776 = vpop.permute.xlu0 %775
        %s778 = sor.u32 256, 96
        %779 = vbcast.lane.b32.xlu0 %v729, %s778
        %v780 = vpop.permute.xlu0 %779
        %s782 = sor.u32 256, 104
        %783 = vbcast.lane.b32.xlu0 %v729, %s782
        %v784 = vpop.permute.xlu0 %783
        %s786 = sor.u32 256, 112
        %787 = vbcast.lane.b32.xlu0 %v729, %s786
        %v788 = vpop.permute.xlu0 %787
        %s790 = sor.u32 256, 120
        %791 = vbcast.lane.b32.xlu0 %v729, %s790
        %v792 = vpop.permute.xlu0 %791
        %v793 = vlaneseq
        %v794 = vshrl.u32 %v793, 7
        %v795 = vsub.s32 1, %v794
        %v796 = vrot.slane %v189, %v795
        %798 = vbcast.lane.b32.xlu0 %v796, 256
        %v799 = vpop.permute.xlu0 %798
        %s801 = sor.u32 256, 8
        %802 = vbcast.lane.b32.xlu0 %v796, %s801
        %v803 = vpop.permute.xlu0 %802
        %s805 = sor.u32 256, 16
        %806 = vbcast.lane.b32.xlu0 %v796, %s805
        %v807 = vpop.permute.xlu0 %806
        %s809 = sor.u32 256, 24
        %810 = vbcast.lane.b32.xlu0 %v796, %s809
        %v811 = vpop.permute.xlu0 %810
        %s813 = sor.u32 256, 32
        %814 = vbcast.lane.b32.xlu0 %v796, %s813
        %v815 = vpop.permute.xlu0 %814
        %s817 = sor.u32 256, 40
        %818 = vbcast.lane.b32.xlu0 %v796, %s817
        %v819 = vpop.permute.xlu0 %818
        %s821 = sor.u32 256, 48
        %822 = vbcast.lane.b32.xlu0 %v796, %s821
        %v823 = vpop.permute.xlu0 %822
        %s825 = sor.u32 256, 56
        %826 = vbcast.lane.b32.xlu0 %v796, %s825
        %v827 = vpop.permute.xlu0 %826
        %s829 = sor.u32 256, 64
        %830 = vbcast.lane.b32.xlu0 %v796, %s829
        %v831 = vpop.permute.xlu0 %830
        %s833 = sor.u32 256, 72
        %834 = vbcast.lane.b32.xlu0 %v796, %s833
        %v835 = vpop.permute.xlu0 %834
        %s837 = sor.u32 256, 80
        %838 = vbcast.lane.b32.xlu0 %v796, %s837
        %v839 = vpop.permute.xlu0 %838
        %s841 = sor.u32 256, 88
        %842 = vbcast.lane.b32.xlu0 %v796, %s841
        %v843 = vpop.permute.xlu0 %842
        %s845 = sor.u32 256, 96
        %846 = vbcast.lane.b32.xlu0 %v796, %s845
        %v847 = vpop.permute.xlu0 %846
        %s849 = sor.u32 256, 104
        %850 = vbcast.lane.b32.xlu0 %v796, %s849
        %v851 = vpop.permute.xlu0 %850
        %s853 = sor.u32 256, 112
        %854 = vbcast.lane.b32.xlu0 %v796, %s853
        %v855 = vpop.permute.xlu0 %854
        %s857 = sor.u32 256, 120
        %858 = vbcast.lane.b32.xlu0 %v796, %s857
        %v859 = vpop.permute.xlu0 %858
        %v860 = vlaneseq
        %v861 = vshrl.u32 %v860, 7
        %v862 = vsub.s32 2, %v861
        %v863 = vrot.slane %v189, %v862
        %865 = vbcast.lane.b32.xlu0 %v863, 256
        %v866 = vpop.permute.xlu0 %865
        %s868 = sor.u32 256, 8
        %869 = vbcast.lane.b32.xlu0 %v863, %s868
        %v870 = vpop.permute.xlu0 %869
        %s872 = sor.u32 256, 16
        %873 = vbcast.lane.b32.xlu0 %v863, %s872
        %v874 = vpop.permute.xlu0 %873
        %s876 = sor.u32 256, 24
        %877 = vbcast.lane.b32.xlu0 %v863, %s876
        %v878 = vpop.permute.xlu0 %877
        %s880 = sor.u32 256, 32
        %881 = vbcast.lane.b32.xlu0 %v863, %s880
        %v882 = vpop.permute.xlu0 %881
        %s884 = sor.u32 256, 40
        %885 = vbcast.lane.b32.xlu0 %v863, %s884
        %v886 = vpop.permute.xlu0 %885
        %s888 = sor.u32 256, 48
        %889 = vbcast.lane.b32.xlu0 %v863, %s888
        %v890 = vpop.permute.xlu0 %889
        %s892 = sor.u32 256, 56
        %893 = vbcast.lane.b32.xlu0 %v863, %s892
        %v894 = vpop.permute.xlu0 %893
        %s896 = sor.u32 256, 64
        %897 = vbcast.lane.b32.xlu0 %v863, %s896
        %v898 = vpop.permute.xlu0 %897
        %s900 = sor.u32 256, 72
        %901 = vbcast.lane.b32.xlu0 %v863, %s900
        %v902 = vpop.permute.xlu0 %901
        %s904 = sor.u32 256, 80
        %905 = vbcast.lane.b32.xlu0 %v863, %s904
        %v906 = vpop.permute.xlu0 %905
        %s908 = sor.u32 256, 88
        %909 = vbcast.lane.b32.xlu0 %v863, %s908
        %v910 = vpop.permute.xlu0 %909
        %s912 = sor.u32 256, 96
        %913 = vbcast.lane.b32.xlu0 %v863, %s912
        %v914 = vpop.permute.xlu0 %913
        %s916 = sor.u32 256, 104
        %917 = vbcast.lane.b32.xlu0 %v863, %s916
        %v918 = vpop.permute.xlu0 %917
        %s920 = sor.u32 256, 112
        %921 = vbcast.lane.b32.xlu0 %v863, %s920
        %v922 = vpop.permute.xlu0 %921
        %s924 = sor.u32 256, 120
        %925 = vbcast.lane.b32.xlu0 %v863, %s924
        %v926 = vpop.permute.xlu0 %925
        %v927 = vlaneseq
        %v928 = vshrl.u32 %v927, 7
        %v929 = vsub.s32 3, %v928
        %v930 = vrot.slane %v189, %v929
        %932 = vbcast.lane.b32.xlu0 %v930, 256
        %v933 = vpop.permute.xlu0 %932
        %s935 = sor.u32 256, 8
        %936 = vbcast.lane.b32.xlu0 %v930, %s935
        %v937 = vpop.permute.xlu0 %936
        %s939 = sor.u32 256, 16
        %940 = vbcast.lane.b32.xlu0 %v930, %s939
        %v941 = vpop.permute.xlu0 %940
        %s943 = sor.u32 256, 24
        %944 = vbcast.lane.b32.xlu0 %v930, %s943
        %v945 = vpop.permute.xlu0 %944
        %s947 = sor.u32 256, 32
        %948 = vbcast.lane.b32.xlu0 %v930, %s947
        %v949 = vpop.permute.xlu0 %948
        %s951 = sor.u32 256, 40
        %952 = vbcast.lane.b32.xlu0 %v930, %s951
        %v953 = vpop.permute.xlu0 %952
        %s955 = sor.u32 256, 48
        %956 = vbcast.lane.b32.xlu0 %v930, %s955
        %v957 = vpop.permute.xlu0 %956
        %s959 = sor.u32 256, 56
        %960 = vbcast.lane.b32.xlu0 %v930, %s959
        %v961 = vpop.permute.xlu0 %960
        %s963 = sor.u32 256, 64
        %964 = vbcast.lane.b32.xlu0 %v930, %s963
        %v965 = vpop.permute.xlu0 %964
        %s967 = sor.u32 256, 72
        %968 = vbcast.lane.b32.xlu0 %v930, %s967
        %v969 = vpop.permute.xlu0 %968
        %s971 = sor.u32 256, 80
        %972 = vbcast.lane.b32.xlu0 %v930, %s971
        %v973 = vpop.permute.xlu0 %972
        %s975 = sor.u32 256, 88
        %976 = vbcast.lane.b32.xlu0 %v930, %s975
        %v977 = vpop.permute.xlu0 %976
        %s979 = sor.u32 256, 96
        %980 = vbcast.lane.b32.xlu0 %v930, %s979
        %v981 = vpop.permute.xlu0 %980
        %s983 = sor.u32 256, 104
        %984 = vbcast.lane.b32.xlu0 %v930, %s983
        %v985 = vpop.permute.xlu0 %984
        %s987 = sor.u32 256, 112
        %988 = vbcast.lane.b32.xlu0 %v930, %s987
        %v989 = vpop.permute.xlu0 %988
        %s991 = sor.u32 256, 120
        %992 = vbcast.lane.b32.xlu0 %v930, %s991
        %v993 = vpop.permute.xlu0 %992
        %v994 = vlaneseq
        %v995 = vshrl.u32 %v994, 7
        %v996 = vsub.s32 4, %v995
        %v997 = vrot.slane %v189, %v996
        %999 = vbcast.lane.b32.xlu0 %v997, 256
        %v1000 = vpop.permute.xlu0 %999
        %s1002 = sor.u32 256, 8
        %1003 = vbcast.lane.b32.xlu0 %v997, %s1002
        %v1004 = vpop.permute.xlu0 %1003
        %s1006 = sor.u32 256, 16
        %1007 = vbcast.lane.b32.xlu0 %v997, %s1006
        %v1008 = vpop.permute.xlu0 %1007
        %s1010 = sor.u32 256, 24
        %1011 = vbcast.lane.b32.xlu0 %v997, %s1010
        %v1012 = vpop.permute.xlu0 %1011
        %s1014 = sor.u32 256, 32
        %1015 = vbcast.lane.b32.xlu0 %v997, %s1014
        %v1016 = vpop.permute.xlu0 %1015
        %s1018 = sor.u32 256, 40
        %1019 = vbcast.lane.b32.xlu0 %v997, %s1018
        %v1020 = vpop.permute.xlu0 %1019
        %s1022 = sor.u32 256, 48
        %1023 = vbcast.lane.b32.xlu0 %v997, %s1022
        %v1024 = vpop.permute.xlu0 %1023
        %s1026 = sor.u32 256, 56
        %1027 = vbcast.lane.b32.xlu0 %v997, %s1026
        %v1028 = vpop.permute.xlu0 %1027
        %s1030 = sor.u32 256, 64
        %1031 = vbcast.lane.b32.xlu0 %v997, %s1030
        %v1032 = vpop.permute.xlu0 %1031
        %s1034 = sor.u32 256, 72
        %1035 = vbcast.lane.b32.xlu0 %v997, %s1034
        %v1036 = vpop.permute.xlu0 %1035
        %s1038 = sor.u32 256, 80
        %1039 = vbcast.lane.b32.xlu0 %v997, %s1038
        %v1040 = vpop.permute.xlu0 %1039
        %s1042 = sor.u32 256, 88
        %1043 = vbcast.lane.b32.xlu0 %v997, %s1042
        %v1044 = vpop.permute.xlu0 %1043
        %s1046 = sor.u32 256, 96
        %1047 = vbcast.lane.b32.xlu0 %v997, %s1046
        %v1048 = vpop.permute.xlu0 %1047
        %s1050 = sor.u32 256, 104
        %1051 = vbcast.lane.b32.xlu0 %v997, %s1050
        %v1052 = vpop.permute.xlu0 %1051
        %s1054 = sor.u32 256, 112
        %1055 = vbcast.lane.b32.xlu0 %v997, %s1054
        %v1056 = vpop.permute.xlu0 %1055
        %s1058 = sor.u32 256, 120
        %1059 = vbcast.lane.b32.xlu0 %v997, %s1058
        %v1060 = vpop.permute.xlu0 %1059
        %v1061 = vlaneseq
        %v1062 = vshrl.u32 %v1061, 7
        %v1063 = vsub.s32 5, %v1062
        %v1064 = vrot.slane %v189, %v1063
        %1066 = vbcast.lane.b32.xlu0 %v1064, 256
        %v1067 = vpop.permute.xlu0 %1066
        %s1069 = sor.u32 256, 8
        %1070 = vbcast.lane.b32.xlu0 %v1064, %s1069
        %v1071 = vpop.permute.xlu0 %1070
        %s1073 = sor.u32 256, 16
        %1074 = vbcast.lane.b32.xlu0 %v1064, %s1073
        %v1075 = vpop.permute.xlu0 %1074
        %s1077 = sor.u32 256, 24
        %1078 = vbcast.lane.b32.xlu0 %v1064, %s1077
        %v1079 = vpop.permute.xlu0 %1078
        %s1081 = sor.u32 256, 32
        %1082 = vbcast.lane.b32.xlu0 %v1064, %s1081
        %v1083 = vpop.permute.xlu0 %1082
        %s1085 = sor.u32 256, 40
        %1086 = vbcast.lane.b32.xlu0 %v1064, %s1085
        %v1087 = vpop.permute.xlu0 %1086
        %s1089 = sor.u32 256, 48
        %1090 = vbcast.lane.b32.xlu0 %v1064, %s1089
        %v1091 = vpop.permute.xlu0 %1090
        %s1093 = sor.u32 256, 56
        %1094 = vbcast.lane.b32.xlu0 %v1064, %s1093
        %v1095 = vpop.permute.xlu0 %1094
        %s1097 = sor.u32 256, 64
        %1098 = vbcast.lane.b32.xlu0 %v1064, %s1097
        %v1099 = vpop.permute.xlu0 %1098
        %s1101 = sor.u32 256, 72
        %1102 = vbcast.lane.b32.xlu0 %v1064, %s1101
        %v1103 = vpop.permute.xlu0 %1102
        %s1105 = sor.u32 256, 80
        %1106 = vbcast.lane.b32.xlu0 %v1064, %s1105
        %v1107 = vpop.permute.xlu0 %1106
        %s1109 = sor.u32 256, 88
        %1110 = vbcast.lane.b32.xlu0 %v1064, %s1109
        %v1111 = vpop.permute.xlu0 %1110
        %s1113 = sor.u32 256, 96
        %1114 = vbcast.lane.b32.xlu0 %v1064, %s1113
        %v1115 = vpop.permute.xlu0 %1114
        %s1117 = sor.u32 256, 104
        %1118 = vbcast.lane.b32.xlu0 %v1064, %s1117
        %v1119 = vpop.permute.xlu0 %1118
        %s1121 = sor.u32 256, 112
        %1122 = vbcast.lane.b32.xlu0 %v1064, %s1121
        %v1123 = vpop.permute.xlu0 %1122
        %s1125 = sor.u32 256, 120
        %1126 = vbcast.lane.b32.xlu0 %v1064, %s1125
        %v1127 = vpop.permute.xlu0 %1126
        %v1128 = vlaneseq
        %v1129 = vshrl.u32 %v1128, 7
        %v1130 = vsub.s32 6, %v1129
        %v1131 = vrot.slane %v189, %v1130
        %1133 = vbcast.lane.b32.xlu0 %v1131, 256
        %v1134 = vpop.permute.xlu0 %1133
        %s1136 = sor.u32 256, 8
        %1137 = vbcast.lane.b32.xlu0 %v1131, %s1136
        %v1138 = vpop.permute.xlu0 %1137
        %s1140 = sor.u32 256, 16
        %1141 = vbcast.lane.b32.xlu0 %v1131, %s1140
        %v1142 = vpop.permute.xlu0 %1141
        %s1144 = sor.u32 256, 24
        %1145 = vbcast.lane.b32.xlu0 %v1131, %s1144
        %v1146 = vpop.permute.xlu0 %1145
        %s1148 = sor.u32 256, 32
        %1149 = vbcast.lane.b32.xlu0 %v1131, %s1148
        %v1150 = vpop.permute.xlu0 %1149
        %s1152 = sor.u32 256, 40
        %1153 = vbcast.lane.b32.xlu0 %v1131, %s1152
        %v1154 = vpop.permute.xlu0 %1153
        %s1156 = sor.u32 256, 48
        %1157 = vbcast.lane.b32.xlu0 %v1131, %s1156
        %v1158 = vpop.permute.xlu0 %1157
        %s1160 = sor.u32 256, 56
        %1161 = vbcast.lane.b32.xlu0 %v1131, %s1160
        %v1162 = vpop.permute.xlu0 %1161
        %s1164 = sor.u32 256, 64
        %1165 = vbcast.lane.b32.xlu0 %v1131, %s1164
        %v1166 = vpop.permute.xlu0 %1165
        %s1168 = sor.u32 256, 72
        %1169 = vbcast.lane.b32.xlu0 %v1131, %s1168
        %v1170 = vpop.permute.xlu0 %1169
        %s1172 = sor.u32 256, 80
        %1173 = vbcast.lane.b32.xlu0 %v1131, %s1172
        %v1174 = vpop.permute.xlu0 %1173
        %s1176 = sor.u32 256, 88
        %1177 = vbcast.lane.b32.xlu0 %v1131, %s1176
        %v1178 = vpop.permute.xlu0 %1177
        %s1180 = sor.u32 256, 96
        %1181 = vbcast.lane.b32.xlu0 %v1131, %s1180
        %v1182 = vpop.permute.xlu0 %1181
        %s1184 = sor.u32 256, 104
        %1185 = vbcast.lane.b32.xlu0 %v1131, %s1184
        %v1186 = vpop.permute.xlu0 %1185
        %s1188 = sor.u32 256, 112
        %1189 = vbcast.lane.b32.xlu0 %v1131, %s1188
        %v1190 = vpop.permute.xlu0 %1189
        %s1192 = sor.u32 256, 120
        %1193 = vbcast.lane.b32.xlu0 %v1131, %s1192
        %v1194 = vpop.permute.xlu0 %1193
        %v1195 = vlaneseq
        %v1196 = vshrl.u32 %v1195, 7
        %v1197 = vsub.s32 7, %v1196
        %v1198 = vrot.slane %v189, %v1197
        %1200 = vbcast.lane.b32.xlu0 %v1198, 256
        %v1201 = vpop.permute.xlu0 %1200
        %s1203 = sor.u32 256, 8
        %1204 = vbcast.lane.b32.xlu0 %v1198, %s1203
        %v1205 = vpop.permute.xlu0 %1204
        %s1207 = sor.u32 256, 16
        %1208 = vbcast.lane.b32.xlu0 %v1198, %s1207
        %v1209 = vpop.permute.xlu0 %1208
        %s1211 = sor.u32 256, 24
        %1212 = vbcast.lane.b32.xlu0 %v1198, %s1211
        %v1213 = vpop.permute.xlu0 %1212
        %s1215 = sor.u32 256, 32
        %1216 = vbcast.lane.b32.xlu0 %v1198, %s1215
        %v1217 = vpop.permute.xlu0 %1216
        %s1219 = sor.u32 256, 40
        %1220 = vbcast.lane.b32.xlu0 %v1198, %s1219
        %v1221 = vpop.permute.xlu0 %1220
        %s1223 = sor.u32 256, 48
        %1224 = vbcast.lane.b32.xlu0 %v1198, %s1223
        %v1225 = vpop.permute.xlu0 %1224
        %s1227 = sor.u32 256, 56
        %1228 = vbcast.lane.b32.xlu0 %v1198, %s1227
        %v1229 = vpop.permute.xlu0 %1228
        %s1231 = sor.u32 256, 64
        %1232 = vbcast.lane.b32.xlu0 %v1198, %s1231
        %v1233 = vpop.permute.xlu0 %1232
        %s1235 = sor.u32 256, 72
        %1236 = vbcast.lane.b32.xlu0 %v1198, %s1235
        %v1237 = vpop.permute.xlu0 %1236
        %s1239 = sor.u32 256, 80
        %1240 = vbcast.lane.b32.xlu0 %v1198, %s1239
        %v1241 = vpop.permute.xlu0 %1240
        %s1243 = sor.u32 256, 88
        %1244 = vbcast.lane.b32.xlu0 %v1198, %s1243
        %v1245 = vpop.permute.xlu0 %1244
        %s1247 = sor.u32 256, 96
        %1248 = vbcast.lane.b32.xlu0 %v1198, %s1247
        %v1249 = vpop.permute.xlu0 %1248
        %s1251 = sor.u32 256, 104
        %1252 = vbcast.lane.b32.xlu0 %v1198, %s1251
        %v1253 = vpop.permute.xlu0 %1252
        %s1255 = sor.u32 256, 112
        %1256 = vbcast.lane.b32.xlu0 %v1198, %s1255
        %v1257 = vpop.permute.xlu0 %1256
        %s1259 = sor.u32 256, 120
        %1260 = vbcast.lane.b32.xlu0 %v1198, %s1259
        %v1261 = vpop.permute.xlu0 %1260
        %vm1262 = vcmask 7168
        %v1263 = vsel %vm1262, %v196, %v732
        %v1264 = vsel %vm1262, %v200, %v736
        %v1265 = vsel %vm1262, %v204, %v740
        %v1266 = vsel %vm1262, %v208, %v744
        %v1267 = vsel %vm1262, %v212, %v748
        %v1268 = vsel %vm1262, %v216, %v752
        %v1269 = vsel %vm1262, %v220, %v756
        %v1270 = vsel %vm1262, %v224, %v760
        %v1271 = vsel %vm1262, %v228, %v764
        %v1272 = vsel %vm1262, %v232, %v768
        %v1273 = vsel %vm1262, %v236, %v772
        %v1274 = vsel %vm1262, %v240, %v776
        %v1275 = vsel %vm1262, %v244, %v780
        %v1276 = vsel %vm1262, %v248, %v784
        %v1277 = vsel %vm1262, %v252, %v788
        %v1278 = vsel %vm1262, %v256, %v792
        %v1279 = vsel %vm1262, %v263, %v799
        %v1280 = vsel %vm1262, %v267, %v803
        %v1281 = vsel %vm1262, %v271, %v807
        %v1282 = vsel %vm1262, %v275, %v811
        %v1283 = vsel %vm1262, %v279, %v815
        %v1284 = vsel %vm1262, %v283, %v819
        %v1285 = vsel %vm1262, %v287, %v823
        %v1286 = vsel %vm1262, %v291, %v827
        %v1287 = vsel %vm1262, %v295, %v831
        %v1288 = vsel %vm1262, %v299, %v835
        %v1289 = vsel %vm1262, %v303, %v839
        %v1290 = vsel %vm1262, %v307, %v843
        %v1291 = vsel %vm1262, %v311, %v847
        %v1292 = vsel %vm1262, %v315, %v851
        %v1293 = vsel %vm1262, %v319, %v855
        %v1294 = vsel %vm1262, %v323, %v859
        %v1295 = vsel %vm1262, %v330, %v866
        %v1296 = vsel %vm1262, %v334, %v870
        %v1297 = vsel %vm1262, %v338, %v874
        %v1298 = vsel %vm1262, %v342, %v878
        %v1299 = vsel %vm1262, %v346, %v882
        %v1300 = vsel %vm1262, %v350, %v886
        %v1301 = vsel %vm1262, %v354, %v890
        %v1302 = vsel %vm1262, %v358, %v894
        %v1303 = vsel %vm1262, %v362, %v898
        %v1304 = vsel %vm1262, %v366, %v902
        %v1305 = vsel %vm1262, %v370, %v906
        %v1306 = vsel %vm1262, %v374, %v910
        %v1307 = vsel %vm1262, %v378, %v914
        %v1308 = vsel %vm1262, %v382, %v918
        %v1309 = vsel %vm1262, %v386, %v922
        %v1310 = vsel %vm1262, %v390, %v926
        %v1311 = vsel %vm1262, %v397, %v933
        %v1312 = vsel %vm1262, %v401, %v937
        %v1313 = vsel %vm1262, %v405, %v941
        %v1314 = vsel %vm1262, %v409, %v945
        %v1315 = vsel %vm1262, %v413, %v949
        %v1316 = vsel %vm1262, %v417, %v953
        %v1317 = vsel %vm1262, %v421, %v957
        %v1318 = vsel %vm1262, %v425, %v961
        %v1319 = vsel %vm1262, %v429, %v965
        %v1320 = vsel %vm1262, %v433, %v969
        %v1321 = vsel %vm1262, %v437, %v973
        %v1322 = vsel %vm1262, %v441, %v977
        %v1323 = vsel %vm1262, %v445, %v981
        %v1324 = vsel %vm1262, %v449, %v985
        %v1325 = vsel %vm1262, %v453, %v989
        %v1326 = vsel %vm1262, %v457, %v993
        %v1327 = vsel %vm1262, %v464, %v1000
        %v1328 = vsel %vm1262, %v468, %v1004
        %v1329 = vsel %vm1262, %v472, %v1008
        %v1330 = vsel %vm1262, %v476, %v1012
        %v1331 = vsel %vm1262, %v480, %v1016
        %v1332 = vsel %vm1262, %v484, %v1020
        %v1333 = vsel %vm1262, %v488, %v1024
        %v1334 = vsel %vm1262, %v492, %v1028
        %v1335 = vsel %vm1262, %v496, %v1032
        %v1336 = vsel %vm1262, %v500, %v1036
        %v1337 = vsel %vm1262, %v504, %v1040
        %v1338 = vsel %vm1262, %v508, %v1044
        %v1339 = vsel %vm1262, %v512, %v1048
        %v1340 = vsel %vm1262, %v516, %v1052
        %v1341 = vsel %vm1262, %v520, %v1056
        %v1342 = vsel %vm1262, %v524, %v1060
        %v1343 = vsel %vm1262, %v531, %v1067
        %v1344 = vsel %vm1262, %v535, %v1071
        %v1345 = vsel %vm1262, %v539, %v1075
        %v1346 = vsel %vm1262, %v543, %v1079
        %v1347 = vsel %vm1262, %v547, %v1083
        %v1348 = vsel %vm1262, %v551, %v1087
        %v1349 = vsel %vm1262, %v555, %v1091
        %v1350 = vsel %vm1262, %v559, %v1095
        %v1351 = vsel %vm1262, %v563, %v1099
        %v1352 = vsel %vm1262, %v567, %v1103
        %v1353 = vsel %vm1262, %v571, %v1107
        %v1354 = vsel %vm1262, %v575, %v1111
        %v1355 = vsel %vm1262, %v579, %v1115
        %v1356 = vsel %vm1262, %v583, %v1119
        %v1357 = vsel %vm1262, %v587, %v1123
        %v1358 = vsel %vm1262, %v591, %v1127
        %v1359 = vsel %vm1262, %v598, %v1134
        %v1360 = vsel %vm1262, %v602, %v1138
        %v1361 = vsel %vm1262, %v606, %v1142
        %v1362 = vsel %vm1262, %v610, %v1146
        %v1363 = vsel %vm1262, %v614, %v1150
        %v1364 = vsel %vm1262, %v618, %v1154
        %v1365 = vsel %vm1262, %v622, %v1158
        %v1366 = vsel %vm1262, %v626, %v1162
        %v1367 = vsel %vm1262, %v630, %v1166
        %v1368 = vsel %vm1262, %v634, %v1170
        %v1369 = vsel %vm1262, %v638, %v1174
        %v1370 = vsel %vm1262, %v642, %v1178
        %v1371 = vsel %vm1262, %v646, %v1182
        %v1372 = vsel %vm1262, %v650, %v1186
        %v1373 = vsel %vm1262, %v654, %v1190
        %v1374 = vsel %vm1262, %v658, %v1194
        %v1375 = vsel %vm1262, %v665, %v1201
        %v1376 = vsel %vm1262, %v669, %v1205
        %v1377 = vsel %vm1262, %v673, %v1209
        %v1378 = vsel %vm1262, %v677, %v1213
        %v1379 = vsel %vm1262, %v681, %v1217
        %v1380 = vsel %vm1262, %v685, %v1221
        %v1381 = vsel %vm1262, %v689, %v1225
        %v1382 = vsel %vm1262, %v693, %v1229
        %v1383 = vsel %vm1262, %v697, %v1233
        %v1384 = vsel %vm1262, %v701, %v1237
        %v1385 = vsel %vm1262, %v705, %v1241
        %v1386 = vsel %vm1262, %v709, %v1245
        %v1387 = vsel %vm1262, %v713, %v1249
        %v1388 = vsel %vm1262, %v717, %v1253
        %v1389 = vsel %vm1262, %v721, %v1257
        %v1390 = vsel %vm1262, %v725, %v1261
        %v1391 = vcombine.low %v1263, %v1295
        %v1392 = vcombine.high %v1263, %v1295
        %v1394 = vunpack.c.l.s4 1983009808
        %v1395 = vunpack.c.0.s8 %v1394
        %v1396 = vlaneseq
        %v1397 = vshrl.u32 %v1396, 7
        %v1398 = vsub.s32 %v1395, %v1397
        %v1399 = vrot.slane %v1391, %v1398
        %v1401 = vunpack.c.l.s4 1983009808
        %v1402 = vunpack.c.0.s8 %v1401
        %v1403 = vlaneseq
        %v1404 = vshrl.u32 %v1403, 7
        %v1405 = vsub.s32 %v1402, %v1404
        %v1406 = vrot.slane %v1392, %v1405
        %v1407 = vcombine.low %v1279, %v1311
        %v1408 = vcombine.high %v1279, %v1311
        %v1410 = vunpack.c.l.s4 1983009808
        %v1411 = vunpack.c.0.s8 %v1410
        %v1412 = vlaneseq
        %v1413 = vshrl.u32 %v1412, 7
        %v1414 = vsub.s32 %v1411, %v1413
        %v1415 = vrot.slane %v1407, %v1414
        %v1417 = vunpack.c.l.s4 1983009808
        %v1418 = vunpack.c.0.s8 %v1417
        %v1419 = vlaneseq
        %v1420 = vshrl.u32 %v1419, 7
        %v1421 = vsub.s32 %v1418, %v1420
        %v1422 = vrot.slane %v1408, %v1421
        %v1423 = vcombine.low %v1327, %v1359
        %v1424 = vcombine.high %v1327, %v1359
        %v1426 = vunpack.c.l.s4 1983009808
        %v1427 = vunpack.c.0.s8 %v1426
        %v1428 = vlaneseq
        %v1429 = vshrl.u32 %v1428, 7
        %v1430 = vsub.s32 %v1427, %v1429
        %v1431 = vrot.slane %v1423, %v1430
        %v1433 = vunpack.c.l.s4 1983009808
        %v1434 = vunpack.c.0.s8 %v1433
        %v1435 = vlaneseq
        %v1436 = vshrl.u32 %v1435, 7
        %v1437 = vsub.s32 %v1434, %v1436
        %v1438 = vrot.slane %v1424, %v1437
        %v1439 = vcombine.low %v1343, %v1375
        %v1440 = vcombine.high %v1343, %v1375
        %v1442 = vunpack.c.l.s4 1983009808
        %v1443 = vunpack.c.0.s8 %v1442
        %v1444 = vlaneseq
        %v1445 = vshrl.u32 %v1444, 7
        %v1446 = vsub.s32 %v1443, %v1445
        %v1447 = vrot.slane %v1439, %v1446
        %v1449 = vunpack.c.l.s4 1983009808
        %v1450 = vunpack.c.0.s8 %v1449
        %v1451 = vlaneseq
        %v1452 = vshrl.u32 %v1451, 7
        %v1453 = vsub.s32 %v1450, %v1452
        %v1454 = vrot.slane %v1440, %v1453
        %v1455 = vcombine.low %v1399, %v1415
        %v1456 = vcombine.high %v1399, %v1415
        %v1458 = vunpack.c.l.s4 1934713408
        %v1459 = vunpack.c.0.s8 %v1458
        %v1460 = vlaneseq
        %v1461 = vshrl.u32 %v1460, 7
        %v1462 = vsub.s32 %v1459, %v1461
        %v1463 = vrot.slane %v1455, %v1462
        %v1465 = vunpack.c.l.s4 1934713408
        %v1466 = vunpack.c.0.s8 %v1465
        %v1467 = vlaneseq
        %v1468 = vshrl.u32 %v1467, 7
        %v1469 = vsub.s32 %v1466, %v1468
        %v1470 = vrot.slane %v1456, %v1469
        %v1471 = vcombine.low %v1406, %v1422
        %v1472 = vcombine.high %v1406, %v1422
        %v1474 = vunpack.c.l.s4 1934713408
        %v1475 = vunpack.c.0.s8 %v1474
        %v1476 = vlaneseq
        %v1477 = vshrl.u32 %v1476, 7
        %v1478 = vsub.s32 %v1475, %v1477
        %v1479 = vrot.slane %v1471, %v1478
        %v1481 = vunpack.c.l.s4 1934713408
        %v1482 = vunpack.c.0.s8 %v1481
        %v1483 = vlaneseq
        %v1484 = vshrl.u32 %v1483, 7
        %v1485 = vsub.s32 %v1482, %v1484
        %v1486 = vrot.slane %v1472, %v1485
        %v1487 = vcombine.low %v1431, %v1447
        %v1488 = vcombine.high %v1431, %v1447
        %v1490 = vunpack.c.l.s4 1934713408
        %v1491 = vunpack.c.0.s8 %v1490
        %v1492 = vlaneseq
        %v1493 = vshrl.u32 %v1492, 7
        %v1494 = vsub.s32 %v1491, %v1493
        %v1495 = vrot.slane %v1487, %v1494
        %v1497 = vunpack.c.l.s4 1934713408
        %v1498 = vunpack.c.0.s8 %v1497
        %v1499 = vlaneseq
        %v1500 = vshrl.u32 %v1499, 7
        %v1501 = vsub.s32 %v1498, %v1500
        %v1502 = vrot.slane %v1488, %v1501
        %v1503 = vcombine.low %v1438, %v1454
        %v1504 = vcombine.high %v1438, %v1454
        %v1506 = vunpack.c.l.s4 1934713408
        %v1507 = vunpack.c.0.s8 %v1506
        %v1508 = vlaneseq
        %v1509 = vshrl.u32 %v1508, 7
        %v1510 = vsub.s32 %v1507, %v1509
        %v1511 = vrot.slane %v1503, %v1510
        %v1513 = vunpack.c.l.s4 1934713408
        %v1514 = vunpack.c.0.s8 %v1513
        %v1515 = vlaneseq
        %v1516 = vshrl.u32 %v1515, 7
        %v1517 = vsub.s32 %v1514, %v1516
        %v1518 = vrot.slane %v1504, %v1517
        %v1519 = vcombine.low %v1463, %v1495
        %v1520 = vcombine.high %v1463, %v1495
        %v1521 = vcombine.low %v1470, %v1502
        %v1522 = vcombine.high %v1470, %v1502
        %v1523 = vcombine.low %v1479, %v1511
        %v1524 = vcombine.high %v1479, %v1511
        %v1525 = vcombine.low %v1486, %v1518
        %v1526 = vcombine.high %v1486, %v1518
        %v1527 = vcombine.low %v1264, %v1296
        %v1528 = vcombine.high %v1264, %v1296
        %v1530 = vunpack.c.l.s4 1983009808
        %v1531 = vunpack.c.0.s8 %v1530
        %v1532 = vlaneseq
        %v1533 = vshrl.u32 %v1532, 7
        %v1534 = vsub.s32 %v1531, %v1533
        %v1535 = vrot.slane %v1527, %v1534
        %v1537 = vunpack.c.l.s4 1983009808
        %v1538 = vunpack.c.0.s8 %v1537
        %v1539 = vlaneseq
        %v1540 = vshrl.u32 %v1539, 7
        %v1541 = vsub.s32 %v1538, %v1540
        %v1542 = vrot.slane %v1528, %v1541
        %v1543 = vcombine.low %v1280, %v1312
        %v1544 = vcombine.high %v1280, %v1312
        %v1546 = vunpack.c.l.s4 1983009808
        %v1547 = vunpack.c.0.s8 %v1546
        %v1548 = vlaneseq
        %v1549 = vshrl.u32 %v1548, 7
        %v1550 = vsub.s32 %v1547, %v1549
        %v1551 = vrot.slane %v1543, %v1550
        %v1553 = vunpack.c.l.s4 1983009808
        %v1554 = vunpack.c.0.s8 %v1553
        %v1555 = vlaneseq
        %v1556 = vshrl.u32 %v1555, 7
        %v1557 = vsub.s32 %v1554, %v1556
        %v1558 = vrot.slane %v1544, %v1557
        %v1559 = vcombine.low %v1328, %v1360
        %v1560 = vcombine.high %v1328, %v1360
        %v1562 = vunpack.c.l.s4 1983009808
        %v1563 = vunpack.c.0.s8 %v1562
        %v1564 = vlaneseq
        %v1565 = vshrl.u32 %v1564, 7
        %v1566 = vsub.s32 %v1563, %v1565
        %v1567 = vrot.slane %v1559, %v1566
        %v1569 = vunpack.c.l.s4 1983009808
        %v1570 = vunpack.c.0.s8 %v1569
        %v1571 = vlaneseq
        %v1572 = vshrl.u32 %v1571, 7
        %v1573 = vsub.s32 %v1570, %v1572
        %v1574 = vrot.slane %v1560, %v1573
        %v1575 = vcombine.low %v1344, %v1376
        %v1576 = vcombine.high %v1344, %v1376
        %v1578 = vunpack.c.l.s4 1983009808
        %v1579 = vunpack.c.0.s8 %v1578
        %v1580 = vlaneseq
        %v1581 = vshrl.u32 %v1580, 7
        %v1582 = vsub.s32 %v1579, %v1581
        %v1583 = vrot.slane %v1575, %v1582
        %v1585 = vunpack.c.l.s4 1983009808
        %v1586 = vunpack.c.0.s8 %v1585
        %v1587 = vlaneseq
        %v1588 = vshrl.u32 %v1587, 7
        %v1589 = vsub.s32 %v1586, %v1588
        %v1590 = vrot.slane %v1576, %v1589
        %v1591 = vcombine.low %v1535, %v1551
        %v1592 = vcombine.high %v1535, %v1551
        %v1594 = vunpack.c.l.s4 1934713408
        %v1595 = vunpack.c.0.s8 %v1594
        %v1596 = vlaneseq
        %v1597 = vshrl.u32 %v1596, 7
        %v1598 = vsub.s32 %v1595, %v1597
        %v1599 = vrot.slane %v1591, %v1598
        %v1601 = vunpack.c.l.s4 1934713408
        %v1602 = vunpack.c.0.s8 %v1601
        %v1603 = vlaneseq
        %v1604 = vshrl.u32 %v1603, 7
        %v1605 = vsub.s32 %v1602, %v1604
        %v1606 = vrot.slane %v1592, %v1605
        %v1607 = vcombine.low %v1542, %v1558
        %v1608 = vcombine.high %v1542, %v1558
        %v1610 = vunpack.c.l.s4 1934713408
        %v1611 = vunpack.c.0.s8 %v1610
        %v1612 = vlaneseq
        %v1613 = vshrl.u32 %v1612, 7
        %v1614 = vsub.s32 %v1611, %v1613
        %v1615 = vrot.slane %v1607, %v1614
        %v1617 = vunpack.c.l.s4 1934713408
        %v1618 = vunpack.c.0.s8 %v1617
        %v1619 = vlaneseq
        %v1620 = vshrl.u32 %v1619, 7
        %v1621 = vsub.s32 %v1618, %v1620
        %v1622 = vrot.slane %v1608, %v1621
        %v1623 = vcombine.low %v1567, %v1583
        %v1624 = vcombine.high %v1567, %v1583
        %v1626 = vunpack.c.l.s4 1934713408
        %v1627 = vunpack.c.0.s8 %v1626
        %v1628 = vlaneseq
        %v1629 = vshrl.u32 %v1628, 7
        %v1630 = vsub.s32 %v1627, %v1629
        %v1631 = vrot.slane %v1623, %v1630
        %v1633 = vunpack.c.l.s4 1934713408
        %v1634 = vunpack.c.0.s8 %v1633
        %v1635 = vlaneseq
        %v1636 = vshrl.u32 %v1635, 7
        %v1637 = vsub.s32 %v1634, %v1636
        %v1638 = vrot.slane %v1624, %v1637
        %v1639 = vcombine.low %v1574, %v1590
        %v1640 = vcombine.high %v1574, %v1590
        %v1642 = vunpack.c.l.s4 1934713408
        %v1643 = vunpack.c.0.s8 %v1642
        %v1644 = vlaneseq
        %v1645 = vshrl.u32 %v1644, 7
        %v1646 = vsub.s32 %v1643, %v1645
        %v1647 = vrot.slane %v1639, %v1646
        %v1649 = vunpack.c.l.s4 1934713408
        %v1650 = vunpack.c.0.s8 %v1649
        %v1651 = vlaneseq
        %v1652 = vshrl.u32 %v1651, 7
        %v1653 = vsub.s32 %v1650, %v1652
        %v1654 = vrot.slane %v1640, %v1653
        %v1655 = vcombine.low %v1599, %v1631
        %v1656 = vcombine.high %v1599, %v1631
        %v1657 = vcombine.low %v1606, %v1638
        %v1658 = vcombine.high %v1606, %v1638
        %v1659 = vcombine.low %v1615, %v1647
        %v1660 = vcombine.high %v1615, %v1647
        %v1661 = vcombine.low %v1622, %v1654
        %v1662 = vcombine.high %v1622, %v1654
        %v1663 = vcombine.low %v1265, %v1297
        %v1664 = vcombine.high %v1265, %v1297
        %v1666 = vunpack.c.l.s4 1983009808
        %v1667 = vunpack.c.0.s8 %v1666
        %v1668 = vlaneseq
        %v1669 = vshrl.u32 %v1668, 7
        %v1670 = vsub.s32 %v1667, %v1669
        %v1671 = vrot.slane %v1663, %v1670
        %v1673 = vunpack.c.l.s4 1983009808
        %v1674 = vunpack.c.0.s8 %v1673
        %v1675 = vlaneseq
        %v1676 = vshrl.u32 %v1675, 7
        %v1677 = vsub.s32 %v1674, %v1676
        %v1678 = vrot.slane %v1664, %v1677
        %v1679 = vcombine.low %v1281, %v1313
        %v1680 = vcombine.high %v1281, %v1313
        %v1682 = vunpack.c.l.s4 1983009808
        %v1683 = vunpack.c.0.s8 %v1682
        %v1684 = vlaneseq
        %v1685 = vshrl.u32 %v1684, 7
        %v1686 = vsub.s32 %v1683, %v1685
        %v1687 = vrot.slane %v1679, %v1686
        %v1689 = vunpack.c.l.s4 1983009808
        %v1690 = vunpack.c.0.s8 %v1689
        %v1691 = vlaneseq
        %v1692 = vshrl.u32 %v1691, 7
        %v1693 = vsub.s32 %v1690, %v1692
        %v1694 = vrot.slane %v1680, %v1693
        %v1695 = vcombine.low %v1329, %v1361
        %v1696 = vcombine.high %v1329, %v1361
        %v1698 = vunpack.c.l.s4 1983009808
        %v1699 = vunpack.c.0.s8 %v1698
        %v1700 = vlaneseq
        %v1701 = vshrl.u32 %v1700, 7
        %v1702 = vsub.s32 %v1699, %v1701
        %v1703 = vrot.slane %v1695, %v1702
        %v1705 = vunpack.c.l.s4 1983009808
        %v1706 = vunpack.c.0.s8 %v1705
        %v1707 = vlaneseq
        %v1708 = vshrl.u32 %v1707, 7
        %v1709 = vsub.s32 %v1706, %v1708
        %v1710 = vrot.slane %v1696, %v1709
        %v1711 = vcombine.low %v1345, %v1377
        %v1712 = vcombine.high %v1345, %v1377
        %v1714 = vunpack.c.l.s4 1983009808
        %v1715 = vunpack.c.0.s8 %v1714
        %v1716 = vlaneseq
        %v1717 = vshrl.u32 %v1716, 7
        %v1718 = vsub.s32 %v1715, %v1717
        %v1719 = vrot.slane %v1711, %v1718
        %v1721 = vunpack.c.l.s4 1983009808
        %v1722 = vunpack.c.0.s8 %v1721
        %v1723 = vlaneseq
        %v1724 = vshrl.u32 %v1723, 7
        %v1725 = vsub.s32 %v1722, %v1724
        %v1726 = vrot.slane %v1712, %v1725
        %v1727 = vcombine.low %v1671, %v1687
        %v1728 = vcombine.high %v1671, %v1687
        %v1730 = vunpack.c.l.s4 1934713408
        %v1731 = vunpack.c.0.s8 %v1730
        %v1732 = vlaneseq
        %v1733 = vshrl.u32 %v1732, 7
        %v1734 = vsub.s32 %v1731, %v1733
        %v1735 = vrot.slane %v1727, %v1734
        %v1737 = vunpack.c.l.s4 1934713408
        %v1738 = vunpack.c.0.s8 %v1737
        %v1739 = vlaneseq
        %v1740 = vshrl.u32 %v1739, 7
        %v1741 = vsub.s32 %v1738, %v1740
        %v1742 = vrot.slane %v1728, %v1741
        %v1743 = vcombine.low %v1678, %v1694
        %v1744 = vcombine.high %v1678, %v1694
        %v1746 = vunpack.c.l.s4 1934713408
        %v1747 = vunpack.c.0.s8 %v1746
        %v1748 = vlaneseq
        %v1749 = vshrl.u32 %v1748, 7
        %v1750 = vsub.s32 %v1747, %v1749
        %v1751 = vrot.slane %v1743, %v1750
        %v1753 = vunpack.c.l.s4 1934713408
        %v1754 = vunpack.c.0.s8 %v1753
        %v1755 = vlaneseq
        %v1756 = vshrl.u32 %v1755, 7
        %v1757 = vsub.s32 %v1754, %v1756
        %v1758 = vrot.slane %v1744, %v1757
        %v1759 = vcombine.low %v1703, %v1719
        %v1760 = vcombine.high %v1703, %v1719
        %v1762 = vunpack.c.l.s4 1934713408
        %v1763 = vunpack.c.0.s8 %v1762
        %v1764 = vlaneseq
        %v1765 = vshrl.u32 %v1764, 7
        %v1766 = vsub.s32 %v1763, %v1765
        %v1767 = vrot.slane %v1759, %v1766
        %v1769 = vunpack.c.l.s4 1934713408
        %v1770 = vunpack.c.0.s8 %v1769
        %v1771 = vlaneseq
        %v1772 = vshrl.u32 %v1771, 7
        %v1773 = vsub.s32 %v1770, %v1772
        %v1774 = vrot.slane %v1760, %v1773
        %v1775 = vcombine.low %v1710, %v1726
        %v1776 = vcombine.high %v1710, %v1726
        %v1778 = vunpack.c.l.s4 1934713408
        %v1779 = vunpack.c.0.s8 %v1778
        %v1780 = vlaneseq
        %v1781 = vshrl.u32 %v1780, 7
        %v1782 = vsub.s32 %v1779, %v1781
        %v1783 = vrot.slane %v1775, %v1782
        %v1785 = vunpack.c.l.s4 1934713408
        %v1786 = vunpack.c.0.s8 %v1785
        %v1787 = vlaneseq
        %v1788 = vshrl.u32 %v1787, 7
        %v1789 = vsub.s32 %v1786, %v1788
        %v1790 = vrot.slane %v1776, %v1789
        %v1791 = vcombine.low %v1735, %v1767
        %v1792 = vcombine.high %v1735, %v1767
        %v1793 = vcombine.low %v1742, %v1774
        %v1794 = vcombine.high %v1742, %v1774
        %v1795 = vcombine.low %v1751, %v1783
        %v1796 = vcombine.high %v1751, %v1783
        %v1797 = vcombine.low %v1758, %v1790
        %v1798 = vcombine.high %v1758, %v1790
        %v1799 = vcombine.low %v1266, %v1298
        %v1800 = vcombine.high %v1266, %v1298
        %v1802 = vunpack.c.l.s4 1983009808
        %v1803 = vunpack.c.0.s8 %v1802
        %v1804 = vlaneseq
        %v1805 = vshrl.u32 %v1804, 7
        %v1806 = vsub.s32 %v1803, %v1805
        %v1807 = vrot.slane %v1799, %v1806
        %v1809 = vunpack.c.l.s4 1983009808
        %v1810 = vunpack.c.0.s8 %v1809
        %v1811 = vlaneseq
        %v1812 = vshrl.u32 %v1811, 7
        %v1813 = vsub.s32 %v1810, %v1812
        %v1814 = vrot.slane %v1800, %v1813
        %v1815 = vcombine.low %v1282, %v1314
        %v1816 = vcombine.high %v1282, %v1314
        %v1818 = vunpack.c.l.s4 1983009808
        %v1819 = vunpack.c.0.s8 %v1818
        %v1820 = vlaneseq
        %v1821 = vshrl.u32 %v1820, 7
        %v1822 = vsub.s32 %v1819, %v1821
        %v1823 = vrot.slane %v1815, %v1822
        %v1825 = vunpack.c.l.s4 1983009808
        %v1826 = vunpack.c.0.s8 %v1825
        %v1827 = vlaneseq
        %v1828 = vshrl.u32 %v1827, 7
        %v1829 = vsub.s32 %v1826, %v1828
        %v1830 = vrot.slane %v1816, %v1829
        %v1831 = vcombine.low %v1330, %v1362
        %v1832 = vcombine.high %v1330, %v1362
        %v1834 = vunpack.c.l.s4 1983009808
        %v1835 = vunpack.c.0.s8 %v1834
        %v1836 = vlaneseq
        %v1837 = vshrl.u32 %v1836, 7
        %v1838 = vsub.s32 %v1835, %v1837
        %v1839 = vrot.slane %v1831, %v1838
        %v1841 = vunpack.c.l.s4 1983009808
        %v1842 = vunpack.c.0.s8 %v1841
        %v1843 = vlaneseq
        %v1844 = vshrl.u32 %v1843, 7
        %v1845 = vsub.s32 %v1842, %v1844
        %v1846 = vrot.slane %v1832, %v1845
        %v1847 = vcombine.low %v1346, %v1378
        %v1848 = vcombine.high %v1346, %v1378
        %v1850 = vunpack.c.l.s4 1983009808
        %v1851 = vunpack.c.0.s8 %v1850
        %v1852 = vlaneseq
        %v1853 = vshrl.u32 %v1852, 7
        %v1854 = vsub.s32 %v1851, %v1853
        %v1855 = vrot.slane %v1847, %v1854
        %v1857 = vunpack.c.l.s4 1983009808
        %v1858 = vunpack.c.0.s8 %v1857
        %v1859 = vlaneseq
        %v1860 = vshrl.u32 %v1859, 7
        %v1861 = vsub.s32 %v1858, %v1860
        %v1862 = vrot.slane %v1848, %v1861
        %v1863 = vcombine.low %v1807, %v1823
        %v1864 = vcombine.high %v1807, %v1823
        %v1866 = vunpack.c.l.s4 1934713408
        %v1867 = vunpack.c.0.s8 %v1866
        %v1868 = vlaneseq
        %v1869 = vshrl.u32 %v1868, 7
        %v1870 = vsub.s32 %v1867, %v1869
        %v1871 = vrot.slane %v1863, %v1870
        %v1873 = vunpack.c.l.s4 1934713408
        %v1874 = vunpack.c.0.s8 %v1873
        %v1875 = vlaneseq
        %v1876 = vshrl.u32 %v1875, 7
        %v1877 = vsub.s32 %v1874, %v1876
        %v1878 = vrot.slane %v1864, %v1877
        %v1879 = vcombine.low %v1814, %v1830
        %v1880 = vcombine.high %v1814, %v1830
        %v1882 = vunpack.c.l.s4 1934713408
        %v1883 = vunpack.c.0.s8 %v1882
        %v1884 = vlaneseq
        %v1885 = vshrl.u32 %v1884, 7
        %v1886 = vsub.s32 %v1883, %v1885
        %v1887 = vrot.slane %v1879, %v1886
        %v1889 = vunpack.c.l.s4 1934713408
        %v1890 = vunpack.c.0.s8 %v1889
        %v1891 = vlaneseq
        %v1892 = vshrl.u32 %v1891, 7
        %v1893 = vsub.s32 %v1890, %v1892
        %v1894 = vrot.slane %v1880, %v1893
        %v1895 = vcombine.low %v1839, %v1855
        %v1896 = vcombine.high %v1839, %v1855
        %v1898 = vunpack.c.l.s4 1934713408
        %v1899 = vunpack.c.0.s8 %v1898
        %v1900 = vlaneseq
        %v1901 = vshrl.u32 %v1900, 7
        %v1902 = vsub.s32 %v1899, %v1901
        %v1903 = vrot.slane %v1895, %v1902
        %v1905 = vunpack.c.l.s4 1934713408
        %v1906 = vunpack.c.0.s8 %v1905
        %v1907 = vlaneseq
        %v1908 = vshrl.u32 %v1907, 7
        %v1909 = vsub.s32 %v1906, %v1908
        %v1910 = vrot.slane %v1896, %v1909
        %v1911 = vcombine.low %v1846, %v1862
        %v1912 = vcombine.high %v1846, %v1862
        %v1914 = vunpack.c.l.s4 1934713408
        %v1915 = vunpack.c.0.s8 %v1914
        %v1916 = vlaneseq
        %v1917 = vshrl.u32 %v1916, 7
        %v1918 = vsub.s32 %v1915, %v1917
        %v1919 = vrot.slane %v1911, %v1918
        %v1921 = vunpack.c.l.s4 1934713408
        %v1922 = vunpack.c.0.s8 %v1921
        %v1923 = vlaneseq
        %v1924 = vshrl.u32 %v1923, 7
        %v1925 = vsub.s32 %v1922, %v1924
        %v1926 = vrot.slane %v1912, %v1925
        %v1927 = vcombine.low %v1871, %v1903
        %v1928 = vcombine.high %v1871, %v1903
        %v1929 = vcombine.low %v1878, %v1910
        %v1930 = vcombine.high %v1878, %v1910
        %v1931 = vcombine.low %v1887, %v1919
        %v1932 = vcombine.high %v1887, %v1919
        %v1933 = vcombine.low %v1894, %v1926
        %v1934 = vcombine.high %v1894, %v1926
        %v1935 = vcombine.low %v1267, %v1299
        %v1936 = vcombine.high %v1267, %v1299
        %v1938 = vunpack.c.l.s4 1983009808
        %v1939 = vunpack.c.0.s8 %v1938
        %v1940 = vlaneseq
        %v1941 = vshrl.u32 %v1940, 7
        %v1942 = vsub.s32 %v1939, %v1941
        %v1943 = vrot.slane %v1935, %v1942
        %v1945 = vunpack.c.l.s4 1983009808
        %v1946 = vunpack.c.0.s8 %v1945
        %v1947 = vlaneseq
        %v1948 = vshrl.u32 %v1947, 7
        %v1949 = vsub.s32 %v1946, %v1948
        %v1950 = vrot.slane %v1936, %v1949
        %v1951 = vcombine.low %v1283, %v1315
        %v1952 = vcombine.high %v1283, %v1315
        %v1954 = vunpack.c.l.s4 1983009808
        %v1955 = vunpack.c.0.s8 %v1954
        %v1956 = vlaneseq
        %v1957 = vshrl.u32 %v1956, 7
        %v1958 = vsub.s32 %v1955, %v1957
        %v1959 = vrot.slane %v1951, %v1958
        %v1961 = vunpack.c.l.s4 1983009808
        %v1962 = vunpack.c.0.s8 %v1961
        %v1963 = vlaneseq
        %v1964 = vshrl.u32 %v1963, 7
        %v1965 = vsub.s32 %v1962, %v1964
        %v1966 = vrot.slane %v1952, %v1965
        %v1967 = vcombine.low %v1331, %v1363
        %v1968 = vcombine.high %v1331, %v1363
        %v1970 = vunpack.c.l.s4 1983009808
        %v1971 = vunpack.c.0.s8 %v1970
        %v1972 = vlaneseq
        %v1973 = vshrl.u32 %v1972, 7
        %v1974 = vsub.s32 %v1971, %v1973
        %v1975 = vrot.slane %v1967, %v1974
        %v1977 = vunpack.c.l.s4 1983009808
        %v1978 = vunpack.c.0.s8 %v1977
        %v1979 = vlaneseq
        %v1980 = vshrl.u32 %v1979, 7
        %v1981 = vsub.s32 %v1978, %v1980
        %v1982 = vrot.slane %v1968, %v1981
        %v1983 = vcombine.low %v1347, %v1379
        %v1984 = vcombine.high %v1347, %v1379
        %v1986 = vunpack.c.l.s4 1983009808
        %v1987 = vunpack.c.0.s8 %v1986
        %v1988 = vlaneseq
        %v1989 = vshrl.u32 %v1988, 7
        %v1990 = vsub.s32 %v1987, %v1989
        %v1991 = vrot.slane %v1983, %v1990
        %v1993 = vunpack.c.l.s4 1983009808
        %v1994 = vunpack.c.0.s8 %v1993
        %v1995 = vlaneseq
        %v1996 = vshrl.u32 %v1995, 7
        %v1997 = vsub.s32 %v1994, %v1996
        %v1998 = vrot.slane %v1984, %v1997
        %v1999 = vcombine.low %v1943, %v1959
        %v2000 = vcombine.high %v1943, %v1959
        %v2002 = vunpack.c.l.s4 1934713408
        %v2003 = vunpack.c.0.s8 %v2002
        %v2004 = vlaneseq
        %v2005 = vshrl.u32 %v2004, 7
        %v2006 = vsub.s32 %v2003, %v2005
        %v2007 = vrot.slane %v1999, %v2006
        %v2009 = vunpack.c.l.s4 1934713408
        %v2010 = vunpack.c.0.s8 %v2009
        %v2011 = vlaneseq
        %v2012 = vshrl.u32 %v2011, 7
        %v2013 = vsub.s32 %v2010, %v2012
        %v2014 = vrot.slane %v2000, %v2013
        %v2015 = vcombine.low %v1950, %v1966
        %v2016 = vcombine.high %v1950, %v1966
        %v2018 = vunpack.c.l.s4 1934713408
        %v2019 = vunpack.c.0.s8 %v2018
        %v2020 = vlaneseq
        %v2021 = vshrl.u32 %v2020, 7
        %v2022 = vsub.s32 %v2019, %v2021
        %v2023 = vrot.slane %v2015, %v2022
        %v2025 = vunpack.c.l.s4 1934713408
        %v2026 = vunpack.c.0.s8 %v2025
        %v2027 = vlaneseq
        %v2028 = vshrl.u32 %v2027, 7
        %v2029 = vsub.s32 %v2026, %v2028
        %v2030 = vrot.slane %v2016, %v2029
        %v2031 = vcombine.low %v1975, %v1991
        %v2032 = vcombine.high %v1975, %v1991
        %v2034 = vunpack.c.l.s4 1934713408
        %v2035 = vunpack.c.0.s8 %v2034
        %v2036 = vlaneseq
        %v2037 = vshrl.u32 %v2036, 7
        %v2038 = vsub.s32 %v2035, %v2037
        %v2039 = vrot.slane %v2031, %v2038
        %v2041 = vunpack.c.l.s4 1934713408
        %v2042 = vunpack.c.0.s8 %v2041
        %v2043 = vlaneseq
        %v2044 = vshrl.u32 %v2043, 7
        %v2045 = vsub.s32 %v2042, %v2044
        %v2046 = vrot.slane %v2032, %v2045
        %v2047 = vcombine.low %v1982, %v1998
        %v2048 = vcombine.high %v1982, %v1998
        %v2050 = vunpack.c.l.s4 1934713408
        %v2051 = vunpack.c.0.s8 %v2050
        %v2052 = vlaneseq
        %v2053 = vshrl.u32 %v2052, 7
        %v2054 = vsub.s32 %v2051, %v2053
        %v2055 = vrot.slane %v2047, %v2054
        %v2057 = vunpack.c.l.s4 1934713408
        %v2058 = vunpack.c.0.s8 %v2057
        %v2059 = vlaneseq
        %v2060 = vshrl.u32 %v2059, 7
        %v2061 = vsub.s32 %v2058, %v2060
        %v2062 = vrot.slane %v2048, %v2061
        %v2063 = vcombine.low %v2007, %v2039
        %v2064 = vcombine.high %v2007, %v2039
        %v2065 = vcombine.low %v2014, %v2046
        %v2066 = vcombine.high %v2014, %v2046
        %v2067 = vcombine.low %v2023, %v2055
        %v2068 = vcombine.high %v2023, %v2055
        %v2069 = vcombine.low %v2030, %v2062
        %v2070 = vcombine.high %v2030, %v2062
        %v2071 = vcombine.low %v1268, %v1300
        %v2072 = vcombine.high %v1268, %v1300
        %v2074 = vunpack.c.l.s4 1983009808
        %v2075 = vunpack.c.0.s8 %v2074
        %v2076 = vlaneseq
        %v2077 = vshrl.u32 %v2076, 7
        %v2078 = vsub.s32 %v2075, %v2077
        %v2079 = vrot.slane %v2071, %v2078
        %v2081 = vunpack.c.l.s4 1983009808
        %v2082 = vunpack.c.0.s8 %v2081
        %v2083 = vlaneseq
        %v2084 = vshrl.u32 %v2083, 7
        %v2085 = vsub.s32 %v2082, %v2084
        %v2086 = vrot.slane %v2072, %v2085
        %v2087 = vcombine.low %v1284, %v1316
        %v2088 = vcombine.high %v1284, %v1316
        %v2090 = vunpack.c.l.s4 1983009808
        %v2091 = vunpack.c.0.s8 %v2090
        %v2092 = vlaneseq
        %v2093 = vshrl.u32 %v2092, 7
        %v2094 = vsub.s32 %v2091, %v2093
        %v2095 = vrot.slane %v2087, %v2094
        %v2097 = vunpack.c.l.s4 1983009808
        %v2098 = vunpack.c.0.s8 %v2097
        %v2099 = vlaneseq
        %v2100 = vshrl.u32 %v2099, 7
        %v2101 = vsub.s32 %v2098, %v2100
        %v2102 = vrot.slane %v2088, %v2101
        %v2103 = vcombine.low %v1332, %v1364
        %v2104 = vcombine.high %v1332, %v1364
        %v2106 = vunpack.c.l.s4 1983009808
        %v2107 = vunpack.c.0.s8 %v2106
        %v2108 = vlaneseq
        %v2109 = vshrl.u32 %v2108, 7
        %v2110 = vsub.s32 %v2107, %v2109
        %v2111 = vrot.slane %v2103, %v2110
        %v2113 = vunpack.c.l.s4 1983009808
        %v2114 = vunpack.c.0.s8 %v2113
        %v2115 = vlaneseq
        %v2116 = vshrl.u32 %v2115, 7
        %v2117 = vsub.s32 %v2114, %v2116
        %v2118 = vrot.slane %v2104, %v2117
        %v2119 = vcombine.low %v1348, %v1380
        %v2120 = vcombine.high %v1348, %v1380
        %v2122 = vunpack.c.l.s4 1983009808
        %v2123 = vunpack.c.0.s8 %v2122
        %v2124 = vlaneseq
        %v2125 = vshrl.u32 %v2124, 7
        %v2126 = vsub.s32 %v2123, %v2125
        %v2127 = vrot.slane %v2119, %v2126
        %v2129 = vunpack.c.l.s4 1983009808
        %v2130 = vunpack.c.0.s8 %v2129
        %v2131 = vlaneseq
        %v2132 = vshrl.u32 %v2131, 7
        %v2133 = vsub.s32 %v2130, %v2132
        %v2134 = vrot.slane %v2120, %v2133
        %v2135 = vcombine.low %v2079, %v2095
        %v2136 = vcombine.high %v2079, %v2095
        %v2138 = vunpack.c.l.s4 1934713408
        %v2139 = vunpack.c.0.s8 %v2138
        %v2140 = vlaneseq
        %v2141 = vshrl.u32 %v2140, 7
        %v2142 = vsub.s32 %v2139, %v2141
        %v2143 = vrot.slane %v2135, %v2142
        %v2145 = vunpack.c.l.s4 1934713408
        %v2146 = vunpack.c.0.s8 %v2145
        %v2147 = vlaneseq
        %v2148 = vshrl.u32 %v2147, 7
        %v2149 = vsub.s32 %v2146, %v2148
        %v2150 = vrot.slane %v2136, %v2149
        %v2151 = vcombine.low %v2086, %v2102
        %v2152 = vcombine.high %v2086, %v2102
        %v2154 = vunpack.c.l.s4 1934713408
        %v2155 = vunpack.c.0.s8 %v2154
        %v2156 = vlaneseq
        %v2157 = vshrl.u32 %v2156, 7
        %v2158 = vsub.s32 %v2155, %v2157
        %v2159 = vrot.slane %v2151, %v2158
        %v2161 = vunpack.c.l.s4 1934713408
        %v2162 = vunpack.c.0.s8 %v2161
        %v2163 = vlaneseq
        %v2164 = vshrl.u32 %v2163, 7
        %v2165 = vsub.s32 %v2162, %v2164
        %v2166 = vrot.slane %v2152, %v2165
        %v2167 = vcombine.low %v2111, %v2127
        %v2168 = vcombine.high %v2111, %v2127
        %v2170 = vunpack.c.l.s4 1934713408
        %v2171 = vunpack.c.0.s8 %v2170
        %v2172 = vlaneseq
        %v2173 = vshrl.u32 %v2172, 7
        %v2174 = vsub.s32 %v2171, %v2173
        %v2175 = vrot.slane %v2167, %v2174
        %v2177 = vunpack.c.l.s4 1934713408
        %v2178 = vunpack.c.0.s8 %v2177
        %v2179 = vlaneseq
        %v2180 = vshrl.u32 %v2179, 7
        %v2181 = vsub.s32 %v2178, %v2180
        %v2182 = vrot.slane %v2168, %v2181
        %v2183 = vcombine.low %v2118, %v2134
        %v2184 = vcombine.high %v2118, %v2134
        %v2186 = vunpack.c.l.s4 1934713408
        %v2187 = vunpack.c.0.s8 %v2186
        %v2188 = vlaneseq
        %v2189 = vshrl.u32 %v2188, 7
        %v2190 = vsub.s32 %v2187, %v2189
        %v2191 = vrot.slane %v2183, %v2190
        %v2193 = vunpack.c.l.s4 1934713408
        %v2194 = vunpack.c.0.s8 %v2193
        %v2195 = vlaneseq
        %v2196 = vshrl.u32 %v2195, 7
        %v2197 = vsub.s32 %v2194, %v2196
        %v2198 = vrot.slane %v2184, %v2197
        %v2199 = vcombine.low %v2143, %v2175
        %v2200 = vcombine.high %v2143, %v2175
        %v2201 = vcombine.low %v2150, %v2182
        %v2202 = vcombine.high %v2150, %v2182
        %v2203 = vcombine.low %v2159, %v2191
        %v2204 = vcombine.high %v2159, %v2191
        %v2205 = vcombine.low %v2166, %v2198
        %v2206 = vcombine.high %v2166, %v2198
        %v2207 = vcombine.low %v1269, %v1301
        %v2208 = vcombine.high %v1269, %v1301
        %v2210 = vunpack.c.l.s4 1983009808
        %v2211 = vunpack.c.0.s8 %v2210
        %v2212 = vlaneseq
        %v2213 = vshrl.u32 %v2212, 7
        %v2214 = vsub.s32 %v2211, %v2213
        %v2215 = vrot.slane %v2207, %v2214
        %v2217 = vunpack.c.l.s4 1983009808
        %v2218 = vunpack.c.0.s8 %v2217
        %v2219 = vlaneseq
        %v2220 = vshrl.u32 %v2219, 7
        %v2221 = vsub.s32 %v2218, %v2220
        %v2222 = vrot.slane %v2208, %v2221
        %v2223 = vcombine.low %v1285, %v1317
        %v2224 = vcombine.high %v1285, %v1317
        %v2226 = vunpack.c.l.s4 1983009808
        %v2227 = vunpack.c.0.s8 %v2226
        %v2228 = vlaneseq
        %v2229 = vshrl.u32 %v2228, 7
        %v2230 = vsub.s32 %v2227, %v2229
        %v2231 = vrot.slane %v2223, %v2230
        %v2233 = vunpack.c.l.s4 1983009808
        %v2234 = vunpack.c.0.s8 %v2233
        %v2235 = vlaneseq
        %v2236 = vshrl.u32 %v2235, 7
        %v2237 = vsub.s32 %v2234, %v2236
        %v2238 = vrot.slane %v2224, %v2237
        %v2239 = vcombine.low %v1333, %v1365
        %v2240 = vcombine.high %v1333, %v1365
        %v2242 = vunpack.c.l.s4 1983009808
        %v2243 = vunpack.c.0.s8 %v2242
        %v2244 = vlaneseq
        %v2245 = vshrl.u32 %v2244, 7
        %v2246 = vsub.s32 %v2243, %v2245
        %v2247 = vrot.slane %v2239, %v2246
        %v2249 = vunpack.c.l.s4 1983009808
        %v2250 = vunpack.c.0.s8 %v2249
        %v2251 = vlaneseq
        %v2252 = vshrl.u32 %v2251, 7
        %v2253 = vsub.s32 %v2250, %v2252
        %v2254 = vrot.slane %v2240, %v2253
        %v2255 = vcombine.low %v1349, %v1381
        %v2256 = vcombine.high %v1349, %v1381
        %v2258 = vunpack.c.l.s4 1983009808
        %v2259 = vunpack.c.0.s8 %v2258
        %v2260 = vlaneseq
        %v2261 = vshrl.u32 %v2260, 7
        %v2262 = vsub.s32 %v2259, %v2261
        %v2263 = vrot.slane %v2255, %v2262
        %v2265 = vunpack.c.l.s4 1983009808
        %v2266 = vunpack.c.0.s8 %v2265
        %v2267 = vlaneseq
        %v2268 = vshrl.u32 %v2267, 7
        %v2269 = vsub.s32 %v2266, %v2268
        %v2270 = vrot.slane %v2256, %v2269
        %v2271 = vcombine.low %v2215, %v2231
        %v2272 = vcombine.high %v2215, %v2231
        %v2274 = vunpack.c.l.s4 1934713408
        %v2275 = vunpack.c.0.s8 %v2274
        %v2276 = vlaneseq
        %v2277 = vshrl.u32 %v2276, 7
        %v2278 = vsub.s32 %v2275, %v2277
        %v2279 = vrot.slane %v2271, %v2278
        %v2281 = vunpack.c.l.s4 1934713408
        %v2282 = vunpack.c.0.s8 %v2281
        %v2283 = vlaneseq
        %v2284 = vshrl.u32 %v2283, 7
        %v2285 = vsub.s32 %v2282, %v2284
        %v2286 = vrot.slane %v2272, %v2285
        %v2287 = vcombine.low %v2222, %v2238
        %v2288 = vcombine.high %v2222, %v2238
        %v2290 = vunpack.c.l.s4 1934713408
        %v2291 = vunpack.c.0.s8 %v2290
        %v2292 = vlaneseq
        %v2293 = vshrl.u32 %v2292, 7
        %v2294 = vsub.s32 %v2291, %v2293
        %v2295 = vrot.slane %v2287, %v2294
        %v2297 = vunpack.c.l.s4 1934713408
        %v2298 = vunpack.c.0.s8 %v2297
        %v2299 = vlaneseq
        %v2300 = vshrl.u32 %v2299, 7
        %v2301 = vsub.s32 %v2298, %v2300
        %v2302 = vrot.slane %v2288, %v2301
        %v2303 = vcombine.low %v2247, %v2263
        %v2304 = vcombine.high %v2247, %v2263
        %v2306 = vunpack.c.l.s4 1934713408
        %v2307 = vunpack.c.0.s8 %v2306
        %v2308 = vlaneseq
        %v2309 = vshrl.u32 %v2308, 7
        %v2310 = vsub.s32 %v2307, %v2309
        %v2311 = vrot.slane %v2303, %v2310
        %v2313 = vunpack.c.l.s4 1934713408
        %v2314 = vunpack.c.0.s8 %v2313
        %v2315 = vlaneseq
        %v2316 = vshrl.u32 %v2315, 7
        %v2317 = vsub.s32 %v2314, %v2316
        %v2318 = vrot.slane %v2304, %v2317
        %v2319 = vcombine.low %v2254, %v2270
        %v2320 = vcombine.high %v2254, %v2270
        %v2322 = vunpack.c.l.s4 1934713408
        %v2323 = vunpack.c.0.s8 %v2322
        %v2324 = vlaneseq
        %v2325 = vshrl.u32 %v2324, 7
        %v2326 = vsub.s32 %v2323, %v2325
        %v2327 = vrot.slane %v2319, %v2326
        %v2329 = vunpack.c.l.s4 1934713408
        %v2330 = vunpack.c.0.s8 %v2329
        %v2331 = vlaneseq
        %v2332 = vshrl.u32 %v2331, 7
        %v2333 = vsub.s32 %v2330, %v2332
        %v2334 = vrot.slane %v2320, %v2333
        %v2335 = vcombine.low %v2279, %v2311
        %v2336 = vcombine.high %v2279, %v2311
        %v2337 = vcombine.low %v2286, %v2318
        %v2338 = vcombine.high %v2286, %v2318
        %v2339 = vcombine.low %v2295, %v2327
        %v2340 = vcombine.high %v2295, %v2327
        %v2341 = vcombine.low %v2302, %v2334
        %v2342 = vcombine.high %v2302, %v2334
        %v2343 = vcombine.low %v1270, %v1302
        %v2344 = vcombine.high %v1270, %v1302
        %v2346 = vunpack.c.l.s4 1983009808
        %v2347 = vunpack.c.0.s8 %v2346
        %v2348 = vlaneseq
        %v2349 = vshrl.u32 %v2348, 7
        %v2350 = vsub.s32 %v2347, %v2349
        %v2351 = vrot.slane %v2343, %v2350
        %v2353 = vunpack.c.l.s4 1983009808
        %v2354 = vunpack.c.0.s8 %v2353
        %v2355 = vlaneseq
        %v2356 = vshrl.u32 %v2355, 7
        %v2357 = vsub.s32 %v2354, %v2356
        %v2358 = vrot.slane %v2344, %v2357
        %v2359 = vcombine.low %v1286, %v1318
        %v2360 = vcombine.high %v1286, %v1318
        %v2362 = vunpack.c.l.s4 1983009808
        %v2363 = vunpack.c.0.s8 %v2362
        %v2364 = vlaneseq
        %v2365 = vshrl.u32 %v2364, 7
        %v2366 = vsub.s32 %v2363, %v2365
        %v2367 = vrot.slane %v2359, %v2366
        %v2369 = vunpack.c.l.s4 1983009808
        %v2370 = vunpack.c.0.s8 %v2369
        %v2371 = vlaneseq
        %v2372 = vshrl.u32 %v2371, 7
        %v2373 = vsub.s32 %v2370, %v2372
        %v2374 = vrot.slane %v2360, %v2373
        %v2375 = vcombine.low %v1334, %v1366
        %v2376 = vcombine.high %v1334, %v1366
        %v2378 = vunpack.c.l.s4 1983009808
        %v2379 = vunpack.c.0.s8 %v2378
        %v2380 = vlaneseq
        %v2381 = vshrl.u32 %v2380, 7
        %v2382 = vsub.s32 %v2379, %v2381
        %v2383 = vrot.slane %v2375, %v2382
        %v2385 = vunpack.c.l.s4 1983009808
        %v2386 = vunpack.c.0.s8 %v2385
        %v2387 = vlaneseq
        %v2388 = vshrl.u32 %v2387, 7
        %v2389 = vsub.s32 %v2386, %v2388
        %v2390 = vrot.slane %v2376, %v2389
        %v2391 = vcombine.low %v1350, %v1382
        %v2392 = vcombine.high %v1350, %v1382
        %v2394 = vunpack.c.l.s4 1983009808
        %v2395 = vunpack.c.0.s8 %v2394
        %v2396 = vlaneseq
        %v2397 = vshrl.u32 %v2396, 7
        %v2398 = vsub.s32 %v2395, %v2397
        %v2399 = vrot.slane %v2391, %v2398
        %v2401 = vunpack.c.l.s4 1983009808
        %v2402 = vunpack.c.0.s8 %v2401
        %v2403 = vlaneseq
        %v2404 = vshrl.u32 %v2403, 7
        %v2405 = vsub.s32 %v2402, %v2404
        %v2406 = vrot.slane %v2392, %v2405
        %v2407 = vcombine.low %v2351, %v2367
        %v2408 = vcombine.high %v2351, %v2367
        %v2410 = vunpack.c.l.s4 1934713408
        %v2411 = vunpack.c.0.s8 %v2410
        %v2412 = vlaneseq
        %v2413 = vshrl.u32 %v2412, 7
        %v2414 = vsub.s32 %v2411, %v2413
        %v2415 = vrot.slane %v2407, %v2414
        %v2417 = vunpack.c.l.s4 1934713408
        %v2418 = vunpack.c.0.s8 %v2417
        %v2419 = vlaneseq
        %v2420 = vshrl.u32 %v2419, 7
        %v2421 = vsub.s32 %v2418, %v2420
        %v2422 = vrot.slane %v2408, %v2421
        %v2423 = vcombine.low %v2358, %v2374
        %v2424 = vcombine.high %v2358, %v2374
        %v2426 = vunpack.c.l.s4 1934713408
        %v2427 = vunpack.c.0.s8 %v2426
        %v2428 = vlaneseq
        %v2429 = vshrl.u32 %v2428, 7
        %v2430 = vsub.s32 %v2427, %v2429
        %v2431 = vrot.slane %v2423, %v2430
        %v2433 = vunpack.c.l.s4 1934713408
        %v2434 = vunpack.c.0.s8 %v2433
        %v2435 = vlaneseq
        %v2436 = vshrl.u32 %v2435, 7
        %v2437 = vsub.s32 %v2434, %v2436
        %v2438 = vrot.slane %v2424, %v2437
        %v2439 = vcombine.low %v2383, %v2399
        %v2440 = vcombine.high %v2383, %v2399
        %v2442 = vunpack.c.l.s4 1934713408
        %v2443 = vunpack.c.0.s8 %v2442
        %v2444 = vlaneseq
        %v2445 = vshrl.u32 %v2444, 7
        %v2446 = vsub.s32 %v2443, %v2445
        %v2447 = vrot.slane %v2439, %v2446
        %v2449 = vunpack.c.l.s4 1934713408
        %v2450 = vunpack.c.0.s8 %v2449
        %v2451 = vlaneseq
        %v2452 = vshrl.u32 %v2451, 7
        %v2453 = vsub.s32 %v2450, %v2452
        %v2454 = vrot.slane %v2440, %v2453
        %v2455 = vcombine.low %v2390, %v2406
        %v2456 = vcombine.high %v2390, %v2406
        %v2458 = vunpack.c.l.s4 1934713408
        %v2459 = vunpack.c.0.s8 %v2458
        %v2460 = vlaneseq
        %v2461 = vshrl.u32 %v2460, 7
        %v2462 = vsub.s32 %v2459, %v2461
        %v2463 = vrot.slane %v2455, %v2462
        %v2465 = vunpack.c.l.s4 1934713408
        %v2466 = vunpack.c.0.s8 %v2465
        %v2467 = vlaneseq
        %v2468 = vshrl.u32 %v2467, 7
        %v2469 = vsub.s32 %v2466, %v2468
        %v2470 = vrot.slane %v2456, %v2469
        %v2471 = vcombine.low %v2415, %v2447
        %v2472 = vcombine.high %v2415, %v2447
        %v2473 = vcombine.low %v2422, %v2454
        %v2474 = vcombine.high %v2422, %v2454
        %v2475 = vcombine.low %v2431, %v2463
        %v2476 = vcombine.high %v2431, %v2463
        %v2477 = vcombine.low %v2438, %v2470
        %v2478 = vcombine.high %v2438, %v2470
        %v2479 = vcombine.low %v1271, %v1303
        %v2480 = vcombine.high %v1271, %v1303
        %v2482 = vunpack.c.l.s4 1983009808
        %v2483 = vunpack.c.0.s8 %v2482
        %v2484 = vlaneseq
        %v2485 = vshrl.u32 %v2484, 7
        %v2486 = vsub.s32 %v2483, %v2485
        %v2487 = vrot.slane %v2479, %v2486
        %v2489 = vunpack.c.l.s4 1983009808
        %v2490 = vunpack.c.0.s8 %v2489
        %v2491 = vlaneseq
        %v2492 = vshrl.u32 %v2491, 7
        %v2493 = vsub.s32 %v2490, %v2492
        %v2494 = vrot.slane %v2480, %v2493
        %v2495 = vcombine.low %v1287, %v1319
        %v2496 = vcombine.high %v1287, %v1319
        %v2498 = vunpack.c.l.s4 1983009808
        %v2499 = vunpack.c.0.s8 %v2498
        %v2500 = vlaneseq
        %v2501 = vshrl.u32 %v2500, 7
        %v2502 = vsub.s32 %v2499, %v2501
        %v2503 = vrot.slane %v2495, %v2502
        %v2505 = vunpack.c.l.s4 1983009808
        %v2506 = vunpack.c.0.s8 %v2505
        %v2507 = vlaneseq
        %v2508 = vshrl.u32 %v2507, 7
        %v2509 = vsub.s32 %v2506, %v2508
        %v2510 = vrot.slane %v2496, %v2509
        %v2511 = vcombine.low %v1335, %v1367
        %v2512 = vcombine.high %v1335, %v1367
        %v2514 = vunpack.c.l.s4 1983009808
        %v2515 = vunpack.c.0.s8 %v2514
        %v2516 = vlaneseq
        %v2517 = vshrl.u32 %v2516, 7
        %v2518 = vsub.s32 %v2515, %v2517
        %v2519 = vrot.slane %v2511, %v2518
        %v2521 = vunpack.c.l.s4 1983009808
        %v2522 = vunpack.c.0.s8 %v2521
        %v2523 = vlaneseq
        %v2524 = vshrl.u32 %v2523, 7
        %v2525 = vsub.s32 %v2522, %v2524
        %v2526 = vrot.slane %v2512, %v2525
        %v2527 = vcombine.low %v1351, %v1383
        %v2528 = vcombine.high %v1351, %v1383
        %v2530 = vunpack.c.l.s4 1983009808
        %v2531 = vunpack.c.0.s8 %v2530
        %v2532 = vlaneseq
        %v2533 = vshrl.u32 %v2532, 7
        %v2534 = vsub.s32 %v2531, %v2533
        %v2535 = vrot.slane %v2527, %v2534
        %v2537 = vunpack.c.l.s4 1983009808
        %v2538 = vunpack.c.0.s8 %v2537
        %v2539 = vlaneseq
        %v2540 = vshrl.u32 %v2539, 7
        %v2541 = vsub.s32 %v2538, %v2540
        %v2542 = vrot.slane %v2528, %v2541
        %v2543 = vcombine.low %v2487, %v2503
        %v2544 = vcombine.high %v2487, %v2503
        %v2546 = vunpack.c.l.s4 1934713408
        %v2547 = vunpack.c.0.s8 %v2546
        %v2548 = vlaneseq
        %v2549 = vshrl.u32 %v2548, 7
        %v2550 = vsub.s32 %v2547, %v2549
        %v2551 = vrot.slane %v2543, %v2550
        %v2553 = vunpack.c.l.s4 1934713408
        %v2554 = vunpack.c.0.s8 %v2553
        %v2555 = vlaneseq
        %v2556 = vshrl.u32 %v2555, 7
        %v2557 = vsub.s32 %v2554, %v2556
        %v2558 = vrot.slane %v2544, %v2557
        %v2559 = vcombine.low %v2494, %v2510
        %v2560 = vcombine.high %v2494, %v2510
        %v2562 = vunpack.c.l.s4 1934713408
        %v2563 = vunpack.c.0.s8 %v2562
        %v2564 = vlaneseq
        %v2565 = vshrl.u32 %v2564, 7
        %v2566 = vsub.s32 %v2563, %v2565
        %v2567 = vrot.slane %v2559, %v2566
        %v2569 = vunpack.c.l.s4 1934713408
        %v2570 = vunpack.c.0.s8 %v2569
        %v2571 = vlaneseq
        %v2572 = vshrl.u32 %v2571, 7
        %v2573 = vsub.s32 %v2570, %v2572
        %v2574 = vrot.slane %v2560, %v2573
        %v2575 = vcombine.low %v2519, %v2535
        %v2576 = vcombine.high %v2519, %v2535
        %v2578 = vunpack.c.l.s4 1934713408
        %v2579 = vunpack.c.0.s8 %v2578
        %v2580 = vlaneseq
        %v2581 = vshrl.u32 %v2580, 7
        %v2582 = vsub.s32 %v2579, %v2581
        %v2583 = vrot.slane %v2575, %v2582
        %v2585 = vunpack.c.l.s4 1934713408
        %v2586 = vunpack.c.0.s8 %v2585
        %v2587 = vlaneseq
        %v2588 = vshrl.u32 %v2587, 7
        %v2589 = vsub.s32 %v2586, %v2588
        %v2590 = vrot.slane %v2576, %v2589
        %v2591 = vcombine.low %v2526, %v2542
        %v2592 = vcombine.high %v2526, %v2542
        %v2594 = vunpack.c.l.s4 1934713408
        %v2595 = vunpack.c.0.s8 %v2594
        %v2596 = vlaneseq
        %v2597 = vshrl.u32 %v2596, 7
        %v2598 = vsub.s32 %v2595, %v2597
        %v2599 = vrot.slane %v2591, %v2598
        %v2601 = vunpack.c.l.s4 1934713408
        %v2602 = vunpack.c.0.s8 %v2601
        %v2603 = vlaneseq
        %v2604 = vshrl.u32 %v2603, 7
        %v2605 = vsub.s32 %v2602, %v2604
        %v2606 = vrot.slane %v2592, %v2605
        %v2607 = vcombine.low %v2551, %v2583
        %v2608 = vcombine.high %v2551, %v2583
        %v2609 = vcombine.low %v2558, %v2590
        %v2610 = vcombine.high %v2558, %v2590
        %v2611 = vcombine.low %v2567, %v2599
        %v2612 = vcombine.high %v2567, %v2599
        %v2613 = vcombine.low %v2574, %v2606
        %v2614 = vcombine.high %v2574, %v2606
        %v2615 = vcombine.low %v1272, %v1304
        %v2616 = vcombine.high %v1272, %v1304
        %v2618 = vunpack.c.l.s4 1983009808
        %v2619 = vunpack.c.0.s8 %v2618
        %v2620 = vlaneseq
        %v2621 = vshrl.u32 %v2620, 7
        %v2622 = vsub.s32 %v2619, %v2621
        %v2623 = vrot.slane %v2615, %v2622
        %v2625 = vunpack.c.l.s4 1983009808
        %v2626 = vunpack.c.0.s8 %v2625
        %v2627 = vlaneseq
        %v2628 = vshrl.u32 %v2627, 7
        %v2629 = vsub.s32 %v2626, %v2628
        %v2630 = vrot.slane %v2616, %v2629
        %v2631 = vcombine.low %v1288, %v1320
        %v2632 = vcombine.high %v1288, %v1320
        %v2634 = vunpack.c.l.s4 1983009808
        %v2635 = vunpack.c.0.s8 %v2634
        %v2636 = vlaneseq
        %v2637 = vshrl.u32 %v2636, 7
        %v2638 = vsub.s32 %v2635, %v2637
        %v2639 = vrot.slane %v2631, %v2638
        %v2641 = vunpack.c.l.s4 1983009808
        %v2642 = vunpack.c.0.s8 %v2641
        %v2643 = vlaneseq
        %v2644 = vshrl.u32 %v2643, 7
        %v2645 = vsub.s32 %v2642, %v2644
        %v2646 = vrot.slane %v2632, %v2645
        %v2647 = vcombine.low %v1336, %v1368
        %v2648 = vcombine.high %v1336, %v1368
        %v2650 = vunpack.c.l.s4 1983009808
        %v2651 = vunpack.c.0.s8 %v2650
        %v2652 = vlaneseq
        %v2653 = vshrl.u32 %v2652, 7
        %v2654 = vsub.s32 %v2651, %v2653
        %v2655 = vrot.slane %v2647, %v2654
        %v2657 = vunpack.c.l.s4 1983009808
        %v2658 = vunpack.c.0.s8 %v2657
        %v2659 = vlaneseq
        %v2660 = vshrl.u32 %v2659, 7
        %v2661 = vsub.s32 %v2658, %v2660
        %v2662 = vrot.slane %v2648, %v2661
        %v2663 = vcombine.low %v1352, %v1384
        %v2664 = vcombine.high %v1352, %v1384
        %v2666 = vunpack.c.l.s4 1983009808
        %v2667 = vunpack.c.0.s8 %v2666
        %v2668 = vlaneseq
        %v2669 = vshrl.u32 %v2668, 7
        %v2670 = vsub.s32 %v2667, %v2669
        %v2671 = vrot.slane %v2663, %v2670
        %v2673 = vunpack.c.l.s4 1983009808
        %v2674 = vunpack.c.0.s8 %v2673
        %v2675 = vlaneseq
        %v2676 = vshrl.u32 %v2675, 7
        %v2677 = vsub.s32 %v2674, %v2676
        %v2678 = vrot.slane %v2664, %v2677
        %v2679 = vcombine.low %v2623, %v2639
        %v2680 = vcombine.high %v2623, %v2639
        %v2682 = vunpack.c.l.s4 1934713408
        %v2683 = vunpack.c.0.s8 %v2682
        %v2684 = vlaneseq
        %v2685 = vshrl.u32 %v2684, 7
        %v2686 = vsub.s32 %v2683, %v2685
        %v2687 = vrot.slane %v2679, %v2686
        %v2689 = vunpack.c.l.s4 1934713408
        %v2690 = vunpack.c.0.s8 %v2689
        %v2691 = vlaneseq
        %v2692 = vshrl.u32 %v2691, 7
        %v2693 = vsub.s32 %v2690, %v2692
        %v2694 = vrot.slane %v2680, %v2693
        %v2695 = vcombine.low %v2630, %v2646
        %v2696 = vcombine.high %v2630, %v2646
        %v2698 = vunpack.c.l.s4 1934713408
        %v2699 = vunpack.c.0.s8 %v2698
        %v2700 = vlaneseq
        %v2701 = vshrl.u32 %v2700, 7
        %v2702 = vsub.s32 %v2699, %v2701
        %v2703 = vrot.slane %v2695, %v2702
        %v2705 = vunpack.c.l.s4 1934713408
        %v2706 = vunpack.c.0.s8 %v2705
        %v2707 = vlaneseq
        %v2708 = vshrl.u32 %v2707, 7
        %v2709 = vsub.s32 %v2706, %v2708
        %v2710 = vrot.slane %v2696, %v2709
        %v2711 = vcombine.low %v2655, %v2671
        %v2712 = vcombine.high %v2655, %v2671
        %v2714 = vunpack.c.l.s4 1934713408
        %v2715 = vunpack.c.0.s8 %v2714
        %v2716 = vlaneseq
        %v2717 = vshrl.u32 %v2716, 7
        %v2718 = vsub.s32 %v2715, %v2717
        %v2719 = vrot.slane %v2711, %v2718
        %v2721 = vunpack.c.l.s4 1934713408
        %v2722 = vunpack.c.0.s8 %v2721
        %v2723 = vlaneseq
        %v2724 = vshrl.u32 %v2723, 7
        %v2725 = vsub.s32 %v2722, %v2724
        %v2726 = vrot.slane %v2712, %v2725
        %v2727 = vcombine.low %v2662, %v2678
        %v2728 = vcombine.high %v2662, %v2678
        %v2730 = vunpack.c.l.s4 1934713408
        %v2731 = vunpack.c.0.s8 %v2730
        %v2732 = vlaneseq
        %v2733 = vshrl.u32 %v2732, 7
        %v2734 = vsub.s32 %v2731, %v2733
        %v2735 = vrot.slane %v2727, %v2734
        %v2737 = vunpack.c.l.s4 1934713408
        %v2738 = vunpack.c.0.s8 %v2737
        %v2739 = vlaneseq
        %v2740 = vshrl.u32 %v2739, 7
        %v2741 = vsub.s32 %v2738, %v2740
        %v2742 = vrot.slane %v2728, %v2741
        %v2743 = vcombine.low %v2687, %v2719
        %v2744 = vcombine.high %v2687, %v2719
        %v2745 = vcombine.low %v2694, %v2726
        %v2746 = vcombine.high %v2694, %v2726
        %v2747 = vcombine.low %v2703, %v2735
        %v2748 = vcombine.high %v2703, %v2735
        %v2749 = vcombine.low %v2710, %v2742
        %v2750 = vcombine.high %v2710, %v2742
        %v2751 = vcombine.low %v1273, %v1305
        %v2752 = vcombine.high %v1273, %v1305
        %v2754 = vunpack.c.l.s4 1983009808
        %v2755 = vunpack.c.0.s8 %v2754
        %v2756 = vlaneseq
        %v2757 = vshrl.u32 %v2756, 7
        %v2758 = vsub.s32 %v2755, %v2757
        %v2759 = vrot.slane %v2751, %v2758
        %v2761 = vunpack.c.l.s4 1983009808
        %v2762 = vunpack.c.0.s8 %v2761
        %v2763 = vlaneseq
        %v2764 = vshrl.u32 %v2763, 7
        %v2765 = vsub.s32 %v2762, %v2764
        %v2766 = vrot.slane %v2752, %v2765
        %v2767 = vcombine.low %v1289, %v1321
        %v2768 = vcombine.high %v1289, %v1321
        %v2770 = vunpack.c.l.s4 1983009808
        %v2771 = vunpack.c.0.s8 %v2770
        %v2772 = vlaneseq
        %v2773 = vshrl.u32 %v2772, 7
        %v2774 = vsub.s32 %v2771, %v2773
        %v2775 = vrot.slane %v2767, %v2774
        %v2777 = vunpack.c.l.s4 1983009808
        %v2778 = vunpack.c.0.s8 %v2777
        %v2779 = vlaneseq
        %v2780 = vshrl.u32 %v2779, 7
        %v2781 = vsub.s32 %v2778, %v2780
        %v2782 = vrot.slane %v2768, %v2781
        %v2783 = vcombine.low %v1337, %v1369
        %v2784 = vcombine.high %v1337, %v1369
        %v2786 = vunpack.c.l.s4 1983009808
        %v2787 = vunpack.c.0.s8 %v2786
        %v2788 = vlaneseq
        %v2789 = vshrl.u32 %v2788, 7
        %v2790 = vsub.s32 %v2787, %v2789
        %v2791 = vrot.slane %v2783, %v2790
        %v2793 = vunpack.c.l.s4 1983009808
        %v2794 = vunpack.c.0.s8 %v2793
        %v2795 = vlaneseq
        %v2796 = vshrl.u32 %v2795, 7
        %v2797 = vsub.s32 %v2794, %v2796
        %v2798 = vrot.slane %v2784, %v2797
        %v2799 = vcombine.low %v1353, %v1385
        %v2800 = vcombine.high %v1353, %v1385
        %v2802 = vunpack.c.l.s4 1983009808
        %v2803 = vunpack.c.0.s8 %v2802
        %v2804 = vlaneseq
        %v2805 = vshrl.u32 %v2804, 7
        %v2806 = vsub.s32 %v2803, %v2805
        %v2807 = vrot.slane %v2799, %v2806
        %v2809 = vunpack.c.l.s4 1983009808
        %v2810 = vunpack.c.0.s8 %v2809
        %v2811 = vlaneseq
        %v2812 = vshrl.u32 %v2811, 7
        %v2813 = vsub.s32 %v2810, %v2812
        %v2814 = vrot.slane %v2800, %v2813
        %v2815 = vcombine.low %v2759, %v2775
        %v2816 = vcombine.high %v2759, %v2775
        %v2818 = vunpack.c.l.s4 1934713408
        %v2819 = vunpack.c.0.s8 %v2818
        %v2820 = vlaneseq
        %v2821 = vshrl.u32 %v2820, 7
        %v2822 = vsub.s32 %v2819, %v2821
        %v2823 = vrot.slane %v2815, %v2822
        %v2825 = vunpack.c.l.s4 1934713408
        %v2826 = vunpack.c.0.s8 %v2825
        %v2827 = vlaneseq
        %v2828 = vshrl.u32 %v2827, 7
        %v2829 = vsub.s32 %v2826, %v2828
        %v2830 = vrot.slane %v2816, %v2829
        %v2831 = vcombine.low %v2766, %v2782
        %v2832 = vcombine.high %v2766, %v2782
        %v2834 = vunpack.c.l.s4 1934713408
        %v2835 = vunpack.c.0.s8 %v2834
        %v2836 = vlaneseq
        %v2837 = vshrl.u32 %v2836, 7
        %v2838 = vsub.s32 %v2835, %v2837
        %v2839 = vrot.slane %v2831, %v2838
        %v2841 = vunpack.c.l.s4 1934713408
        %v2842 = vunpack.c.0.s8 %v2841
        %v2843 = vlaneseq
        %v2844 = vshrl.u32 %v2843, 7
        %v2845 = vsub.s32 %v2842, %v2844
        %v2846 = vrot.slane %v2832, %v2845
        %v2847 = vcombine.low %v2791, %v2807
        %v2848 = vcombine.high %v2791, %v2807
        %v2850 = vunpack.c.l.s4 1934713408
        %v2851 = vunpack.c.0.s8 %v2850
        %v2852 = vlaneseq
        %v2853 = vshrl.u32 %v2852, 7
        %v2854 = vsub.s32 %v2851, %v2853
        %v2855 = vrot.slane %v2847, %v2854
        %v2857 = vunpack.c.l.s4 1934713408
        %v2858 = vunpack.c.0.s8 %v2857
        %v2859 = vlaneseq
        %v2860 = vshrl.u32 %v2859, 7
        %v2861 = vsub.s32 %v2858, %v2860
        %v2862 = vrot.slane %v2848, %v2861
        %v2863 = vcombine.low %v2798, %v2814
        %v2864 = vcombine.high %v2798, %v2814
        %v2866 = vunpack.c.l.s4 1934713408
        %v2867 = vunpack.c.0.s8 %v2866
        %v2868 = vlaneseq
        %v2869 = vshrl.u32 %v2868, 7
        %v2870 = vsub.s32 %v2867, %v2869
        %v2871 = vrot.slane %v2863, %v2870
        %v2873 = vunpack.c.l.s4 1934713408
        %v2874 = vunpack.c.0.s8 %v2873
        %v2875 = vlaneseq
        %v2876 = vshrl.u32 %v2875, 7
        %v2877 = vsub.s32 %v2874, %v2876
        %v2878 = vrot.slane %v2864, %v2877
        %v2879 = vcombine.low %v2823, %v2855
        %v2880 = vcombine.high %v2823, %v2855
        %v2881 = vcombine.low %v2830, %v2862
        %v2882 = vcombine.high %v2830, %v2862
        %v2883 = vcombine.low %v2839, %v2871
        %v2884 = vcombine.high %v2839, %v2871
        %v2885 = vcombine.low %v2846, %v2878
        %v2886 = vcombine.high %v2846, %v2878
        %v2887 = vcombine.low %v1274, %v1306
        %v2888 = vcombine.high %v1274, %v1306
        %v2890 = vunpack.c.l.s4 1983009808
        %v2891 = vunpack.c.0.s8 %v2890
        %v2892 = vlaneseq
        %v2893 = vshrl.u32 %v2892, 7
        %v2894 = vsub.s32 %v2891, %v2893
        %v2895 = vrot.slane %v2887, %v2894
        %v2897 = vunpack.c.l.s4 1983009808
        %v2898 = vunpack.c.0.s8 %v2897
        %v2899 = vlaneseq
        %v2900 = vshrl.u32 %v2899, 7
        %v2901 = vsub.s32 %v2898, %v2900
        %v2902 = vrot.slane %v2888, %v2901
        %v2903 = vcombine.low %v1290, %v1322
        %v2904 = vcombine.high %v1290, %v1322
        %v2906 = vunpack.c.l.s4 1983009808
        %v2907 = vunpack.c.0.s8 %v2906
        %v2908 = vlaneseq
        %v2909 = vshrl.u32 %v2908, 7
        %v2910 = vsub.s32 %v2907, %v2909
        %v2911 = vrot.slane %v2903, %v2910
        %v2913 = vunpack.c.l.s4 1983009808
        %v2914 = vunpack.c.0.s8 %v2913
        %v2915 = vlaneseq
        %v2916 = vshrl.u32 %v2915, 7
        %v2917 = vsub.s32 %v2914, %v2916
        %v2918 = vrot.slane %v2904, %v2917
        %v2919 = vcombine.low %v1338, %v1370
        %v2920 = vcombine.high %v1338, %v1370
        %v2922 = vunpack.c.l.s4 1983009808
        %v2923 = vunpack.c.0.s8 %v2922
        %v2924 = vlaneseq
        %v2925 = vshrl.u32 %v2924, 7
        %v2926 = vsub.s32 %v2923, %v2925
        %v2927 = vrot.slane %v2919, %v2926
        %v2929 = vunpack.c.l.s4 1983009808
        %v2930 = vunpack.c.0.s8 %v2929
        %v2931 = vlaneseq
        %v2932 = vshrl.u32 %v2931, 7
        %v2933 = vsub.s32 %v2930, %v2932
        %v2934 = vrot.slane %v2920, %v2933
        %v2935 = vcombine.low %v1354, %v1386
        %v2936 = vcombine.high %v1354, %v1386
        %v2938 = vunpack.c.l.s4 1983009808
        %v2939 = vunpack.c.0.s8 %v2938
        %v2940 = vlaneseq
        %v2941 = vshrl.u32 %v2940, 7
        %v2942 = vsub.s32 %v2939, %v2941
        %v2943 = vrot.slane %v2935, %v2942
        %v2945 = vunpack.c.l.s4 1983009808
        %v2946 = vunpack.c.0.s8 %v2945
        %v2947 = vlaneseq
        %v2948 = vshrl.u32 %v2947, 7
        %v2949 = vsub.s32 %v2946, %v2948
        %v2950 = vrot.slane %v2936, %v2949
        %v2951 = vcombine.low %v2895, %v2911
        %v2952 = vcombine.high %v2895, %v2911
        %v2954 = vunpack.c.l.s4 1934713408
        %v2955 = vunpack.c.0.s8 %v2954
        %v2956 = vlaneseq
        %v2957 = vshrl.u32 %v2956, 7
        %v2958 = vsub.s32 %v2955, %v2957
        %v2959 = vrot.slane %v2951, %v2958
        %v2961 = vunpack.c.l.s4 1934713408
        %v2962 = vunpack.c.0.s8 %v2961
        %v2963 = vlaneseq
        %v2964 = vshrl.u32 %v2963, 7
        %v2965 = vsub.s32 %v2962, %v2964
        %v2966 = vrot.slane %v2952, %v2965
        %v2967 = vcombine.low %v2902, %v2918
        %v2968 = vcombine.high %v2902, %v2918
        %v2970 = vunpack.c.l.s4 1934713408
        %v2971 = vunpack.c.0.s8 %v2970
        %v2972 = vlaneseq
        %v2973 = vshrl.u32 %v2972, 7
        %v2974 = vsub.s32 %v2971, %v2973
        %v2975 = vrot.slane %v2967, %v2974
        %v2977 = vunpack.c.l.s4 1934713408
        %v2978 = vunpack.c.0.s8 %v2977
        %v2979 = vlaneseq
        %v2980 = vshrl.u32 %v2979, 7
        %v2981 = vsub.s32 %v2978, %v2980
        %v2982 = vrot.slane %v2968, %v2981
        %v2983 = vcombine.low %v2927, %v2943
        %v2984 = vcombine.high %v2927, %v2943
        %v2986 = vunpack.c.l.s4 1934713408
        %v2987 = vunpack.c.0.s8 %v2986
        %v2988 = vlaneseq
        %v2989 = vshrl.u32 %v2988, 7
        %v2990 = vsub.s32 %v2987, %v2989
        %v2991 = vrot.slane %v2983, %v2990
        %v2993 = vunpack.c.l.s4 1934713408
        %v2994 = vunpack.c.0.s8 %v2993
        %v2995 = vlaneseq
        %v2996 = vshrl.u32 %v2995, 7
        %v2997 = vsub.s32 %v2994, %v2996
        %v2998 = vrot.slane %v2984, %v2997
        %v2999 = vcombine.low %v2934, %v2950
        %v3000 = vcombine.high %v2934, %v2950
        %v3002 = vunpack.c.l.s4 1934713408
        %v3003 = vunpack.c.0.s8 %v3002
        %v3004 = vlaneseq
        %v3005 = vshrl.u32 %v3004, 7
        %v3006 = vsub.s32 %v3003, %v3005
        %v3007 = vrot.slane %v2999, %v3006
        %v3009 = vunpack.c.l.s4 1934713408
        %v3010 = vunpack.c.0.s8 %v3009
        %v3011 = vlaneseq
        %v3012 = vshrl.u32 %v3011, 7
        %v3013 = vsub.s32 %v3010, %v3012
        %v3014 = vrot.slane %v3000, %v3013
        %v3015 = vcombine.low %v2959, %v2991
        %v3016 = vcombine.high %v2959, %v2991
        %v3017 = vcombine.low %v2966, %v2998
        %v3018 = vcombine.high %v2966, %v2998
        %v3019 = vcombine.low %v2975, %v3007
        %v3020 = vcombine.high %v2975, %v3007
        %v3021 = vcombine.low %v2982, %v3014
        %v3022 = vcombine.high %v2982, %v3014
        %v3023 = vcombine.low %v1275, %v1307
        %v3024 = vcombine.high %v1275, %v1307
        %v3026 = vunpack.c.l.s4 1983009808
        %v3027 = vunpack.c.0.s8 %v3026
        %v3028 = vlaneseq
        %v3029 = vshrl.u32 %v3028, 7
        %v3030 = vsub.s32 %v3027, %v3029
        %v3031 = vrot.slane %v3023, %v3030
        %v3033 = vunpack.c.l.s4 1983009808
        %v3034 = vunpack.c.0.s8 %v3033
        %v3035 = vlaneseq
        %v3036 = vshrl.u32 %v3035, 7
        %v3037 = vsub.s32 %v3034, %v3036
        %v3038 = vrot.slane %v3024, %v3037
        %v3039 = vcombine.low %v1291, %v1323
        %v3040 = vcombine.high %v1291, %v1323
        %v3042 = vunpack.c.l.s4 1983009808
        %v3043 = vunpack.c.0.s8 %v3042
        %v3044 = vlaneseq
        %v3045 = vshrl.u32 %v3044, 7
        %v3046 = vsub.s32 %v3043, %v3045
        %v3047 = vrot.slane %v3039, %v3046
        %v3049 = vunpack.c.l.s4 1983009808
        %v3050 = vunpack.c.0.s8 %v3049
        %v3051 = vlaneseq
        %v3052 = vshrl.u32 %v3051, 7
        %v3053 = vsub.s32 %v3050, %v3052
        %v3054 = vrot.slane %v3040, %v3053
        %v3055 = vcombine.low %v1339, %v1371
        %v3056 = vcombine.high %v1339, %v1371
        %v3058 = vunpack.c.l.s4 1983009808
        %v3059 = vunpack.c.0.s8 %v3058
        %v3060 = vlaneseq
        %v3061 = vshrl.u32 %v3060, 7
        %v3062 = vsub.s32 %v3059, %v3061
        %v3063 = vrot.slane %v3055, %v3062
        %v3065 = vunpack.c.l.s4 1983009808
        %v3066 = vunpack.c.0.s8 %v3065
        %v3067 = vlaneseq
        %v3068 = vshrl.u32 %v3067, 7
        %v3069 = vsub.s32 %v3066, %v3068
        %v3070 = vrot.slane %v3056, %v3069
        %v3071 = vcombine.low %v1355, %v1387
        %v3072 = vcombine.high %v1355, %v1387
        %v3074 = vunpack.c.l.s4 1983009808
        %v3075 = vunpack.c.0.s8 %v3074
        %v3076 = vlaneseq
        %v3077 = vshrl.u32 %v3076, 7
        %v3078 = vsub.s32 %v3075, %v3077
        %v3079 = vrot.slane %v3071, %v3078
        %v3081 = vunpack.c.l.s4 1983009808
        %v3082 = vunpack.c.0.s8 %v3081
        %v3083 = vlaneseq
        %v3084 = vshrl.u32 %v3083, 7
        %v3085 = vsub.s32 %v3082, %v3084
        %v3086 = vrot.slane %v3072, %v3085
        %v3087 = vcombine.low %v3031, %v3047
        %v3088 = vcombine.high %v3031, %v3047
        %v3090 = vunpack.c.l.s4 1934713408
        %v3091 = vunpack.c.0.s8 %v3090
        %v3092 = vlaneseq
        %v3093 = vshrl.u32 %v3092, 7
        %v3094 = vsub.s32 %v3091, %v3093
        %v3095 = vrot.slane %v3087, %v3094
        %v3097 = vunpack.c.l.s4 1934713408
        %v3098 = vunpack.c.0.s8 %v3097
        %v3099 = vlaneseq
        %v3100 = vshrl.u32 %v3099, 7
        %v3101 = vsub.s32 %v3098, %v3100
        %v3102 = vrot.slane %v3088, %v3101
        %v3103 = vcombine.low %v3038, %v3054
        %v3104 = vcombine.high %v3038, %v3054
        %v3106 = vunpack.c.l.s4 1934713408
        %v3107 = vunpack.c.0.s8 %v3106
        %v3108 = vlaneseq
        %v3109 = vshrl.u32 %v3108, 7
        %v3110 = vsub.s32 %v3107, %v3109
        %v3111 = vrot.slane %v3103, %v3110
        %v3113 = vunpack.c.l.s4 1934713408
        %v3114 = vunpack.c.0.s8 %v3113
        %v3115 = vlaneseq
        %v3116 = vshrl.u32 %v3115, 7
        %v3117 = vsub.s32 %v3114, %v3116
        %v3118 = vrot.slane %v3104, %v3117
        %v3119 = vcombine.low %v3063, %v3079
        %v3120 = vcombine.high %v3063, %v3079
        %v3122 = vunpack.c.l.s4 1934713408
        %v3123 = vunpack.c.0.s8 %v3122
        %v3124 = vlaneseq
        %v3125 = vshrl.u32 %v3124, 7
        %v3126 = vsub.s32 %v3123, %v3125
        %v3127 = vrot.slane %v3119, %v3126
        %v3129 = vunpack.c.l.s4 1934713408
        %v3130 = vunpack.c.0.s8 %v3129
        %v3131 = vlaneseq
        %v3132 = vshrl.u32 %v3131, 7
        %v3133 = vsub.s32 %v3130, %v3132
        %v3134 = vrot.slane %v3120, %v3133
        %v3135 = vcombine.low %v3070, %v3086
        %v3136 = vcombine.high %v3070, %v3086
        %v3138 = vunpack.c.l.s4 1934713408
        %v3139 = vunpack.c.0.s8 %v3138
        %v3140 = vlaneseq
        %v3141 = vshrl.u32 %v3140, 7
        %v3142 = vsub.s32 %v3139, %v3141
        %v3143 = vrot.slane %v3135, %v3142
        %v3145 = vunpack.c.l.s4 1934713408
        %v3146 = vunpack.c.0.s8 %v3145
        %v3147 = vlaneseq
        %v3148 = vshrl.u32 %v3147, 7
        %v3149 = vsub.s32 %v3146, %v3148
        %v3150 = vrot.slane %v3136, %v3149
        %v3151 = vcombine.low %v3095, %v3127
        %v3152 = vcombine.high %v3095, %v3127
        %v3153 = vcombine.low %v3102, %v3134
        %v3154 = vcombine.high %v3102, %v3134
        %v3155 = vcombine.low %v3111, %v3143
        %v3156 = vcombine.high %v3111, %v3143
        %v3157 = vcombine.low %v3118, %v3150
        %v3158 = vcombine.high %v3118, %v3150
        %v3159 = vcombine.low %v1276, %v1308
        %v3160 = vcombine.high %v1276, %v1308
        %v3162 = vunpack.c.l.s4 1983009808
        %v3163 = vunpack.c.0.s8 %v3162
        %v3164 = vlaneseq
        %v3165 = vshrl.u32 %v3164, 7
        %v3166 = vsub.s32 %v3163, %v3165
        %v3167 = vrot.slane %v3159, %v3166
        %v3169 = vunpack.c.l.s4 1983009808
        %v3170 = vunpack.c.0.s8 %v3169
        %v3171 = vlaneseq
        %v3172 = vshrl.u32 %v3171, 7
        %v3173 = vsub.s32 %v3170, %v3172
        %v3174 = vrot.slane %v3160, %v3173
        %v3175 = vcombine.low %v1292, %v1324
        %v3176 = vcombine.high %v1292, %v1324
        %v3178 = vunpack.c.l.s4 1983009808
        %v3179 = vunpack.c.0.s8 %v3178
        %v3180 = vlaneseq
        %v3181 = vshrl.u32 %v3180, 7
        %v3182 = vsub.s32 %v3179, %v3181
        %v3183 = vrot.slane %v3175, %v3182
        %v3185 = vunpack.c.l.s4 1983009808
        %v3186 = vunpack.c.0.s8 %v3185
        %v3187 = vlaneseq
        %v3188 = vshrl.u32 %v3187, 7
        %v3189 = vsub.s32 %v3186, %v3188
        %v3190 = vrot.slane %v3176, %v3189
        %v3191 = vcombine.low %v1340, %v1372
        %v3192 = vcombine.high %v1340, %v1372
        %v3194 = vunpack.c.l.s4 1983009808
        %v3195 = vunpack.c.0.s8 %v3194
        %v3196 = vlaneseq
        %v3197 = vshrl.u32 %v3196, 7
        %v3198 = vsub.s32 %v3195, %v3197
        %v3199 = vrot.slane %v3191, %v3198
        %v3201 = vunpack.c.l.s4 1983009808
        %v3202 = vunpack.c.0.s8 %v3201
        %v3203 = vlaneseq
        %v3204 = vshrl.u32 %v3203, 7
        %v3205 = vsub.s32 %v3202, %v3204
        %v3206 = vrot.slane %v3192, %v3205
        %v3207 = vcombine.low %v1356, %v1388
        %v3208 = vcombine.high %v1356, %v1388
        %v3210 = vunpack.c.l.s4 1983009808
        %v3211 = vunpack.c.0.s8 %v3210
        %v3212 = vlaneseq
        %v3213 = vshrl.u32 %v3212, 7
        %v3214 = vsub.s32 %v3211, %v3213
        %v3215 = vrot.slane %v3207, %v3214
        %v3217 = vunpack.c.l.s4 1983009808
        %v3218 = vunpack.c.0.s8 %v3217
        %v3219 = vlaneseq
        %v3220 = vshrl.u32 %v3219, 7
        %v3221 = vsub.s32 %v3218, %v3220
        %v3222 = vrot.slane %v3208, %v3221
        %v3223 = vcombine.low %v3167, %v3183
        %v3224 = vcombine.high %v3167, %v3183
        %v3226 = vunpack.c.l.s4 1934713408
        %v3227 = vunpack.c.0.s8 %v3226
        %v3228 = vlaneseq
        %v3229 = vshrl.u32 %v3228, 7
        %v3230 = vsub.s32 %v3227, %v3229
        %v3231 = vrot.slane %v3223, %v3230
        %v3233 = vunpack.c.l.s4 1934713408
        %v3234 = vunpack.c.0.s8 %v3233
        %v3235 = vlaneseq
        %v3236 = vshrl.u32 %v3235, 7
        %v3237 = vsub.s32 %v3234, %v3236
        %v3238 = vrot.slane %v3224, %v3237
        %v3239 = vcombine.low %v3174, %v3190
        %v3240 = vcombine.high %v3174, %v3190
        %v3242 = vunpack.c.l.s4 1934713408
        %v3243 = vunpack.c.0.s8 %v3242
        %v3244 = vlaneseq
        %v3245 = vshrl.u32 %v3244, 7
        %v3246 = vsub.s32 %v3243, %v3245
        %v3247 = vrot.slane %v3239, %v3246
        %v3249 = vunpack.c.l.s4 1934713408
        %v3250 = vunpack.c.0.s8 %v3249
        %v3251 = vlaneseq
        %v3252 = vshrl.u32 %v3251, 7
        %v3253 = vsub.s32 %v3250, %v3252
        %v3254 = vrot.slane %v3240, %v3253
        %v3255 = vcombine.low %v3199, %v3215
        %v3256 = vcombine.high %v3199, %v3215
        %v3258 = vunpack.c.l.s4 1934713408
        %v3259 = vunpack.c.0.s8 %v3258
        %v3260 = vlaneseq
        %v3261 = vshrl.u32 %v3260, 7
        %v3262 = vsub.s32 %v3259, %v3261
        %v3263 = vrot.slane %v3255, %v3262
        %v3265 = vunpack.c.l.s4 1934713408
        %v3266 = vunpack.c.0.s8 %v3265
        %v3267 = vlaneseq
        %v3268 = vshrl.u32 %v3267, 7
        %v3269 = vsub.s32 %v3266, %v3268
        %v3270 = vrot.slane %v3256, %v3269
        %v3271 = vcombine.low %v3206, %v3222
        %v3272 = vcombine.high %v3206, %v3222
        %v3274 = vunpack.c.l.s4 1934713408
        %v3275 = vunpack.c.0.s8 %v3274
        %v3276 = vlaneseq
        %v3277 = vshrl.u32 %v3276, 7
        %v3278 = vsub.s32 %v3275, %v3277
        %v3279 = vrot.slane %v3271, %v3278
        %v3281 = vunpack.c.l.s4 1934713408
        %v3282 = vunpack.c.0.s8 %v3281
        %v3283 = vlaneseq
        %v3284 = vshrl.u32 %v3283, 7
        %v3285 = vsub.s32 %v3282, %v3284
        %v3286 = vrot.slane %v3272, %v3285
        %v3287 = vcombine.low %v3231, %v3263
        %v3288 = vcombine.high %v3231, %v3263
        %v3289 = vcombine.low %v3238, %v3270
        %v3290 = vcombine.high %v3238, %v3270
        %v3291 = vcombine.low %v3247, %v3279
        %v3292 = vcombine.high %v3247, %v3279
        %v3293 = vcombine.low %v3254, %v3286
        %v3294 = vcombine.high %v3254, %v3286
        %v3295 = vcombine.low %v1277, %v1309
        %v3296 = vcombine.high %v1277, %v1309
        %v3298 = vunpack.c.l.s4 1983009808
        %v3299 = vunpack.c.0.s8 %v3298
        %v3300 = vlaneseq
        %v3301 = vshrl.u32 %v3300, 7
        %v3302 = vsub.s32 %v3299, %v3301
        %v3303 = vrot.slane %v3295, %v3302
        %v3305 = vunpack.c.l.s4 1983009808
        %v3306 = vunpack.c.0.s8 %v3305
        %v3307 = vlaneseq
        %v3308 = vshrl.u32 %v3307, 7
        %v3309 = vsub.s32 %v3306, %v3308
        %v3310 = vrot.slane %v3296, %v3309
        %v3311 = vcombine.low %v1293, %v1325
        %v3312 = vcombine.high %v1293, %v1325
        %v3314 = vunpack.c.l.s4 1983009808
        %v3315 = vunpack.c.0.s8 %v3314
        %v3316 = vlaneseq
        %v3317 = vshrl.u32 %v3316, 7
        %v3318 = vsub.s32 %v3315, %v3317
        %v3319 = vrot.slane %v3311, %v3318
        %v3321 = vunpack.c.l.s4 1983009808
        %v3322 = vunpack.c.0.s8 %v3321
        %v3323 = vlaneseq
        %v3324 = vshrl.u32 %v3323, 7
        %v3325 = vsub.s32 %v3322, %v3324
        %v3326 = vrot.slane %v3312, %v3325
        %v3327 = vcombine.low %v1341, %v1373
        %v3328 = vcombine.high %v1341, %v1373
        %v3330 = vunpack.c.l.s4 1983009808
        %v3331 = vunpack.c.0.s8 %v3330
        %v3332 = vlaneseq
        %v3333 = vshrl.u32 %v3332, 7
        %v3334 = vsub.s32 %v3331, %v3333
        %v3335 = vrot.slane %v3327, %v3334
        %v3337 = vunpack.c.l.s4 1983009808
        %v3338 = vunpack.c.0.s8 %v3337
        %v3339 = vlaneseq
        %v3340 = vshrl.u32 %v3339, 7
        %v3341 = vsub.s32 %v3338, %v3340
        %v3342 = vrot.slane %v3328, %v3341
        %v3343 = vcombine.low %v1357, %v1389
        %v3344 = vcombine.high %v1357, %v1389
        %v3346 = vunpack.c.l.s4 1983009808
        %v3347 = vunpack.c.0.s8 %v3346
        %v3348 = vlaneseq
        %v3349 = vshrl.u32 %v3348, 7
        %v3350 = vsub.s32 %v3347, %v3349
        %v3351 = vrot.slane %v3343, %v3350
        %v3353 = vunpack.c.l.s4 1983009808
        %v3354 = vunpack.c.0.s8 %v3353
        %v3355 = vlaneseq
        %v3356 = vshrl.u32 %v3355, 7
        %v3357 = vsub.s32 %v3354, %v3356
        %v3358 = vrot.slane %v3344, %v3357
        %v3359 = vcombine.low %v3303, %v3319
        %v3360 = vcombine.high %v3303, %v3319
        %v3362 = vunpack.c.l.s4 1934713408
        %v3363 = vunpack.c.0.s8 %v3362
        %v3364 = vlaneseq
        %v3365 = vshrl.u32 %v3364, 7
        %v3366 = vsub.s32 %v3363, %v3365
        %v3367 = vrot.slane %v3359, %v3366
        %v3369 = vunpack.c.l.s4 1934713408
        %v3370 = vunpack.c.0.s8 %v3369
        %v3371 = vlaneseq
        %v3372 = vshrl.u32 %v3371, 7
        %v3373 = vsub.s32 %v3370, %v3372
        %v3374 = vrot.slane %v3360, %v3373
        %v3375 = vcombine.low %v3310, %v3326
        %v3376 = vcombine.high %v3310, %v3326
        %v3378 = vunpack.c.l.s4 1934713408
        %v3379 = vunpack.c.0.s8 %v3378
        %v3380 = vlaneseq
        %v3381 = vshrl.u32 %v3380, 7
        %v3382 = vsub.s32 %v3379, %v3381
        %v3383 = vrot.slane %v3375, %v3382
        %v3385 = vunpack.c.l.s4 1934713408
        %v3386 = vunpack.c.0.s8 %v3385
        %v3387 = vlaneseq
        %v3388 = vshrl.u32 %v3387, 7
        %v3389 = vsub.s32 %v3386, %v3388
        %v3390 = vrot.slane %v3376, %v3389
        %v3391 = vcombine.low %v3335, %v3351
        %v3392 = vcombine.high %v3335, %v3351
        %v3394 = vunpack.c.l.s4 1934713408
        %v3395 = vunpack.c.0.s8 %v3394
        %v3396 = vlaneseq
        %v3397 = vshrl.u32 %v3396, 7
        %v3398 = vsub.s32 %v3395, %v3397
        %v3399 = vrot.slane %v3391, %v3398
        %v3401 = vunpack.c.l.s4 1934713408
        %v3402 = vunpack.c.0.s8 %v3401
        %v3403 = vlaneseq
        %v3404 = vshrl.u32 %v3403, 7
        %v3405 = vsub.s32 %v3402, %v3404
        %v3406 = vrot.slane %v3392, %v3405
        %v3407 = vcombine.low %v3342, %v3358
        %v3408 = vcombine.high %v3342, %v3358
        %v3410 = vunpack.c.l.s4 1934713408
        %v3411 = vunpack.c.0.s8 %v3410
        %v3412 = vlaneseq
        %v3413 = vshrl.u32 %v3412, 7
        %v3414 = vsub.s32 %v3411, %v3413
        %v3415 = vrot.slane %v3407, %v3414
        %v3417 = vunpack.c.l.s4 1934713408
        %v3418 = vunpack.c.0.s8 %v3417
        %v3419 = vlaneseq
        %v3420 = vshrl.u32 %v3419, 7
        %v3421 = vsub.s32 %v3418, %v3420
        %v3422 = vrot.slane %v3408, %v3421
        %v3423 = vcombine.low %v3367, %v3399
        %v3424 = vcombine.high %v3367, %v3399
        %v3425 = vcombine.low %v3374, %v3406
        %v3426 = vcombine.high %v3374, %v3406
        %v3427 = vcombine.low %v3383, %v3415
        %v3428 = vcombine.high %v3383, %v3415
        %v3429 = vcombine.low %v3390, %v3422
        %v3430 = vcombine.high %v3390, %v3422
        %v3431 = vcombine.low %v1278, %v1310
        %v3432 = vcombine.high %v1278, %v1310
        %v3434 = vunpack.c.l.s4 1983009808
        %v3435 = vunpack.c.0.s8 %v3434
        %v3436 = vlaneseq
        %v3437 = vshrl.u32 %v3436, 7
        %v3438 = vsub.s32 %v3435, %v3437
        %v3439 = vrot.slane %v3431, %v3438
        %v3441 = vunpack.c.l.s4 1983009808
        %v3442 = vunpack.c.0.s8 %v3441
        %v3443 = vlaneseq
        %v3444 = vshrl.u32 %v3443, 7
        %v3445 = vsub.s32 %v3442, %v3444
        %v3446 = vrot.slane %v3432, %v3445
        %v3447 = vcombine.low %v1294, %v1326
        %v3448 = vcombine.high %v1294, %v1326
        %v3450 = vunpack.c.l.s4 1983009808
        %v3451 = vunpack.c.0.s8 %v3450
        %v3452 = vlaneseq
        %v3453 = vshrl.u32 %v3452, 7
        %v3454 = vsub.s32 %v3451, %v3453
        %v3455 = vrot.slane %v3447, %v3454
        %v3457 = vunpack.c.l.s4 1983009808
        %v3458 = vunpack.c.0.s8 %v3457
        %v3459 = vlaneseq
        %v3460 = vshrl.u32 %v3459, 7
        %v3461 = vsub.s32 %v3458, %v3460
        %v3462 = vrot.slane %v3448, %v3461
        %v3463 = vcombine.low %v1342, %v1374
        %v3464 = vcombine.high %v1342, %v1374
        %v3466 = vunpack.c.l.s4 1983009808
        %v3467 = vunpack.c.0.s8 %v3466
        %v3468 = vlaneseq
        %v3469 = vshrl.u32 %v3468, 7
        %v3470 = vsub.s32 %v3467, %v3469
        %v3471 = vrot.slane %v3463, %v3470
        %v3473 = vunpack.c.l.s4 1983009808
        %v3474 = vunpack.c.0.s8 %v3473
        %v3475 = vlaneseq
        %v3476 = vshrl.u32 %v3475, 7
        %v3477 = vsub.s32 %v3474, %v3476
        %v3478 = vrot.slane %v3464, %v3477
        %v3479 = vcombine.low %v1358, %v1390
        %v3480 = vcombine.high %v1358, %v1390
        %v3482 = vunpack.c.l.s4 1983009808
        %v3483 = vunpack.c.0.s8 %v3482
        %v3484 = vlaneseq
        %v3485 = vshrl.u32 %v3484, 7
        %v3486 = vsub.s32 %v3483, %v3485
        %v3487 = vrot.slane %v3479, %v3486
        %v3489 = vunpack.c.l.s4 1983009808
        %v3490 = vunpack.c.0.s8 %v3489
        %v3491 = vlaneseq
        %v3492 = vshrl.u32 %v3491, 7
        %v3493 = vsub.s32 %v3490, %v3492
        %v3494 = vrot.slane %v3480, %v3493
        %v3495 = vcombine.low %v3439, %v3455
        %v3496 = vcombine.high %v3439, %v3455
        %v3498 = vunpack.c.l.s4 1934713408
        %v3499 = vunpack.c.0.s8 %v3498
        %v3500 = vlaneseq
        %v3501 = vshrl.u32 %v3500, 7
        %v3502 = vsub.s32 %v3499, %v3501
        %v3503 = vrot.slane %v3495, %v3502
        %v3505 = vunpack.c.l.s4 1934713408
        %v3506 = vunpack.c.0.s8 %v3505
        %v3507 = vlaneseq
        %v3508 = vshrl.u32 %v3507, 7
        %v3509 = vsub.s32 %v3506, %v3508
        %v3510 = vrot.slane %v3496, %v3509
        %v3511 = vcombine.low %v3446, %v3462
        %v3512 = vcombine.high %v3446, %v3462
        %v3514 = vunpack.c.l.s4 1934713408
        %v3515 = vunpack.c.0.s8 %v3514
        %v3516 = vlaneseq
        %v3517 = vshrl.u32 %v3516, 7
        %v3518 = vsub.s32 %v3515, %v3517
        %v3519 = vrot.slane %v3511, %v3518
        %v3521 = vunpack.c.l.s4 1934713408
        %v3522 = vunpack.c.0.s8 %v3521
        %v3523 = vlaneseq
        %v3524 = vshrl.u32 %v3523, 7
        %v3525 = vsub.s32 %v3522, %v3524
        %v3526 = vrot.slane %v3512, %v3525
        %v3527 = vcombine.low %v3471, %v3487
        %v3528 = vcombine.high %v3471, %v3487
        %v3530 = vunpack.c.l.s4 1934713408
        %v3531 = vunpack.c.0.s8 %v3530
        %v3532 = vlaneseq
        %v3533 = vshrl.u32 %v3532, 7
        %v3534 = vsub.s32 %v3531, %v3533
        %v3535 = vrot.slane %v3527, %v3534
        %v3537 = vunpack.c.l.s4 1934713408
        %v3538 = vunpack.c.0.s8 %v3537
        %v3539 = vlaneseq
        %v3540 = vshrl.u32 %v3539, 7
        %v3541 = vsub.s32 %v3538, %v3540
        %v3542 = vrot.slane %v3528, %v3541
        %v3543 = vcombine.low %v3478, %v3494
        %v3544 = vcombine.high %v3478, %v3494
        %v3546 = vunpack.c.l.s4 1934713408
        %v3547 = vunpack.c.0.s8 %v3546
        %v3548 = vlaneseq
        %v3549 = vshrl.u32 %v3548, 7
        %v3550 = vsub.s32 %v3547, %v3549
        %v3551 = vrot.slane %v3543, %v3550
        %v3553 = vunpack.c.l.s4 1934713408
        %v3554 = vunpack.c.0.s8 %v3553
        %v3555 = vlaneseq
        %v3556 = vshrl.u32 %v3555, 7
        %v3557 = vsub.s32 %v3554, %v3556
        %v3558 = vrot.slane %v3544, %v3557
        %v3559 = vcombine.low %v3503, %v3535
        %v3560 = vcombine.high %v3503, %v3535
        %v3561 = vcombine.low %v3510, %v3542
        %v3562 = vcombine.high %v3510, %v3542
        %v3563 = vcombine.low %v3519, %v3551
        %v3564 = vcombine.high %v3519, %v3551
        %v3565 = vcombine.low %v3526, %v3558
        %v3566 = vcombine.high %v3526, %v3558
        %3568 = vrot.lane.b32.xlu0 %v1520, 2
        %v3569 = vpop.permute.xlu0 %3568
        %3572 = vrot.lane.b32.xlu0 %v1521, 4
        %v3573 = vpop.permute.xlu0 %3572
        %3576 = vrot.lane.b32.xlu0 %v1522, 6
        %v3577 = vpop.permute.xlu0 %3576
        %3580 = vrot.lane.b32.xlu0 %v1523, 8
        %v3581 = vpop.permute.xlu0 %3580
        %3584 = vrot.lane.b32.xlu0 %v1524, 10
        %v3585 = vpop.permute.xlu0 %3584
        %3588 = vrot.lane.b32.xlu0 %v1525, 12
        %v3589 = vpop.permute.xlu0 %3588
        %3592 = vrot.lane.b32.xlu0 %v1526, 14
        %v3593 = vpop.permute.xlu0 %3592
        %3596 = vrot.lane.b32.xlu0 %v1655, 16
        %v3597 = vpop.permute.xlu0 %3596
        %3600 = vrot.lane.b32.xlu0 %v1656, 18
        %v3601 = vpop.permute.xlu0 %3600
        %3604 = vrot.lane.b32.xlu0 %v1657, 20
        %v3605 = vpop.permute.xlu0 %3604
        %3608 = vrot.lane.b32.xlu0 %v1658, 22
        %v3609 = vpop.permute.xlu0 %3608
        %3612 = vrot.lane.b32.xlu0 %v1659, 24
        %v3613 = vpop.permute.xlu0 %3612
        %3616 = vrot.lane.b32.xlu0 %v1660, 26
        %v3617 = vpop.permute.xlu0 %3616
        %3620 = vrot.lane.b32.xlu0 %v1661, 28
        %v3621 = vpop.permute.xlu0 %3620
        %3624 = vrot.lane.b32.xlu0 %v1662, 30
        %v3625 = vpop.permute.xlu0 %3624
        %3628 = vrot.lane.b32.xlu0 %v1791, 32
        %v3629 = vpop.permute.xlu0 %3628
        %3632 = vrot.lane.b32.xlu0 %v1792, 34
        %v3633 = vpop.permute.xlu0 %3632
        %3636 = vrot.lane.b32.xlu0 %v1793, 36
        %v3637 = vpop.permute.xlu0 %3636
        %3640 = vrot.lane.b32.xlu0 %v1794, 38
        %v3641 = vpop.permute.xlu0 %3640
        %3644 = vrot.lane.b32.xlu0 %v1795, 40
        %v3645 = vpop.permute.xlu0 %3644
        %3648 = vrot.lane.b32.xlu0 %v1796, 42
        %v3649 = vpop.permute.xlu0 %3648
        %3652 = vrot.lane.b32.xlu0 %v1797, 44
        %v3653 = vpop.permute.xlu0 %3652
        %3656 = vrot.lane.b32.xlu0 %v1798, 46
        %v3657 = vpop.permute.xlu0 %3656
        %3660 = vrot.lane.b32.xlu0 %v1927, 48
        %v3661 = vpop.permute.xlu0 %3660
        %3664 = vrot.lane.b32.xlu0 %v1928, 50
        %v3665 = vpop.permute.xlu0 %3664
        %3668 = vrot.lane.b32.xlu0 %v1929, 52
        %v3669 = vpop.permute.xlu0 %3668
        %3672 = vrot.lane.b32.xlu0 %v1930, 54
        %v3673 = vpop.permute.xlu0 %3672
        %3676 = vrot.lane.b32.xlu0 %v1931, 56
        %v3677 = vpop.permute.xlu0 %3676
        %3680 = vrot.lane.b32.xlu0 %v1932, 58
        %v3681 = vpop.permute.xlu0 %3680
        %3684 = vrot.lane.b32.xlu0 %v1933, 60
        %v3685 = vpop.permute.xlu0 %3684
        %3688 = vrot.lane.b32.xlu0 %v1934, 62
        %v3689 = vpop.permute.xlu0 %3688
        %3692 = vrot.lane.b32.xlu0 %v2063, 64
        %v3693 = vpop.permute.xlu0 %3692
        %3696 = vrot.lane.b32.xlu0 %v2064, 66
        %v3697 = vpop.permute.xlu0 %3696
        %3700 = vrot.lane.b32.xlu0 %v2065, 68
        %v3701 = vpop.permute.xlu0 %3700
        %3704 = vrot.lane.b32.xlu0 %v2066, 70
        %v3705 = vpop.permute.xlu0 %3704
        %3708 = vrot.lane.b32.xlu0 %v2067, 72
        %v3709 = vpop.permute.xlu0 %3708
        %3712 = vrot.lane.b32.xlu0 %v2068, 74
        %v3713 = vpop.permute.xlu0 %3712
        %3716 = vrot.lane.b32.xlu0 %v2069, 76
        %v3717 = vpop.permute.xlu0 %3716
        %3720 = vrot.lane.b32.xlu0 %v2070, 78
        %v3721 = vpop.permute.xlu0 %3720
        %3724 = vrot.lane.b32.xlu0 %v2199, 80
        %v3725 = vpop.permute.xlu0 %3724
        %3728 = vrot.lane.b32.xlu0 %v2200, 82
        %v3729 = vpop.permute.xlu0 %3728
        %3732 = vrot.lane.b32.xlu0 %v2201, 84
        %v3733 = vpop.permute.xlu0 %3732
        %3736 = vrot.lane.b32.xlu0 %v2202, 86
        %v3737 = vpop.permute.xlu0 %3736
        %3740 = vrot.lane.b32.xlu0 %v2203, 88
        %v3741 = vpop.permute.xlu0 %3740
        %3744 = vrot.lane.b32.xlu0 %v2204, 90
        %v3745 = vpop.permute.xlu0 %3744
        %3748 = vrot.lane.b32.xlu0 %v2205, 92
        %v3749 = vpop.permute.xlu0 %3748
        %3752 = vrot.lane.b32.xlu0 %v2206, 94
        %v3753 = vpop.permute.xlu0 %3752
        %3756 = vrot.lane.b32.xlu0 %v2335, 96
        %v3757 = vpop.permute.xlu0 %3756
        %3760 = vrot.lane.b32.xlu0 %v2336, 98
        %v3761 = vpop.permute.xlu0 %3760
        %3764 = vrot.lane.b32.xlu0 %v2337, 100
        %v3765 = vpop.permute.xlu0 %3764
        %3768 = vrot.lane.b32.xlu0 %v2338, 102
        %v3769 = vpop.permute.xlu0 %3768
        %3772 = vrot.lane.b32.xlu0 %v2339, 104
        %v3773 = vpop.permute.xlu0 %3772
        %3776 = vrot.lane.b32.xlu0 %v2340, 106
        %v3777 = vpop.permute.xlu0 %3776
        %3780 = vrot.lane.b32.xlu0 %v2341, 108
        %v3781 = vpop.permute.xlu0 %3780
        %3784 = vrot.lane.b32.xlu0 %v2342, 110
        %v3785 = vpop.permute.xlu0 %3784
        %3788 = vrot.lane.b32.xlu0 %v2471, 112
        %v3789 = vpop.permute.xlu0 %3788
        %3792 = vrot.lane.b32.xlu0 %v2472, 114
        %v3793 = vpop.permute.xlu0 %3792
        %3796 = vrot.lane.b32.xlu0 %v2473, 116
        %v3797 = vpop.permute.xlu0 %3796
        %3800 = vrot.lane.b32.xlu0 %v2474, 118
        %v3801 = vpop.permute.xlu0 %3800
        %3804 = vrot.lane.b32.xlu0 %v2475, 120
        %v3805 = vpop.permute.xlu0 %3804
        %3808 = vrot.lane.b32.xlu0 %v2476, 122
        %v3809 = vpop.permute.xlu0 %3808
        %3812 = vrot.lane.b32.xlu0 %v2477, 124
        %v3813 = vpop.permute.xlu0 %3812
        %3816 = vrot.lane.b32.xlu0 %v2478, 126
        %v3817 = vpop.permute.xlu0 %3816
        %3820 = vrot.lane.b32.xlu0 %v2608, 2
        %v3821 = vpop.permute.xlu0 %3820
        %3824 = vrot.lane.b32.xlu0 %v2609, 4
        %v3825 = vpop.permute.xlu0 %3824
        %3828 = vrot.lane.b32.xlu0 %v2610, 6
        %v3829 = vpop.permute.xlu0 %3828
        %3832 = vrot.lane.b32.xlu0 %v2611, 8
        %v3833 = vpop.permute.xlu0 %3832
        %3836 = vrot.lane.b32.xlu0 %v2612, 10
        %v3837 = vpop.permute.xlu0 %3836
        %3840 = vrot.lane.b32.xlu0 %v2613, 12
        %v3841 = vpop.permute.xlu0 %3840
        %3844 = vrot.lane.b32.xlu0 %v2614, 14
        %v3845 = vpop.permute.xlu0 %3844
        %3848 = vrot.lane.b32.xlu0 %v2743, 16
        %v3849 = vpop.permute.xlu0 %3848
        %3852 = vrot.lane.b32.xlu0 %v2744, 18
        %v3853 = vpop.permute.xlu0 %3852
        %3856 = vrot.lane.b32.xlu0 %v2745, 20
        %v3857 = vpop.permute.xlu0 %3856
        %3860 = vrot.lane.b32.xlu0 %v2746, 22
        %v3861 = vpop.permute.xlu0 %3860
        %3864 = vrot.lane.b32.xlu0 %v2747, 24
        %v3865 = vpop.permute.xlu0 %3864
        %3868 = vrot.lane.b32.xlu0 %v2748, 26
        %v3869 = vpop.permute.xlu0 %3868
        %3872 = vrot.lane.b32.xlu0 %v2749, 28
        %v3873 = vpop.permute.xlu0 %3872
        %3876 = vrot.lane.b32.xlu0 %v2750, 30
        %v3877 = vpop.permute.xlu0 %3876
        %3880 = vrot.lane.b32.xlu0 %v2879, 32
        %v3881 = vpop.permute.xlu0 %3880
        %3884 = vrot.lane.b32.xlu0 %v2880, 34
        %v3885 = vpop.permute.xlu0 %3884
        %3888 = vrot.lane.b32.xlu0 %v2881, 36
        %v3889 = vpop.permute.xlu0 %3888
        %3892 = vrot.lane.b32.xlu0 %v2882, 38
        %v3893 = vpop.permute.xlu0 %3892
        %3896 = vrot.lane.b32.xlu0 %v2883, 40
        %v3897 = vpop.permute.xlu0 %3896
        %3900 = vrot.lane.b32.xlu0 %v2884, 42
        %v3901 = vpop.permute.xlu0 %3900
        %3904 = vrot.lane.b32.xlu0 %v2885, 44
        %v3905 = vpop.permute.xlu0 %3904
        %3908 = vrot.lane.b32.xlu0 %v2886, 46
        %v3909 = vpop.permute.xlu0 %3908
        %3912 = vrot.lane.b32.xlu0 %v3015, 48
        %v3913 = vpop.permute.xlu0 %3912
        %3916 = vrot.lane.b32.xlu0 %v3016, 50
        %v3917 = vpop.permute.xlu0 %3916
        %3920 = vrot.lane.b32.xlu0 %v3017, 52
        %v3921 = vpop.permute.xlu0 %3920
        %3924 = vrot.lane.b32.xlu0 %v3018, 54
        %v3925 = vpop.permute.xlu0 %3924
        %3928 = vrot.lane.b32.xlu0 %v3019, 56
        %v3929 = vpop.permute.xlu0 %3928
        %3932 = vrot.lane.b32.xlu0 %v3020, 58
        %v3933 = vpop.permute.xlu0 %3932
        %3936 = vrot.lane.b32.xlu0 %v3021, 60
        %v3937 = vpop.permute.xlu0 %3936
        %3940 = vrot.lane.b32.xlu0 %v3022, 62
        %v3941 = vpop.permute.xlu0 %3940
        %3944 = vrot.lane.b32.xlu0 %v3151, 64
        %v3945 = vpop.permute.xlu0 %3944
        %3948 = vrot.lane.b32.xlu0 %v3152, 66
        %v3949 = vpop.permute.xlu0 %3948
        %3952 = vrot.lane.b32.xlu0 %v3153, 68
        %v3953 = vpop.permute.xlu0 %3952
        %3956 = vrot.lane.b32.xlu0 %v3154, 70
        %v3957 = vpop.permute.xlu0 %3956
        %3960 = vrot.lane.b32.xlu0 %v3155, 72
        %v3961 = vpop.permute.xlu0 %3960
        %3964 = vrot.lane.b32.xlu0 %v3156, 74
        %v3965 = vpop.permute.xlu0 %3964
        %3968 = vrot.lane.b32.xlu0 %v3157, 76
        %v3969 = vpop.permute.xlu0 %3968
        %3972 = vrot.lane.b32.xlu0 %v3158, 78
        %v3973 = vpop.permute.xlu0 %3972
        %3976 = vrot.lane.b32.xlu0 %v3287, 80
        %v3977 = vpop.permute.xlu0 %3976
        %3980 = vrot.lane.b32.xlu0 %v3288, 82
        %v3981 = vpop.permute.xlu0 %3980
        %3984 = vrot.lane.b32.xlu0 %v3289, 84
        %v3985 = vpop.permute.xlu0 %3984
        %3988 = vrot.lane.b32.xlu0 %v3290, 86
        %v3989 = vpop.permute.xlu0 %3988
        %3992 = vrot.lane.b32.xlu0 %v3291, 88
        %v3993 = vpop.permute.xlu0 %3992
        %3996 = vrot.lane.b32.xlu0 %v3292, 90
        %v3997 = vpop.permute.xlu0 %3996
        %4000 = vrot.lane.b32.xlu0 %v3293, 92
        %v4001 = vpop.permute.xlu0 %4000
        %4004 = vrot.lane.b32.xlu0 %v3294, 94
        %v4005 = vpop.permute.xlu0 %4004
        %4008 = vrot.lane.b32.xlu0 %v3423, 96
        %v4009 = vpop.permute.xlu0 %4008
        %4012 = vrot.lane.b32.xlu0 %v3424, 98
        %v4013 = vpop.permute.xlu0 %4012
        %4016 = vrot.lane.b32.xlu0 %v3425, 100
        %v4017 = vpop.permute.xlu0 %4016
        %4020 = vrot.lane.b32.xlu0 %v3426, 102
        %v4021 = vpop.permute.xlu0 %4020
        %4024 = vrot.lane.b32.xlu0 %v3427, 104
        %v4025 = vpop.permute.xlu0 %4024
        %4028 = vrot.lane.b32.xlu0 %v3428, 106
        %v4029 = vpop.permute.xlu0 %4028
        %4032 = vrot.lane.b32.xlu0 %v3429, 108
        %v4033 = vpop.permute.xlu0 %4032
        %4036 = vrot.lane.b32.xlu0 %v3430, 110
        %v4037 = vpop.permute.xlu0 %4036
        %4040 = vrot.lane.b32.xlu0 %v3559, 112
        %v4041 = vpop.permute.xlu0 %4040
        %4044 = vrot.lane.b32.xlu0 %v3560, 114
        %v4045 = vpop.permute.xlu0 %4044
        %4048 = vrot.lane.b32.xlu0 %v3561, 116
        %v4049 = vpop.permute.xlu0 %4048
        %4052 = vrot.lane.b32.xlu0 %v3562, 118
        %v4053 = vpop.permute.xlu0 %4052
        %4056 = vrot.lane.b32.xlu0 %v3563, 120
        %v4057 = vpop.permute.xlu0 %4056
        %4060 = vrot.lane.b32.xlu0 %v3564, 122
        %v4061 = vpop.permute.xlu0 %4060
        %4064 = vrot.lane.b32.xlu0 %v3565, 124
        %v4065 = vpop.permute.xlu0 %4064
        %4068 = vrot.lane.b32.xlu0 %v3566, 126
        %v4069 = vpop.permute.xlu0 %4068
        %vm4071 = vcmask 15360
        %v4072 = vsel %vm4071, %v1519, %v3569
        %vm4073 = vcmask 31744
        %v4074 = vsel %vm4073, %v4072, %v3573
        %vm4075 = vcmask 48128
        %v4076 = vsel %vm4075, %v4074, %v3577
        %vm4077 = vcmask 64512
        %v4078 = vsel %vm4077, %v4076, %v3581
        %vm4079 = vcmask 80896
        %v4080 = vsel %vm4079, %v4078, %v3585
        %vm4081 = vcmask 97280
        %v4082 = vsel %vm4081, %v4080, %v3589
        %vm4083 = vcmask 113664
        %v4084 = vsel %vm4083, %v4082, %v3593
        %vm4085 = vcmask 130048
        %v4086 = vsel %vm4085, %v4084, %v3597
        %vm4087 = vcmask 146432
        %v4088 = vsel %vm4087, %v4086, %v3601
        %vm4089 = vcmask 162816
        %v4090 = vsel %vm4089, %v4088, %v3605
        %vm4091 = vcmask 179200
        %v4092 = vsel %vm4091, %v4090, %v3609
        %vm4093 = vcmask 195584
        %v4094 = vsel %vm4093, %v4092, %v3613
        %vm4095 = vcmask 211968
        %v4096 = vsel %vm4095, %v4094, %v3617
        %vm4097 = vcmask 228352
        %v4098 = vsel %vm4097, %v4096, %v3621
        %vm4099 = vcmask 244736
        %v4100 = vsel %vm4099, %v4098, %v3625
        %vm4101 = vcmask 261120
        %v4102 = vsel %vm4101, %v4100, %v3629
        %vm4103 = vcmask 277504
        %v4104 = vsel %vm4103, %v4102, %v3633
        %vm4105 = vcmask 293888
        %v4106 = vsel %vm4105, %v4104, %v3637
        %vm4107 = vcmask 310272
        %v4108 = vsel %vm4107, %v4106, %v3641
        %vm4109 = vcmask 326656
        %v4110 = vsel %vm4109, %v4108, %v3645
        %vm4111 = vcmask 343040
        %v4112 = vsel %vm4111, %v4110, %v3649
        %vm4113 = vcmask 359424
        %v4114 = vsel %vm4113, %v4112, %v3653
        %vm4115 = vcmask 375808
        %v4116 = vsel %vm4115, %v4114, %v3657
        %vm4117 = vcmask 392192
        %v4118 = vsel %vm4117, %v4116, %v3661
        %vm4119 = vcmask 408576
        %v4120 = vsel %vm4119, %v4118, %v3665
        %vm4121 = vcmask 424960
        %v4122 = vsel %vm4121, %v4120, %v3669
        %vm4123 = vcmask 441344
        %v4124 = vsel %vm4123, %v4122, %v3673
        %vm4125 = vcmask 457728
        %v4126 = vsel %vm4125, %v4124, %v3677
        %vm4127 = vcmask 474112
        %v4128 = vsel %vm4127, %v4126, %v3681
        %vm4129 = vcmask 490496
        %v4130 = vsel %vm4129, %v4128, %v3685
        %vm4131 = vcmask 506880
        %v4132 = vsel %vm4131, %v4130, %v3689
        %vm4133 = vcmask 523264
        %v4134 = vsel %vm4133, %v4132, %v3693
        %vm4135 = vcmask 539648
        %v4136 = vsel %vm4135, %v4134, %v3697
        %vm4137 = vcmask 556032
        %v4138 = vsel %vm4137, %v4136, %v3701
        %vm4139 = vcmask 572416
        %v4140 = vsel %vm4139, %v4138, %v3705
        %vm4141 = vcmask 588800
        %v4142 = vsel %vm4141, %v4140, %v3709
        %vm4143 = vcmask 605184
        %v4144 = vsel %vm4143, %v4142, %v3713
        %vm4145 = vcmask 621568
        %v4146 = vsel %vm4145, %v4144, %v3717
        %vm4147 = vcmask 637952
        %v4148 = vsel %vm4147, %v4146, %v3721
        %vm4149 = vcmask 654336
        %v4150 = vsel %vm4149, %v4148, %v3725
        %vm4151 = vcmask 670720
        %v4152 = vsel %vm4151, %v4150, %v3729
        %vm4153 = vcmask 687104
        %v4154 = vsel %vm4153, %v4152, %v3733
        %vm4155 = vcmask 703488
        %v4156 = vsel %vm4155, %v4154, %v3737
        %vm4157 = vcmask 719872
        %v4158 = vsel %vm4157, %v4156, %v3741
        %vm4159 = vcmask 736256
        %v4160 = vsel %vm4159, %v4158, %v3745
        %vm4161 = vcmask 752640
        %v4162 = vsel %vm4161, %v4160, %v3749
        %vm4163 = vcmask 769024
        %v4164 = vsel %vm4163, %v4162, %v3753
        %vm4165 = vcmask 785408
        %v4166 = vsel %vm4165, %v4164, %v3757
        %vm4167 = vcmask 801792
        %v4168 = vsel %vm4167, %v4166, %v3761
        %vm4169 = vcmask 818176
        %v4170 = vsel %vm4169, %v4168, %v3765
        %vm4171 = vcmask 834560
        %v4172 = vsel %vm4171, %v4170, %v3769
        %vm4173 = vcmask 850944
        %v4174 = vsel %vm4173, %v4172, %v3773
        %vm4175 = vcmask 867328
        %v4176 = vsel %vm4175, %v4174, %v3777
        %vm4177 = vcmask 883712
        %v4178 = vsel %vm4177, %v4176, %v3781
        %vm4179 = vcmask 900096
        %v4180 = vsel %vm4179, %v4178, %v3785
        %vm4181 = vcmask 916480
        %v4182 = vsel %vm4181, %v4180, %v3789
        %vm4183 = vcmask 932864
        %v4184 = vsel %vm4183, %v4182, %v3793
        %vm4185 = vcmask 949248
        %v4186 = vsel %vm4185, %v4184, %v3797
        %vm4187 = vcmask 965632
        %v4188 = vsel %vm4187, %v4186, %v3801
        %vm4189 = vcmask 982016
        %v4190 = vsel %vm4189, %v4188, %v3805
        %vm4191 = vcmask 998400
        %v4192 = vsel %vm4191, %v4190, %v3809
        %vm4193 = vcmask 1014784
        %v4194 = vsel %vm4193, %v4192, %v3813
        %vm4195 = vcmask 1031168
        %v4196 = vsel %vm4195, %v4194, %v3817
        %v4197 = vsel %vm4071, %v2607, %v3821
        %v4198 = vsel %vm4073, %v4197, %v3825
        %v4199 = vsel %vm4075, %v4198, %v3829
        %v4200 = vsel %vm4077, %v4199, %v3833
        %v4201 = vsel %vm4079, %v4200, %v3837
        %v4202 = vsel %vm4081, %v4201, %v3841
        %v4203 = vsel %vm4083, %v4202, %v3845
        %v4204 = vsel %vm4085, %v4203, %v3849
        %v4205 = vsel %vm4087, %v4204, %v3853
        %v4206 = vsel %vm4089, %v4205, %v3857
        %v4207 = vsel %vm4091, %v4206, %v3861
        %v4208 = vsel %vm4093, %v4207, %v3865
        %v4209 = vsel %vm4095, %v4208, %v3869
        %v4210 = vsel %vm4097, %v4209, %v3873
        %v4211 = vsel %vm4099, %v4210, %v3877
        %v4212 = vsel %vm4101, %v4211, %v3881
        %v4213 = vsel %vm4103, %v4212, %v3885
        %v4214 = vsel %vm4105, %v4213, %v3889
        %v4215 = vsel %vm4107, %v4214, %v3893
        %v4216 = vsel %vm4109, %v4215, %v3897
        %v4217 = vsel %vm4111, %v4216, %v3901
        %v4218 = vsel %vm4113, %v4217, %v3905
        %v4219 = vsel %vm4115, %v4218, %v3909
        %v4220 = vsel %vm4117, %v4219, %v3913
        %v4221 = vsel %vm4119, %v4220, %v3917
        %v4222 = vsel %vm4121, %v4221, %v3921
        %v4223 = vsel %vm4123, %v4222, %v3925
        %v4224 = vsel %vm4125, %v4223, %v3929
        %v4225 = vsel %vm4127, %v4224, %v3933
        %v4226 = vsel %vm4129, %v4225, %v3937
        %v4227 = vsel %vm4131, %v4226, %v3941
        %v4228 = vsel %vm4133, %v4227, %v3945
        %v4229 = vsel %vm4135, %v4228, %v3949
        %v4230 = vsel %vm4137, %v4229, %v3953
        %v4231 = vsel %vm4139, %v4230, %v3957
        %v4232 = vsel %vm4141, %v4231, %v3961
        %v4233 = vsel %vm4143, %v4232, %v3965
        %v4234 = vsel %vm4145, %v4233, %v3969
        %v4235 = vsel %vm4147, %v4234, %v3973
        %v4236 = vsel %vm4149, %v4235, %v3977
        %v4237 = vsel %vm4151, %v4236, %v3981
        %v4238 = vsel %vm4153, %v4237, %v3985
        %v4239 = vsel %vm4155, %v4238, %v3989
        %v4240 = vsel %vm4157, %v4239, %v3993
        %v4241 = vsel %vm4159, %v4240, %v3997
        %v4242 = vsel %vm4161, %v4241, %v4001
        %v4243 = vsel %vm4163, %v4242, %v4005
        %v4244 = vsel %vm4165, %v4243, %v4009
        %v4245 = vsel %vm4167, %v4244, %v4013
        %v4246 = vsel %vm4169, %v4245, %v4017
        %v4247 = vsel %vm4171, %v4246, %v4021
        %v4248 = vsel %vm4173, %v4247, %v4025
        %v4249 = vsel %vm4175, %v4248, %v4029
        %v4250 = vsel %vm4177, %v4249, %v4033
        %v4251 = vsel %vm4179, %v4250, %v4037
        %v4252 = vsel %vm4181, %v4251, %v4041
        %v4253 = vsel %vm4183, %v4252, %v4045
        %v4254 = vsel %vm4185, %v4253, %v4049
        %v4255 = vsel %vm4187, %v4254, %v4053
        %v4256 = vsel %vm4189, %v4255, %v4057
        %v4257 = vsel %vm4191, %v4256, %v4061
        %v4258 = vsel %vm4193, %v4257, %v4065
        %v4259 = vsel %vm4195, %v4258, %v4069
        %4260 = vst [vmem:[%s170] sm:$0xff] %v4196
        %4261 = vst [vmem:[%s170 + $0x8] sm:$0xff] %v4259
        %s4262 = sand.u32 %s75, 1
        %s4263 = scalar_lea.sflag [#allocation4], %s4262
        %s4264 = sand.u32 %s75, 1
        %s4265 = smul.addr %s4264, 16
        %s4266 = scalar_lea.vmem [#allocation7], %s4265
        // Predicated region
        $region37: #{tpu_custom_call.1} parent=27 // pred_check
          %p4267 = pneg %p85
        $region38: #{tpu_custom_call.1} parent=27 // pred_check_branch
          %4269 = sbr.rel (%p4267) target = $region40
        $region39: #{tpu_custom_call.1} parent=27 // pred_region
          %s4271 = ssub.s32 256, 256
          %4272 = vsyncadd %s4263, %s4271
          %s4273 = smul.addr %s20, 2
          %s4274 = smul.addr %s4273, 128
          %s4275 = scalar_lea.hbm %s2, %s4274
          %s4277 = sshll.u32 %s4266, 4
          %s4278 = int_to_ptr.vmem [resolvable:$true] %s4277
          %4280 = dma.vmem_to_hbm [thread:$0]  %s4278, 256, %s4275, %s4263
        $region40: #{tpu_custom_call.1} parent=27 // pred_fallthru
          _
      $region28: #{tpu_custom_call.1} parent=5 // pred_fallthru
        _
      %p4281 = scmp.le.s32.totalorder 2, %s15
      // Predicated region
      $region41: #{tpu_custom_call.1} parent=5 // pred_check
        %p4282 = pneg %p4281
      $region42: #{tpu_custom_call.1} parent=5 // pred_check_branch
        %4284 = sbr.rel (%p4282) target = $region44
      $region43: #{tpu_custom_call.1} parent=5 // pred_region
        %s4285 = ssub.s32 %s15, 2
        // Predicated region
        $region45: #{tpu_custom_call.1} parent=43 // pred_check
          %p4286 = pneg %p91
        $region46: #{tpu_custom_call.1} parent=43 // pred_check_branch
          %4288 = sbr.rel (%p4286) target = $region48
        $region47: #{tpu_custom_call.1} parent=43 // pred_region
          %s4289 = sand.u32 %s76, 1
          %s4290 = scalar_lea.sflag [#allocation4], %s4289
          %s4291 = sand.u32 %s76, 1
          %s4292 = smul.addr %s4291, 16
          %s4293 = scalar_lea.vmem [#allocation7], %s4292
          %4294 = dma.done %s4290, 256
        $region48: #{tpu_custom_call.1} parent=43 // pred_fallthru
          _
      $region44: #{tpu_custom_call.1} parent=5 // pred_fallthru
        _
    $region6: #{tpu_custom_call.1} parent=1 // loop_footer
      %s19 = sadd.s32 1, %s15
    $region7: #{tpu_custom_call.1} parent=1 // loop_footer_branch
      %14 = sbr.rel target = $region3
    $region8: #{tpu_custom_call.1} parent=1 // loop_exit
      _
    %4295 = vsyncpa [#allocation3], 1
    %s4296 = scalar_lea.sflag [#allocation3], 1
    %4297 = vsyncpa %s4296, 1
    %4298 = vsyncpa [#allocation4], 1
    %s4299 = scalar_lea.sflag [#allocation4], 1
    %4300 = vsyncpa %s4299, 1
    %4301 = vsyncpa [#allocation5], 1
    %s4302 = scalar_lea.sflag [#allocation5], 1
    %4303 = vsyncpa %s4302, 1

</llo_original>
